<compile_context>
chip_gen: v7x
topology: tpu7x:2x2x1
jax: 0.10.0
libtpu: 0.0.40
codegen_flags: <defaults>
</compile_context>

<pallas_src>
import jax
import jax.numpy as jnp
import numpy as np
from jax import lax
from jax.experimental import pallas as pl
from jax.experimental.pallas import tpu as pltpu

EPS = 1e-5  # GroupNorm eps (PyTorch default)


def _tap_masks(H, W):
    """(9, H*W) f32 validity masks; tap dy*3+dx reads input pixel (y+dy-1, x+dx-1)."""
    ys, xs = np.meshgrid(np.arange(H), np.arange(W), indexing="ij")
    ys = ys.reshape(-1)
    xs = xs.reshape(-1)
    m = np.zeros((9, H * W), np.float32)
    for dy in range(3):
        for dx in range(3):
            valid = ((ys + dy - 1 >= 0) & (ys + dy - 1 < H) &
                     (xs + dx - 1 >= 0) & (xs + dx - 1 < W))
            m[dy * 3 + dx] = valid.astype(np.float32)
    return jnp.asarray(m)


def make_kernel(H, W, C, HC, Bt):
    HW = H * W
    N = Bt * HW
    # Flattened-spatial shift of tap (dy, dx).  Rolls are circular over the whole
    # Bt*HW lane extent; the boundary masks zero exactly the positions whose roll
    # wraps a row / the image / crosses into a neighboring image of the lane batch.
    shifts = [(dy - 1) * W + (dx - 1) for dy in range(3) for dx in range(3)]
    CENTER = 4                                   # (dy, dx) = (1, 1): no shift, always valid
    roll_sh = [(-s) % N for s in shifts]
    inv_cnt = 1.0 / (HC * HW)

    def kernel(feat_ref, fproj_ref, masks_ref, w1_ref, w234_ref, w5_ref, bgt_ref, o_ref):
        masks = masks_ref[...]                                       # (9, N)
        # Hoisted sublane broadcasts of the 8 non-center masks; reused by all 4 conv
        # layers (masks are applied AFTER the channel contraction -> always HC rows).
        mask_hc = {t: jnp.broadcast_to(masks[t:t + 1, :], (HC, N))
                   for t in range(9) if t != CENTER}

        bgt = bgt_ref[...]                                           # (HC, 13)
        b_cols = [bgt[:, l:l + 1] for l in range(4)]                 # conv biases
        g_cols = [bgt[:, 4 + l:5 + l] for l in range(4)]             # GN gammas
        t_cols = [bgt[:, 8 + l:9 + l] for l in range(4)]             # GN betas
        b5 = bgt[0:1, 12:13]                                         # cls bias (1, 1)

        feat = feat_ref[0]                                           # (C, N)
        fp = fproj_ref[0]                                            # (C, Bt)

        # --- attention (apply_filter, 1x1): per-pixel <feat, projected filter> -------
        att_parts = []
        for i in range(Bt):                                          # static, tiny loop
            fi = feat[:, i * HW:(i + 1) * HW]                        # (C, HW), lane-aligned
            att_parts.append(jnp.sum(fi * fp[:, i:i + 1], axis=0, keepdims=True))
        att = att_parts[0] if Bt == 1 else jnp.concatenate(att_parts, axis=1)   # (1, N)
        x = feat * att                                               # feats_att (C, N)

        # --- 3x3 conv = ONE matmul + rolled/masked output-group combine --------------
        def conv3x3(xin, w_big, b_col):
            # xin: (cin, N); w_big: (9*HC, cin) — rows [t*HC:(t+1)*HC] hold tap t.
            z = jnp.dot(w_big, xin, preferred_element_type=jnp.float32)   # (9*HC, N)
            acc = z[CENTER * HC:(CENTER + 1) * HC, :]
            for t in range(9):
                if t == CENTER:
                    continue
                zt = z[t * HC:(t + 1) * HC, :]
                acc = acc + pltpu.roll(zt, shift=roll_sh[t], axis=1) * mask_hc[t]
            return acc + b_col

        # --- GroupNorm(1) + ReLU: one-pass stats, per-image segmented reductions -----
        def gn_relu(xin, g_col, t_col):
            s1 = jnp.sum(xin, axis=0, keepdims=True)                 # (1, N)
            s2 = jnp.sum(xin * xin, axis=0, keepdims=True)           # (1, N)
            mean_parts, inv_parts = [], []
            for i in range(Bt):
                lo, hi = i * HW, (i + 1) * HW
                m = jnp.sum(s1[:, lo:hi]) * inv_cnt
                ex2 = jnp.sum(s2[:, lo:hi]) * inv_cnt
                inv = lax.rsqrt(ex2 - m * m + EPS)
                mean_parts.append(jnp.full((1, HW), m, jnp.float32))
                inv_parts.append(jnp.full((1, HW), inv, jnp.float32))
            mean_row = mean_parts[0] if Bt == 1 else jnp.concatenate(mean_parts, axis=1)
            inv_row = inv_parts[0] if Bt == 1 else jnp.concatenate(inv_parts, axis=1)
            y = (xin - mean_row) * inv_row
            return jnp.maximum(y * g_col + t_col, 0.0)

        # tower_cls: 4 x [conv3x3 -> GroupNorm(1) -> ReLU]
        x = gn_relu(conv3x3(x, w1_ref[...], b_cols[0]), g_cols[0], t_cols[0])
        for l in range(3):
            x = gn_relu(conv3x3(x, w234_ref[l], b_cols[l + 1]), g_cols[l + 1], t_cols[l + 1])

        # cls layer (HC -> 1), same fused form (rows of z are single taps), + exp.
        z = jnp.dot(w5_ref[...], x, preferred_element_type=jnp.float32)    # (9, N)
        acc = z[CENTER:CENTER + 1, :]
        for t in range(9):
            if t == CENTER:
                continue
            acc = acc + pltpu.roll(z[t:t + 1, :], shift=roll_sh[t], axis=1) * masks[t:t + 1, :]
        o_ref[0] = jnp.exp(acc + b5)                                        # (1, N) lane-dense

    return kernel


def _choose_block_b(B, max_bt=16):
    """Prefer the largest Bt (<= max_bt) dividing B that keeps an even >=2-step grid
    (so both v7x TensorCores get work); otherwise just the largest divisor.
    On single-TC v5e/v6e, pass block_b explicitly (largest divisor) to minimize steps."""
    divs = [d for d in range(1, min(B, max_bt) + 1) if B % d == 0]
    even_multi = [d for d in divs if (B // d) >= 2 and (B // d) % 2 == 0]
    return max(even_multi) if even_multi else max(divs)


def conv_filter_classifier_forward(feat, filt, params, block_b=None):
    """feat: (nf, ns, C, H, W) NCHW like PyTorch; filt: (ns, C, 1, 1)."""
    nf, ns, C, H, W = feat.shape
    HC = C // 4
    B = nf * ns
    HW = H * W
    Bt = _choose_block_b(B) if block_b is None else block_b
    assert B % Bt == 0
    N = Bt * HW
    nb = B // Bt
    f32 = jnp.float32

    # Lane-batched layout: block b holds its Bt images side by side along lanes.
    feat_b = (feat.astype(f32).reshape(nb, Bt, C, HW)
              .transpose(0, 2, 1, 3).reshape(nb, C, N))

    # Hoisted filter projection (nn.Linear), once per sequence; image b uses seq b % ns.
    fproj = filt.reshape(ns, C).astype(f32) @ params["lw"] + params["lb"]       # (ns, C)
    fproj_b = jnp.tile(fproj, (nf, 1)).reshape(nb, Bt, C).transpose(0, 2, 1)    # (nb, C, Bt)

    masks_b = jnp.tile(_tap_masks(H, W), (1, Bt))                               # (9, N)

    # Fused conv weights: rows [t*HC:(t+1)*HC] of w_big hold tap t's (HC, cin) kernel.
    w1_big = params["w1"].reshape(9 * HC, C).astype(f32)                        # (72, C)
    w234 = jnp.stack([params[f"w{i}"].reshape(9 * HC, HC)
                      for i in (2, 3, 4)]).astype(f32)                          # (3, 72, HC)
    w5_big = params["w5"].reshape(9, HC).astype(f32)                            # (9, HC)
    # bias / gamma / beta pack: cols 0-3 = b1..b4, 4-7 = g1..g4, 8-11 = t1..t4, 12 = b5.
    bgt = jnp.concatenate(
        [params[f"b{i}"] for i in (1, 2, 3, 4)] +
        [params[f"g{i}"] for i in (1, 2, 3, 4)] +
        [params[f"t{i}"] for i in (1, 2, 3, 4)] +
        [jnp.broadcast_to(params["b5"], (HC, 1))], axis=1).astype(f32)          # (HC, 13)

    in_specs = [
        pl.BlockSpec((1, C, N), lambda b: (b, 0, 0)),        # feat block (Bt images, lane-batched)
        pl.BlockSpec((1, C, Bt), lambda b: (b, 0, 0)),       # projected filters (channels in sublanes)
        pl.BlockSpec((9, N), lambda b: (0, 0)),              # boundary masks (constant block)
        pl.BlockSpec((9 * HC, C), lambda b: (0, 0)),         # w1 fused
        pl.BlockSpec((3, 9 * HC, HC), lambda b: (0, 0, 0)),  # w2..w4 fused, stacked
        pl.BlockSpec((9, HC), lambda b: (0, 0)),             # cls weights
        pl.BlockSpec((HC, 13), lambda b: (0, 0)),            # bias/gamma/beta pack
    ]

    out = pl.pallas_call(
        make_kernel(H, W, C, HC, Bt),
        out_shape=jax.ShapeDtypeStruct((nb, 1, N), f32),
        grid_spec=pltpu.PrefetchScalarGridSpec(
            num_scalar_prefetch=0,
            grid=(nb,),
            in_specs=in_specs,
            out_specs=pl.BlockSpec((1, 1, N), lambda b: (b, 0, 0)),
        ),
        compiler_params=pltpu.CompilerParams(
            dimension_semantics=("parallel",),
            vmem_limit_bytes=32 * 1024 * 1024,
        ),
    )(feat_b, fproj_b, masks_b, w1_big, w234, w5_big, bgt)

    # (nb, 1, Bt*HW) is image-major contiguous -> free reshape back to (nf, ns, H, W).
    return out.reshape(nf, ns, H, W)


def init_params(key, C):
    """Deterministic synthetic parameters (shapes per the module's __init__)."""
    HC = C // 4
    ks = jax.random.split(key, 16)

    def conv_w(k, cin, cout, scale=0.1):
        # (9, cout, cin): tap dy*3+dx
        return (scale * jax.random.normal(k, (9, cout, cin))).astype(jnp.float32)

    p = {}
    # nn.Linear(C, C): stored pre-transposed so projection is x @ lw + lb
    p["lw"] = (0.1 * jax.random.normal(ks[0], (C, C))).astype(jnp.float32)
    p["lb"] = (0.1 * jax.random.normal(ks[1], (1, C))).astype(jnp.float32)
    cins = [C, HC, HC, HC]
    for i in range(4):
        p[f"w{i + 1}"] = conv_w(ks[2 + 3 * i], cins[i], HC)
        p[f"b{i + 1}"] = (0.1 * jax.random.normal(ks[3 + 3 * i], (HC, 1))).astype(jnp.float32)
        p[f"g{i + 1}"] = jnp.ones((HC, 1), jnp.float32)    # GroupNorm weight (default init)
        p[f"t{i + 1}"] = jnp.zeros((HC, 1), jnp.float32)   # GroupNorm bias
    p["w5"] = (0.1 * jax.random.normal(ks[14], (9, HC, 1))).astype(jnp.float32)
    p["b5"] = jnp.zeros((1, 1), jnp.float32)
    return p


def reference_forward(feat, filt, p):
    """Pure-JAX reference mirroring the PyTorch forward (for correctness check)."""
    nf, ns, C, H, W = feat.shape
    HC = C // 4
    fproj = filt.reshape(ns, C) @ p["lw"] + p["lb"]                      # (ns, C)
    att = jnp.einsum("nschw,sc->nshw", feat, fproj)                      # apply_filter (1x1)
    x = (att[:, :, None] * feat).reshape(nf * ns, C, H, W)

    def conv(x, w9, b, cin, cout):
        w = jnp.transpose(w9.reshape(3, 3, cout, cin), (2, 3, 0, 1))     # OIHW
        y = lax.conv_general_dilated(x, w, (1, 1), ((1, 1), (1, 1)),
                                     dimension_numbers=("NCHW", "OIHW", "NCHW"))
        return y + b.reshape(1, cout, 1, 1)

    def gn_relu(x, g, t):
        m = x.mean(axis=(1, 2, 3), keepdims=True)
        v = jnp.square(x - m).mean(axis=(1, 2, 3), keepdims=True)
        xn = (x - m) / jnp.sqrt(v + EPS)
        return jnp.maximum(xn * g.reshape(1, -1, 1, 1) + t.reshape(1, -1, 1, 1), 0.0)

    cins = [C, HC, HC, HC]
    for i in range(4):
        x = gn_relu(conv(x, p[f"w{i + 1}"], p[f"b{i + 1}"], cins[i], HC),
                    p[f"g{i + 1}"], p[f"t{i + 1}"])
    w5 = jnp.transpose(p["w5"].reshape(3, 3, HC, 1), (3, 2, 0, 1))
    x = lax.conv_general_dilated(x, w5, (1, 1), ((1, 1), (1, 1)),
                                 dimension_numbers=("NCHW", "OIHW", "NCHW"))
    x = x + p["b5"].reshape(1, 1, 1, 1)
    return jnp.exp(x).reshape(nf, ns, H, W)


if __name__ == "__main__":
    key = jax.random.PRNGKey(0)
    kf, kw, kp = jax.random.split(key, 3)

    # Small shapes consistent with the module: num_channels=32 -> hidden=8
    nf, ns, C, H, W = 2, 2, 32, 16, 16
    feat = jax.random.normal(kf, (nf, ns, C, H, W), jnp.float32)
    filt = jax.random.normal(kw, (ns, C, 1, 1), jnp.float32)
    params = init_params(kp, C)

    out = jax.block_until_ready(conv_filter_classifier_forward(feat, filt, params))
    assert out.shape == (nf, ns, H, W)
    ref = reference_forward(feat, filt, params)
    np.testing.assert_allclose(np.asarray(out), np.asarray(ref), rtol=2e-3, atol=2e-3)

    # Extra check (per review): nf*ns > 2 so >2 images share one lane-batched block
    # (exercises the cross-image roll + boundary-mask correctness).
    nf2, ns2 = 3, 2
    feat2 = jax.random.normal(jax.random.PRNGKey(1), (nf2, ns2, C, H, W), jnp.float32)
    filt2 = jax.random.normal(jax.random.PRNGKey(2), (ns2, C, 1, 1), jnp.float32)
    out2 = jax.block_until_ready(conv_filter_classifier_forward(feat2, filt2, params))
    ref2 = reference_forward(feat2, filt2, params)
    np.testing.assert_allclose(np.asarray(out2), np.asarray(ref2), rtol=2e-3, atol=2e-3)

    print("KERNEL_OK")
</pallas_src>

<mosaic_0001>
module attributes {stable_mosaic.version = 11 : i64} {
  func.func @kernel(%arg0: i32, %arg1: memref<1x32x512xf32, #tpu.memory_space<vmem>>, %arg2: memref<1x32x2xf32, #tpu.memory_space<vmem>>, %arg3: memref<9x512xf32, #tpu.memory_space<vmem>>, %arg4: memref<72x32xf32, #tpu.memory_space<vmem>>, %arg5: memref<3x72x8xf32, #tpu.memory_space<vmem>>, %arg6: memref<9x8xf32, #tpu.memory_space<vmem>>, %arg7: memref<8x13xf32, #tpu.memory_space<vmem>>, %arg8: memref<1x1x512xf32, #tpu.memory_space<vmem>>) attributes {dimension_semantics = [#tpu.dimension_semantics<parallel>], iteration_bounds = array<i64: 2>, scalar_prefetch = 0 : i64, scratch_operands = 0 : i64, tpu.core_type = #tpu.core_type<tc>, window_params = [{transform_indices = @transform_0, window_bounds = array<i64: 1, 32, 512>}, {transform_indices = @transform_1, window_bounds = array<i64: 1, 32, 2>}, {pipeline_mode = #tpu.pipeline_mode<synchronous>, transform_indices = @transform_2, window_bounds = array<i64: 9, 512>}, {pipeline_mode = #tpu.pipeline_mode<synchronous>, transform_indices = @transform_3, window_bounds = array<i64: 72, 32>}, {pipeline_mode = #tpu.pipeline_mode<synchronous>, transform_indices = @transform_4, window_bounds = array<i64: 3, 72, 8>}, {pipeline_mode = #tpu.pipeline_mode<synchronous>, transform_indices = @transform_5, window_bounds = array<i64: 9, 8>}, {pipeline_mode = #tpu.pipeline_mode<synchronous>, transform_indices = @transform_6, window_bounds = array<i64: 8, 13>}, {transform_indices = @transform_7, window_bounds = array<i64: 1, 1, 512>}]} {
    %c0 = arith.constant 0 : index
    %c0_0 = arith.constant 0 : index
    %0 = vector.load %arg3[%c0, %c0_0] : memref<9x512xf32, #tpu.memory_space<vmem>>, vector<9x512xf32>
    %1 = vector.extract_strided_slice %0 {offsets = [0, 0], sizes = [1, 512], strides = [1, 1]} : vector<9x512xf32> to vector<1x512xf32>
    %2 = vector.shape_cast %1 : vector<1x512xf32> to vector<1x512xf32>
    %3 = vector.broadcast %2 : vector<1x512xf32> to vector<8x512xf32>
    %4 = vector.extract_strided_slice %0 {offsets = [1, 0], sizes = [1, 512], strides = [1, 1]} : vector<9x512xf32> to vector<1x512xf32>
    %5 = vector.shape_cast %4 : vector<1x512xf32> to vector<1x512xf32>
    %6 = vector.broadcast %5 : vector<1x512xf32> to vector<8x512xf32>
    %7 = vector.extract_strided_slice %0 {offsets = [2, 0], sizes = [1, 512], strides = [1, 1]} : vector<9x512xf32> to vector<1x512xf32>
    %8 = vector.shape_cast %7 : vector<1x512xf32> to vector<1x512xf32>
    %9 = vector.broadcast %8 : vector<1x512xf32> to vector<8x512xf32>
    %10 = vector.extract_strided_slice %0 {offsets = [3, 0], sizes = [1, 512], strides = [1, 1]} : vector<9x512xf32> to vector<1x512xf32>
    %11 = vector.shape_cast %10 : vector<1x512xf32> to vector<1x512xf32>
    %12 = vector.broadcast %11 : vector<1x512xf32> to vector<8x512xf32>
    %13 = vector.extract_strided_slice %0 {offsets = [5, 0], sizes = [1, 512], strides = [1, 1]} : vector<9x512xf32> to vector<1x512xf32>
    %14 = vector.shape_cast %13 : vector<1x512xf32> to vector<1x512xf32>
    %15 = vector.broadcast %14 : vector<1x512xf32> to vector<8x512xf32>
    %16 = vector.extract_strided_slice %0 {offsets = [6, 0], sizes = [1, 512], strides = [1, 1]} : vector<9x512xf32> to vector<1x512xf32>
    %17 = vector.shape_cast %16 : vector<1x512xf32> to vector<1x512xf32>
    %18 = vector.broadcast %17 : vector<1x512xf32> to vector<8x512xf32>
    %19 = vector.extract_strided_slice %0 {offsets = [7, 0], sizes = [1, 512], strides = [1, 1]} : vector<9x512xf32> to vector<1x512xf32>
    %20 = vector.shape_cast %19 : vector<1x512xf32> to vector<1x512xf32>
    %21 = vector.broadcast %20 : vector<1x512xf32> to vector<8x512xf32>
    %22 = vector.extract_strided_slice %0 {offsets = [8, 0], sizes = [1, 512], strides = [1, 1]} : vector<9x512xf32> to vector<1x512xf32>
    %23 = vector.shape_cast %22 : vector<1x512xf32> to vector<1x512xf32>
    %24 = vector.broadcast %23 : vector<1x512xf32> to vector<8x512xf32>
    %c0_1 = arith.constant 0 : index
    %c0_2 = arith.constant 0 : index
    %25 = vector.load %arg7[%c0_1, %c0_2] : memref<8x13xf32, #tpu.memory_space<vmem>>, vector<8x13xf32>
    %26 = vector.extract_strided_slice %25 {offsets = [0, 0], sizes = [8, 1], strides = [1, 1]} : vector<8x13xf32> to vector<8x1xf32>
    %27 = vector.extract_strided_slice %25 {offsets = [0, 1], sizes = [8, 1], strides = [1, 1]} : vector<8x13xf32> to vector<8x1xf32>
    %28 = vector.extract_strided_slice %25 {offsets = [0, 2], sizes = [8, 1], strides = [1, 1]} : vector<8x13xf32> to vector<8x1xf32>
    %29 = vector.extract_strided_slice %25 {offsets = [0, 3], sizes = [8, 1], strides = [1, 1]} : vector<8x13xf32> to vector<8x1xf32>
    %30 = vector.extract_strided_slice %25 {offsets = [0, 4], sizes = [8, 1], strides = [1, 1]} : vector<8x13xf32> to vector<8x1xf32>
    %31 = vector.extract_strided_slice %25 {offsets = [0, 5], sizes = [8, 1], strides = [1, 1]} : vector<8x13xf32> to vector<8x1xf32>
    %32 = vector.extract_strided_slice %25 {offsets = [0, 6], sizes = [8, 1], strides = [1, 1]} : vector<8x13xf32> to vector<8x1xf32>
    %33 = vector.extract_strided_slice %25 {offsets = [0, 7], sizes = [8, 1], strides = [1, 1]} : vector<8x13xf32> to vector<8x1xf32>
    %34 = vector.extract_strided_slice %25 {offsets = [0, 8], sizes = [8, 1], strides = [1, 1]} : vector<8x13xf32> to vector<8x1xf32>
    %35 = vector.extract_strided_slice %25 {offsets = [0, 9], sizes = [8, 1], strides = [1, 1]} : vector<8x13xf32> to vector<8x1xf32>
    %36 = vector.extract_strided_slice %25 {offsets = [0, 10], sizes = [8, 1], strides = [1, 1]} : vector<8x13xf32> to vector<8x1xf32>
    %37 = vector.extract_strided_slice %25 {offsets = [0, 11], sizes = [8, 1], strides = [1, 1]} : vector<8x13xf32> to vector<8x1xf32>
    %38 = vector.extract_strided_slice %25 {offsets = [0, 12], sizes = [1, 1], strides = [1, 1]} : vector<8x13xf32> to vector<1x1xf32>
    %c0_3 = arith.constant 0 : index
    %c0_4 = arith.constant 0 : index
    %c0_5 = arith.constant 0 : index
    %39 = vector.load %arg1[%c0_3, %c0_4, %c0_5] : memref<1x32x512xf32, #tpu.memory_space<vmem>>, vector<1x32x512xf32>
    %40 = vector.shape_cast %39 : vector<1x32x512xf32> to vector<32x512xf32>
    %c0_6 = arith.constant 0 : index
    %c0_7 = arith.constant 0 : index
    %c0_8 = arith.constant 0 : index
    %41 = vector.load %arg2[%c0_6, %c0_7, %c0_8] : memref<1x32x2xf32, #tpu.memory_space<vmem>>, vector<1x32x2xf32>
    %42 = vector.shape_cast %41 : vector<1x32x2xf32> to vector<32x2xf32>
    %43 = vector.extract_strided_slice %40 {offsets = [0, 0], sizes = [32, 256], strides = [1, 1]} : vector<32x512xf32> to vector<32x256xf32>
    %44 = vector.extract_strided_slice %42 {offsets = [0, 0], sizes = [32, 1], strides = [1, 1]} : vector<32x2xf32> to vector<32x1xf32>
    %45 = vector.broadcast %44 : vector<32x1xf32> to vector<32x256xf32>
    %46 = arith.mulf %43, %45 : vector<32x256xf32>
    %cst = arith.constant dense<0.000000e+00> : vector<256xf32>
    %47 = vector.multi_reduction <add>, %46, %cst [0] : vector<32x256xf32> to vector<256xf32>
    %48 = vector.shape_cast %47 : vector<256xf32> to vector<1x256xf32>
    %49 = vector.extract_strided_slice %40 {offsets = [0, 256], sizes = [32, 256], strides = [1, 1]} : vector<32x512xf32> to vector<32x256xf32>
    %50 = vector.extract_strided_slice %42 {offsets = [0, 1], sizes = [32, 1], strides = [1, 1]} : vector<32x2xf32> to vector<32x1xf32>
    %51 = vector.broadcast %50 : vector<32x1xf32> to vector<32x256xf32>
    %52 = arith.mulf %49, %51 : vector<32x256xf32>
    %cst_9 = arith.constant dense<0.000000e+00> : vector<256xf32>
    %53 = vector.multi_reduction <add>, %52, %cst_9 [0] : vector<32x256xf32> to vector<256xf32>
    %54 = vector.shape_cast %53 : vector<256xf32> to vector<1x256xf32>
    %55 = tpu.concatenate %48, %54 in 1 : vector<1x256xf32>, vector<1x256xf32> -> vector<1x512xf32>
    %56 = vector.broadcast %55 : vector<1x512xf32> to vector<32x512xf32>
    %57 = arith.mulf %40, %56 : vector<32x512xf32>
    %c0_10 = arith.constant 0 : index
    %c0_11 = arith.constant 0 : index
    %58 = vector.load %arg4[%c0_10, %c0_11] : memref<72x32xf32, #tpu.memory_space<vmem>>, vector<72x32xf32>
    %cst_12 = arith.constant dense<0.000000e+00> : vector<72x512xf32>
    %59 = tpu.matmul %58, %57, %cst_12 {dimension_numbers = #tpu.dot_dimension_numbers<[1], [0], [0], [1], [0, 0, 1, 1], [], []>} : vector<72x32xf32>, vector<32x512xf32>, vector<72x512xf32> -> vector<72x512xf32>
    %60 = vector.extract_strided_slice %59 {offsets = [32, 0], sizes = [8, 512], strides = [1, 1]} : vector<72x512xf32> to vector<8x512xf32>
    %61 = vector.extract_strided_slice %59 {offsets = [0, 0], sizes = [8, 512], strides = [1, 1]} : vector<72x512xf32> to vector<8x512xf32>
    %c17_i32 = arith.constant 17 : i32
    %62 = tpu.dynamic_rotate %61 by %c17_i32 dim 1 : vector<8x512xf32>, i32 -> vector<8x512xf32>
    %63 = arith.mulf %62, %3 : vector<8x512xf32>
    %64 = arith.addf %60, %63 : vector<8x512xf32>
    %65 = vector.extract_strided_slice %59 {offsets = [8, 0], sizes = [8, 512], strides = [1, 1]} : vector<72x512xf32> to vector<8x512xf32>
    %c16_i32 = arith.constant 16 : i32
    %66 = tpu.dynamic_rotate %65 by %c16_i32 dim 1 : vector<8x512xf32>, i32 -> vector<8x512xf32>
    %67 = arith.mulf %66, %6 : vector<8x512xf32>
    %68 = arith.addf %64, %67 : vector<8x512xf32>
    %69 = vector.extract_strided_slice %59 {offsets = [16, 0], sizes = [8, 512], strides = [1, 1]} : vector<72x512xf32> to vector<8x512xf32>
    %c15_i32 = arith.constant 15 : i32
    %70 = tpu.dynamic_rotate %69 by %c15_i32 dim 1 : vector<8x512xf32>, i32 -> vector<8x512xf32>
    %71 = arith.mulf %70, %9 : vector<8x512xf32>
    %72 = arith.addf %68, %71 : vector<8x512xf32>
    %73 = vector.extract_strided_slice %59 {offsets = [24, 0], sizes = [8, 512], strides = [1, 1]} : vector<72x512xf32> to vector<8x512xf32>
    %c1_i32 = arith.constant 1 : i32
    %74 = tpu.dynamic_rotate %73 by %c1_i32 dim 1 : vector<8x512xf32>, i32 -> vector<8x512xf32>
    %75 = arith.mulf %74, %12 : vector<8x512xf32>
    %76 = arith.addf %72, %75 : vector<8x512xf32>
    %77 = vector.extract_strided_slice %59 {offsets = [40, 0], sizes = [8, 512], strides = [1, 1]} : vector<72x512xf32> to vector<8x512xf32>
    %c511_i32 = arith.constant 511 : i32
    %78 = tpu.dynamic_rotate %77 by %c511_i32 dim 1 : vector<8x512xf32>, i32 -> vector<8x512xf32>
    %79 = arith.mulf %78, %15 : vector<8x512xf32>
    %80 = arith.addf %76, %79 : vector<8x512xf32>
    %81 = vector.extract_strided_slice %59 {offsets = [48, 0], sizes = [8, 512], strides = [1, 1]} : vector<72x512xf32> to vector<8x512xf32>
    %c497_i32 = arith.constant 497 : i32
    %82 = tpu.dynamic_rotate %81 by %c497_i32 dim 1 : vector<8x512xf32>, i32 -> vector<8x512xf32>
    %83 = arith.mulf %82, %18 : vector<8x512xf32>
    %84 = arith.addf %80, %83 : vector<8x512xf32>
    %85 = vector.extract_strided_slice %59 {offsets = [56, 0], sizes = [8, 512], strides = [1, 1]} : vector<72x512xf32> to vector<8x512xf32>
    %c496_i32 = arith.constant 496 : i32
    %86 = tpu.dynamic_rotate %85 by %c496_i32 dim 1 : vector<8x512xf32>, i32 -> vector<8x512xf32>
    %87 = arith.mulf %86, %21 : vector<8x512xf32>
    %88 = arith.addf %84, %87 : vector<8x512xf32>
    %89 = vector.extract_strided_slice %59 {offsets = [64, 0], sizes = [8, 512], strides = [1, 1]} : vector<72x512xf32> to vector<8x512xf32>
    %c495_i32 = arith.constant 495 : i32
    %90 = tpu.dynamic_rotate %89 by %c495_i32 dim 1 : vector<8x512xf32>, i32 -> vector<8x512xf32>
    %91 = arith.mulf %90, %24 : vector<8x512xf32>
    %92 = arith.addf %88, %91 : vector<8x512xf32>
    %93 = vector.broadcast %26 : vector<8x1xf32> to vector<8x512xf32>
    %94 = arith.addf %92, %93 : vector<8x512xf32>
    %cst_13 = arith.constant dense<0.000000e+00> : vector<512xf32>
    %95 = vector.multi_reduction <add>, %94, %cst_13 [0] : vector<8x512xf32> to vector<512xf32>
    %96 = vector.shape_cast %95 : vector<512xf32> to vector<1x512xf32>
    %97 = arith.mulf %94, %94 : vector<8x512xf32>
    %cst_14 = arith.constant dense<0.000000e+00> : vector<512xf32>
    %98 = vector.multi_reduction <add>, %97, %cst_14 [0] : vector<8x512xf32> to vector<512xf32>
    %99 = vector.shape_cast %98 : vector<512xf32> to vector<1x512xf32>
    %100 = vector.extract_strided_slice %96 {offsets = [0, 0], sizes = [1, 256], strides = [1, 1]} : vector<1x512xf32> to vector<1x256xf32>
    %101 = vector.shape_cast %100 : vector<1x256xf32> to vector<1x1x256xf32>
    %cst_15 = arith.constant dense<0.000000e+00> : vector<1xf32>
    %102 = vector.multi_reduction <add>, %101, %cst_15 [1, 2] : vector<1x1x256xf32> to vector<1xf32>
    %103 = vector.shape_cast %102 : vector<1xf32> to vector<1x1x1xf32>
    %104 = vector.extract %103[0, 0, 0] : f32 from vector<1x1x1xf32>
    %cst_16 = arith.constant 4.8828125E-4 : f32
    %105 = arith.mulf %104, %cst_16 : f32
    %106 = vector.extract_strided_slice %99 {offsets = [0, 0], sizes = [1, 256], strides = [1, 1]} : vector<1x512xf32> to vector<1x256xf32>
    %107 = vector.shape_cast %106 : vector<1x256xf32> to vector<1x1x256xf32>
    %cst_17 = arith.constant dense<0.000000e+00> : vector<1xf32>
    %108 = vector.multi_reduction <add>, %107, %cst_17 [1, 2] : vector<1x1x256xf32> to vector<1xf32>
    %109 = vector.shape_cast %108 : vector<1xf32> to vector<1x1x1xf32>
    %110 = vector.extract %109[0, 0, 0] : f32 from vector<1x1x1xf32>
    %cst_18 = arith.constant 4.8828125E-4 : f32
    %111 = arith.mulf %110, %cst_18 : f32
    %112 = arith.mulf %105, %105 : f32
    %113 = arith.subf %111, %112 : f32
    %cst_19 = arith.constant 9.99999974E-6 : f32
    %114 = arith.addf %113, %cst_19 : f32
    %115 = math.rsqrt %114 : f32
    %116 = vector.broadcast %105 : f32 to vector<1x256xf32>
    %117 = vector.broadcast %115 : f32 to vector<1x256xf32>
    %118 = vector.extract_strided_slice %96 {offsets = [0, 256], sizes = [1, 256], strides = [1, 1]} : vector<1x512xf32> to vector<1x256xf32>
    %119 = vector.shape_cast %118 : vector<1x256xf32> to vector<1x1x256xf32>
    %cst_20 = arith.constant dense<0.000000e+00> : vector<1xf32>
    %120 = vector.multi_reduction <add>, %119, %cst_20 [1, 2] : vector<1x1x256xf32> to vector<1xf32>
    %121 = vector.shape_cast %120 : vector<1xf32> to vector<1x1x1xf32>
    %122 = vector.extract %121[0, 0, 0] : f32 from vector<1x1x1xf32>
    %cst_21 = arith.constant 4.8828125E-4 : f32
    %123 = arith.mulf %122, %cst_21 : f32
    %124 = vector.extract_strided_slice %99 {offsets = [0, 256], sizes = [1, 256], strides = [1, 1]} : vector<1x512xf32> to vector<1x256xf32>
    %125 = vector.shape_cast %124 : vector<1x256xf32> to vector<1x1x256xf32>
    %cst_22 = arith.constant dense<0.000000e+00> : vector<1xf32>
    %126 = vector.multi_reduction <add>, %125, %cst_22 [1, 2] : vector<1x1x256xf32> to vector<1xf32>
    %127 = vector.shape_cast %126 : vector<1xf32> to vector<1x1x1xf32>
    %128 = vector.extract %127[0, 0, 0] : f32 from vector<1x1x1xf32>
    %cst_23 = arith.constant 4.8828125E-4 : f32
    %129 = arith.mulf %128, %cst_23 : f32
    %130 = arith.mulf %123, %123 : f32
    %131 = arith.subf %129, %130 : f32
    %cst_24 = arith.constant 9.99999974E-6 : f32
    %132 = arith.addf %131, %cst_24 : f32
    %133 = math.rsqrt %132 : f32
    %134 = vector.broadcast %123 : f32 to vector<1x256xf32>
    %135 = vector.broadcast %133 : f32 to vector<1x256xf32>
    %136 = tpu.concatenate %116, %134 in 1 : vector<1x256xf32>, vector<1x256xf32> -> vector<1x512xf32>
    %137 = tpu.concatenate %117, %135 in 1 : vector<1x256xf32>, vector<1x256xf32> -> vector<1x512xf32>
    %138 = vector.broadcast %136 : vector<1x512xf32> to vector<8x512xf32>
    %139 = arith.subf %94, %138 : vector<8x512xf32>
    %140 = vector.broadcast %137 : vector<1x512xf32> to vector<8x512xf32>
    %141 = arith.mulf %139, %140 : vector<8x512xf32>
    %142 = vector.broadcast %30 : vector<8x1xf32> to vector<8x512xf32>
    %143 = arith.mulf %141, %142 : vector<8x512xf32>
    %144 = vector.broadcast %34 : vector<8x1xf32> to vector<8x512xf32>
    %145 = arith.addf %143, %144 : vector<8x512xf32>
    %cst_25 = arith.constant 0.000000e+00 : f32
    %146 = vector.broadcast %cst_25 : f32 to vector<8x512xf32>
    %147 = arith.maximumf %145, %146 : vector<8x512xf32>
    %c0_26 = arith.constant 0 : index
    %c0_27 = arith.constant 0 : index
    %c0_28 = arith.constant 0 : index
    %148 = vector.load %arg5[%c0_26, %c0_27, %c0_28] : memref<3x72x8xf32, #tpu.memory_space<vmem>>, vector<1x72x8xf32>
    %149 = vector.shape_cast %148 : vector<1x72x8xf32> to vector<72x8xf32>
    %cst_29 = arith.constant dense<0.000000e+00> : vector<72x512xf32>
    %150 = tpu.matmul %149, %147, %cst_29 {dimension_numbers = #tpu.dot_dimension_numbers<[1], [0], [0], [1], [0, 0, 1, 1], [], []>} : vector<72x8xf32>, vector<8x512xf32>, vector<72x512xf32> -> vector<72x512xf32>
    %151 = vector.extract_strided_slice %150 {offsets = [32, 0], sizes = [8, 512], strides = [1, 1]} : vector<72x512xf32> to vector<8x512xf32>
    %152 = vector.extract_strided_slice %150 {offsets = [0, 0], sizes = [8, 512], strides = [1, 1]} : vector<72x512xf32> to vector<8x512xf32>
    %c17_i32_30 = arith.constant 17 : i32
    %153 = tpu.dynamic_rotate %152 by %c17_i32_30 dim 1 : vector<8x512xf32>, i32 -> vector<8x512xf32>
    %154 = arith.mulf %153, %3 : vector<8x512xf32>
    %155 = arith.addf %151, %154 : vector<8x512xf32>
    %156 = vector.extract_strided_slice %150 {offsets = [8, 0], sizes = [8, 512], strides = [1, 1]} : vector<72x512xf32> to vector<8x512xf32>
    %c16_i32_31 = arith.constant 16 : i32
    %157 = tpu.dynamic_rotate %156 by %c16_i32_31 dim 1 : vector<8x512xf32>, i32 -> vector<8x512xf32>
    %158 = arith.mulf %157, %6 : vector<8x512xf32>
    %159 = arith.addf %155, %158 : vector<8x512xf32>
    %160 = vector.extract_strided_slice %150 {offsets = [16, 0], sizes = [8, 512], strides = [1, 1]} : vector<72x512xf32> to vector<8x512xf32>
    %c15_i32_32 = arith.constant 15 : i32
    %161 = tpu.dynamic_rotate %160 by %c15_i32_32 dim 1 : vector<8x512xf32>, i32 -> vector<8x512xf32>
    %162 = arith.mulf %161, %9 : vector<8x512xf32>
    %163 = arith.addf %159, %162 : vector<8x512xf32>
    %164 = vector.extract_strided_slice %150 {offsets = [24, 0], sizes = [8, 512], strides = [1, 1]} : vector<72x512xf32> to vector<8x512xf32>
    %c1_i32_33 = arith.constant 1 : i32
    %165 = tpu.dynamic_rotate %164 by %c1_i32_33 dim 1 : vector<8x512xf32>, i32 -> vector<8x512xf32>
    %166 = arith.mulf %165, %12 : vector<8x512xf32>
    %167 = arith.addf %163, %166 : vector<8x512xf32>
    %168 = vector.extract_strided_slice %150 {offsets = [40, 0], sizes = [8, 512], strides = [1, 1]} : vector<72x512xf32> to vector<8x512xf32>
    %c511_i32_34 = arith.constant 511 : i32
    %169 = tpu.dynamic_rotate %168 by %c511_i32_34 dim 1 : vector<8x512xf32>, i32 -> vector<8x512xf32>
    %170 = arith.mulf %169, %15 : vector<8x512xf32>
    %171 = arith.addf %167, %170 : vector<8x512xf32>
    %172 = vector.extract_strided_slice %150 {offsets = [48, 0], sizes = [8, 512], strides = [1, 1]} : vector<72x512xf32> to vector<8x512xf32>
    %c497_i32_35 = arith.constant 497 : i32
    %173 = tpu.dynamic_rotate %172 by %c497_i32_35 dim 1 : vector<8x512xf32>, i32 -> vector<8x512xf32>
    %174 = arith.mulf %173, %18 : vector<8x512xf32>
    %175 = arith.addf %171, %174 : vector<8x512xf32>
    %176 = vector.extract_strided_slice %150 {offsets = [56, 0], sizes = [8, 512], strides = [1, 1]} : vector<72x512xf32> to vector<8x512xf32>
    %c496_i32_36 = arith.constant 496 : i32
    %177 = tpu.dynamic_rotate %176 by %c496_i32_36 dim 1 : vector<8x512xf32>, i32 -> vector<8x512xf32>
    %178 = arith.mulf %177, %21 : vector<8x512xf32>
    %179 = arith.addf %175, %178 : vector<8x512xf32>
    %180 = vector.extract_strided_slice %150 {offsets = [64, 0], sizes = [8, 512], strides = [1, 1]} : vector<72x512xf32> to vector<8x512xf32>
    %c495_i32_37 = arith.constant 495 : i32
    %181 = tpu.dynamic_rotate %180 by %c495_i32_37 dim 1 : vector<8x512xf32>, i32 -> vector<8x512xf32>
    %182 = arith.mulf %181, %24 : vector<8x512xf32>
    %183 = arith.addf %179, %182 : vector<8x512xf32>
    %184 = vector.broadcast %27 : vector<8x1xf32> to vector<8x512xf32>
    %185 = arith.addf %183, %184 : vector<8x512xf32>
    %cst_38 = arith.constant dense<0.000000e+00> : vector<512xf32>
    %186 = vector.multi_reduction <add>, %185, %cst_38 [0] : vector<8x512xf32> to vector<512xf32>
    %187 = vector.shape_cast %186 : vector<512xf32> to vector<1x512xf32>
    %188 = arith.mulf %185, %185 : vector<8x512xf32>
    %cst_39 = arith.constant dense<0.000000e+00> : vector<512xf32>
    %189 = vector.multi_reduction <add>, %188, %cst_39 [0] : vector<8x512xf32> to vector<512xf32>
    %190 = vector.shape_cast %189 : vector<512xf32> to vector<1x512xf32>
    %191 = vector.extract_strided_slice %187 {offsets = [0, 0], sizes = [1, 256], strides = [1, 1]} : vector<1x512xf32> to vector<1x256xf32>
    %192 = vector.shape_cast %191 : vector<1x256xf32> to vector<1x1x256xf32>
    %cst_40 = arith.constant dense<0.000000e+00> : vector<1xf32>
    %193 = vector.multi_reduction <add>, %192, %cst_40 [1, 2] : vector<1x1x256xf32> to vector<1xf32>
    %194 = vector.shape_cast %193 : vector<1xf32> to vector<1x1x1xf32>
    %195 = vector.extract %194[0, 0, 0] : f32 from vector<1x1x1xf32>
    %cst_41 = arith.constant 4.8828125E-4 : f32
    %196 = arith.mulf %195, %cst_41 : f32
    %197 = vector.extract_strided_slice %190 {offsets = [0, 0], sizes = [1, 256], strides = [1, 1]} : vector<1x512xf32> to vector<1x256xf32>
    %198 = vector.shape_cast %197 : vector<1x256xf32> to vector<1x1x256xf32>
    %cst_42 = arith.constant dense<0.000000e+00> : vector<1xf32>
    %199 = vector.multi_reduction <add>, %198, %cst_42 [1, 2] : vector<1x1x256xf32> to vector<1xf32>
    %200 = vector.shape_cast %199 : vector<1xf32> to vector<1x1x1xf32>
    %201 = vector.extract %200[0, 0, 0] : f32 from vector<1x1x1xf32>
    %cst_43 = arith.constant 4.8828125E-4 : f32
    %202 = arith.mulf %201, %cst_43 : f32
    %203 = arith.mulf %196, %196 : f32
    %204 = arith.subf %202, %203 : f32
    %cst_44 = arith.constant 9.99999974E-6 : f32
    %205 = arith.addf %204, %cst_44 : f32
    %206 = math.rsqrt %205 : f32
    %207 = vector.broadcast %196 : f32 to vector<1x256xf32>
    %208 = vector.broadcast %206 : f32 to vector<1x256xf32>
    %209 = vector.extract_strided_slice %187 {offsets = [0, 256], sizes = [1, 256], strides = [1, 1]} : vector<1x512xf32> to vector<1x256xf32>
    %210 = vector.shape_cast %209 : vector<1x256xf32> to vector<1x1x256xf32>
    %cst_45 = arith.constant dense<0.000000e+00> : vector<1xf32>
    %211 = vector.multi_reduction <add>, %210, %cst_45 [1, 2] : vector<1x1x256xf32> to vector<1xf32>
    %212 = vector.shape_cast %211 : vector<1xf32> to vector<1x1x1xf32>
    %213 = vector.extract %212[0, 0, 0] : f32 from vector<1x1x1xf32>
    %cst_46 = arith.constant 4.8828125E-4 : f32
    %214 = arith.mulf %213, %cst_46 : f32
    %215 = vector.extract_strided_slice %190 {offsets = [0, 256], sizes = [1, 256], strides = [1, 1]} : vector<1x512xf32> to vector<1x256xf32>
    %216 = vector.shape_cast %215 : vector<1x256xf32> to vector<1x1x256xf32>
    %cst_47 = arith.constant dense<0.000000e+00> : vector<1xf32>
    %217 = vector.multi_reduction <add>, %216, %cst_47 [1, 2] : vector<1x1x256xf32> to vector<1xf32>
    %218 = vector.shape_cast %217 : vector<1xf32> to vector<1x1x1xf32>
    %219 = vector.extract %218[0, 0, 0] : f32 from vector<1x1x1xf32>
    %cst_48 = arith.constant 4.8828125E-4 : f32
    %220 = arith.mulf %219, %cst_48 : f32
    %221 = arith.mulf %214, %214 : f32
    %222 = arith.subf %220, %221 : f32
    %cst_49 = arith.constant 9.99999974E-6 : f32
    %223 = arith.addf %222, %cst_49 : f32
    %224 = math.rsqrt %223 : f32
    %225 = vector.broadcast %214 : f32 to vector<1x256xf32>
    %226 = vector.broadcast %224 : f32 to vector<1x256xf32>
    %227 = tpu.concatenate %207, %225 in 1 : vector<1x256xf32>, vector<1x256xf32> -> vector<1x512xf32>
    %228 = tpu.concatenate %208, %226 in 1 : vector<1x256xf32>, vector<1x256xf32> -> vector<1x512xf32>
    %229 = vector.broadcast %227 : vector<1x512xf32> to vector<8x512xf32>
    %230 = arith.subf %185, %229 : vector<8x512xf32>
    %231 = vector.broadcast %228 : vector<1x512xf32> to vector<8x512xf32>
    %232 = arith.mulf %230, %231 : vector<8x512xf32>
    %233 = vector.broadcast %31 : vector<8x1xf32> to vector<8x512xf32>
    %234 = arith.mulf %232, %233 : vector<8x512xf32>
    %235 = vector.broadcast %35 : vector<8x1xf32> to vector<8x512xf32>
    %236 = arith.addf %234, %235 : vector<8x512xf32>
    %cst_50 = arith.constant 0.000000e+00 : f32
    %237 = vector.broadcast %cst_50 : f32 to vector<8x512xf32>
    %238 = arith.maximumf %236, %237 : vector<8x512xf32>
    %c1 = arith.constant 1 : index
    %c0_51 = arith.constant 0 : index
    %c0_52 = arith.constant 0 : index
    %239 = vector.load %arg5[%c1, %c0_51, %c0_52] : memref<3x72x8xf32, #tpu.memory_space<vmem>>, vector<1x72x8xf32>
    %240 = vector.shape_cast %239 : vector<1x72x8xf32> to vector<72x8xf32>
    %cst_53 = arith.constant dense<0.000000e+00> : vector<72x512xf32>
    %241 = tpu.matmul %240, %238, %cst_53 {dimension_numbers = #tpu.dot_dimension_numbers<[1], [0], [0], [1], [0, 0, 1, 1], [], []>} : vector<72x8xf32>, vector<8x512xf32>, vector<72x512xf32> -> vector<72x512xf32>
    %242 = vector.extract_strided_slice %241 {offsets = [32, 0], sizes = [8, 512], strides = [1, 1]} : vector<72x512xf32> to vector<8x512xf32>
    %243 = vector.extract_strided_slice %241 {offsets = [0, 0], sizes = [8, 512], strides = [1, 1]} : vector<72x512xf32> to vector<8x512xf32>
    %c17_i32_54 = arith.constant 17 : i32
    %244 = tpu.dynamic_rotate %243 by %c17_i32_54 dim 1 : vector<8x512xf32>, i32 -> vector<8x512xf32>
    %245 = arith.mulf %244, %3 : vector<8x512xf32>
    %246 = arith.addf %242, %245 : vector<8x512xf32>
    %247 = vector.extract_strided_slice %241 {offsets = [8, 0], sizes = [8, 512], strides = [1, 1]} : vector<72x512xf32> to vector<8x512xf32>
    %c16_i32_55 = arith.constant 16 : i32
    %248 = tpu.dynamic_rotate %247 by %c16_i32_55 dim 1 : vector<8x512xf32>, i32 -> vector<8x512xf32>
    %249 = arith.mulf %248, %6 : vector<8x512xf32>
    %250 = arith.addf %246, %249 : vector<8x512xf32>
    %251 = vector.extract_strided_slice %241 {offsets = [16, 0], sizes = [8, 512], strides = [1, 1]} : vector<72x512xf32> to vector<8x512xf32>
    %c15_i32_56 = arith.constant 15 : i32
    %252 = tpu.dynamic_rotate %251 by %c15_i32_56 dim 1 : vector<8x512xf32>, i32 -> vector<8x512xf32>
    %253 = arith.mulf %252, %9 : vector<8x512xf32>
    %254 = arith.addf %250, %253 : vector<8x512xf32>
    %255 = vector.extract_strided_slice %241 {offsets = [24, 0], sizes = [8, 512], strides = [1, 1]} : vector<72x512xf32> to vector<8x512xf32>
    %c1_i32_57 = arith.constant 1 : i32
    %256 = tpu.dynamic_rotate %255 by %c1_i32_57 dim 1 : vector<8x512xf32>, i32 -> vector<8x512xf32>
    %257 = arith.mulf %256, %12 : vector<8x512xf32>
    %258 = arith.addf %254, %257 : vector<8x512xf32>
    %259 = vector.extract_strided_slice %241 {offsets = [40, 0], sizes = [8, 512], strides = [1, 1]} : vector<72x512xf32> to vector<8x512xf32>
    %c511_i32_58 = arith.constant 511 : i32
    %260 = tpu.dynamic_rotate %259 by %c511_i32_58 dim 1 : vector<8x512xf32>, i32 -> vector<8x512xf32>
    %261 = arith.mulf %260, %15 : vector<8x512xf32>
    %262 = arith.addf %258, %261 : vector<8x512xf32>
    %263 = vector.extract_strided_slice %241 {offsets = [48, 0], sizes = [8, 512], strides = [1, 1]} : vector<72x512xf32> to vector<8x512xf32>
    %c497_i32_59 = arith.constant 497 : i32
    %264 = tpu.dynamic_rotate %263 by %c497_i32_59 dim 1 : vector<8x512xf32>, i32 -> vector<8x512xf32>
    %265 = arith.mulf %264, %18 : vector<8x512xf32>
    %266 = arith.addf %262, %265 : vector<8x512xf32>
    %267 = vector.extract_strided_slice %241 {offsets = [56, 0], sizes = [8, 512], strides = [1, 1]} : vector<72x512xf32> to vector<8x512xf32>
    %c496_i32_60 = arith.constant 496 : i32
    %268 = tpu.dynamic_rotate %267 by %c496_i32_60 dim 1 : vector<8x512xf32>, i32 -> vector<8x512xf32>
    %269 = arith.mulf %268, %21 : vector<8x512xf32>
    %270 = arith.addf %266, %269 : vector<8x512xf32>
    %271 = vector.extract_strided_slice %241 {offsets = [64, 0], sizes = [8, 512], strides = [1, 1]} : vector<72x512xf32> to vector<8x512xf32>
    %c495_i32_61 = arith.constant 495 : i32
    %272 = tpu.dynamic_rotate %271 by %c495_i32_61 dim 1 : vector<8x512xf32>, i32 -> vector<8x512xf32>
    %273 = arith.mulf %272, %24 : vector<8x512xf32>
    %274 = arith.addf %270, %273 : vector<8x512xf32>
    %275 = vector.broadcast %28 : vector<8x1xf32> to vector<8x512xf32>
    %276 = arith.addf %274, %275 : vector<8x512xf32>
    %cst_62 = arith.constant dense<0.000000e+00> : vector<512xf32>
    %277 = vector.multi_reduction <add>, %276, %cst_62 [0] : vector<8x512xf32> to vector<512xf32>
    %278 = vector.shape_cast %277 : vector<512xf32> to vector<1x512xf32>
    %279 = arith.mulf %276, %276 : vector<8x512xf32>
    %cst_63 = arith.constant dense<0.000000e+00> : vector<512xf32>
    %280 = vector.multi_reduction <add>, %279, %cst_63 [0] : vector<8x512xf32> to vector<512xf32>
    %281 = vector.shape_cast %280 : vector<512xf32> to vector<1x512xf32>
    %282 = vector.extract_strided_slice %278 {offsets = [0, 0], sizes = [1, 256], strides = [1, 1]} : vector<1x512xf32> to vector<1x256xf32>
    %283 = vector.shape_cast %282 : vector<1x256xf32> to vector<1x1x256xf32>
    %cst_64 = arith.constant dense<0.000000e+00> : vector<1xf32>
    %284 = vector.multi_reduction <add>, %283, %cst_64 [1, 2] : vector<1x1x256xf32> to vector<1xf32>
    %285 = vector.shape_cast %284 : vector<1xf32> to vector<1x1x1xf32>
    %286 = vector.extract %285[0, 0, 0] : f32 from vector<1x1x1xf32>
    %cst_65 = arith.constant 4.8828125E-4 : f32
    %287 = arith.mulf %286, %cst_65 : f32
    %288 = vector.extract_strided_slice %281 {offsets = [0, 0], sizes = [1, 256], strides = [1, 1]} : vector<1x512xf32> to vector<1x256xf32>
    %289 = vector.shape_cast %288 : vector<1x256xf32> to vector<1x1x256xf32>
    %cst_66 = arith.constant dense<0.000000e+00> : vector<1xf32>
    %290 = vector.multi_reduction <add>, %289, %cst_66 [1, 2] : vector<1x1x256xf32> to vector<1xf32>
    %291 = vector.shape_cast %290 : vector<1xf32> to vector<1x1x1xf32>
    %292 = vector.extract %291[0, 0, 0] : f32 from vector<1x1x1xf32>
    %cst_67 = arith.constant 4.8828125E-4 : f32
    %293 = arith.mulf %292, %cst_67 : f32
    %294 = arith.mulf %287, %287 : f32
    %295 = arith.subf %293, %294 : f32
    %cst_68 = arith.constant 9.99999974E-6 : f32
    %296 = arith.addf %295, %cst_68 : f32
    %297 = math.rsqrt %296 : f32
    %298 = vector.broadcast %287 : f32 to vector<1x256xf32>
    %299 = vector.broadcast %297 : f32 to vector<1x256xf32>
    %300 = vector.extract_strided_slice %278 {offsets = [0, 256], sizes = [1, 256], strides = [1, 1]} : vector<1x512xf32> to vector<1x256xf32>
    %301 = vector.shape_cast %300 : vector<1x256xf32> to vector<1x1x256xf32>
    %cst_69 = arith.constant dense<0.000000e+00> : vector<1xf32>
    %302 = vector.multi_reduction <add>, %301, %cst_69 [1, 2] : vector<1x1x256xf32> to vector<1xf32>
    %303 = vector.shape_cast %302 : vector<1xf32> to vector<1x1x1xf32>
    %304 = vector.extract %303[0, 0, 0] : f32 from vector<1x1x1xf32>
    %cst_70 = arith.constant 4.8828125E-4 : f32
    %305 = arith.mulf %304, %cst_70 : f32
    %306 = vector.extract_strided_slice %281 {offsets = [0, 256], sizes = [1, 256], strides = [1, 1]} : vector<1x512xf32> to vector<1x256xf32>
    %307 = vector.shape_cast %306 : vector<1x256xf32> to vector<1x1x256xf32>
    %cst_71 = arith.constant dense<0.000000e+00> : vector<1xf32>
    %308 = vector.multi_reduction <add>, %307, %cst_71 [1, 2] : vector<1x1x256xf32> to vector<1xf32>
    %309 = vector.shape_cast %308 : vector<1xf32> to vector<1x1x1xf32>
    %310 = vector.extract %309[0, 0, 0] : f32 from vector<1x1x1xf32>
    %cst_72 = arith.constant 4.8828125E-4 : f32
    %311 = arith.mulf %310, %cst_72 : f32
    %312 = arith.mulf %305, %305 : f32
    %313 = arith.subf %311, %312 : f32
    %cst_73 = arith.constant 9.99999974E-6 : f32
    %314 = arith.addf %313, %cst_73 : f32
    %315 = math.rsqrt %314 : f32
    %316 = vector.broadcast %305 : f32 to vector<1x256xf32>
    %317 = vector.broadcast %315 : f32 to vector<1x256xf32>
    %318 = tpu.concatenate %298, %316 in 1 : vector<1x256xf32>, vector<1x256xf32> -> vector<1x512xf32>
    %319 = tpu.concatenate %299, %317 in 1 : vector<1x256xf32>, vector<1x256xf32> -> vector<1x512xf32>
    %320 = vector.broadcast %318 : vector<1x512xf32> to vector<8x512xf32>
    %321 = arith.subf %276, %320 : vector<8x512xf32>
    %322 = vector.broadcast %319 : vector<1x512xf32> to vector<8x512xf32>
    %323 = arith.mulf %321, %322 : vector<8x512xf32>
    %324 = vector.broadcast %32 : vector<8x1xf32> to vector<8x512xf32>
    %325 = arith.mulf %323, %324 : vector<8x512xf32>
    %326 = vector.broadcast %36 : vector<8x1xf32> to vector<8x512xf32>
    %327 = arith.addf %325, %326 : vector<8x512xf32>
    %cst_74 = arith.constant 0.000000e+00 : f32
    %328 = vector.broadcast %cst_74 : f32 to vector<8x512xf32>
    %329 = arith.maximumf %327, %328 : vector<8x512xf32>
    %c2 = arith.constant 2 : index
    %c0_75 = arith.constant 0 : index
    %c0_76 = arith.constant 0 : index
    %330 = vector.load %arg5[%c2, %c0_75, %c0_76] : memref<3x72x8xf32, #tpu.memory_space<vmem>>, vector<1x72x8xf32>
    %331 = vector.shape_cast %330 : vector<1x72x8xf32> to vector<72x8xf32>
    %cst_77 = arith.constant dense<0.000000e+00> : vector<72x512xf32>
    %332 = tpu.matmul %331, %329, %cst_77 {dimension_numbers = #tpu.dot_dimension_numbers<[1], [0], [0], [1], [0, 0, 1, 1], [], []>} : vector<72x8xf32>, vector<8x512xf32>, vector<72x512xf32> -> vector<72x512xf32>
    %333 = vector.extract_strided_slice %332 {offsets = [32, 0], sizes = [8, 512], strides = [1, 1]} : vector<72x512xf32> to vector<8x512xf32>
    %334 = vector.extract_strided_slice %332 {offsets = [0, 0], sizes = [8, 512], strides = [1, 1]} : vector<72x512xf32> to vector<8x512xf32>
    %c17_i32_78 = arith.constant 17 : i32
    %335 = tpu.dynamic_rotate %334 by %c17_i32_78 dim 1 : vector<8x512xf32>, i32 -> vector<8x512xf32>
    %336 = arith.mulf %335, %3 : vector<8x512xf32>
    %337 = arith.addf %333, %336 : vector<8x512xf32>
    %338 = vector.extract_strided_slice %332 {offsets = [8, 0], sizes = [8, 512], strides = [1, 1]} : vector<72x512xf32> to vector<8x512xf32>
    %c16_i32_79 = arith.constant 16 : i32
    %339 = tpu.dynamic_rotate %338 by %c16_i32_79 dim 1 : vector<8x512xf32>, i32 -> vector<8x512xf32>
    %340 = arith.mulf %339, %6 : vector<8x512xf32>
    %341 = arith.addf %337, %340 : vector<8x512xf32>
    %342 = vector.extract_strided_slice %332 {offsets = [16, 0], sizes = [8, 512], strides = [1, 1]} : vector<72x512xf32> to vector<8x512xf32>
    %c15_i32_80 = arith.constant 15 : i32
    %343 = tpu.dynamic_rotate %342 by %c15_i32_80 dim 1 : vector<8x512xf32>, i32 -> vector<8x512xf32>
    %344 = arith.mulf %343, %9 : vector<8x512xf32>
    %345 = arith.addf %341, %344 : vector<8x512xf32>
    %346 = vector.extract_strided_slice %332 {offsets = [24, 0], sizes = [8, 512], strides = [1, 1]} : vector<72x512xf32> to vector<8x512xf32>
    %c1_i32_81 = arith.constant 1 : i32
    %347 = tpu.dynamic_rotate %346 by %c1_i32_81 dim 1 : vector<8x512xf32>, i32 -> vector<8x512xf32>
    %348 = arith.mulf %347, %12 : vector<8x512xf32>
    %349 = arith.addf %345, %348 : vector<8x512xf32>
    %350 = vector.extract_strided_slice %332 {offsets = [40, 0], sizes = [8, 512], strides = [1, 1]} : vector<72x512xf32> to vector<8x512xf32>
    %c511_i32_82 = arith.constant 511 : i32
    %351 = tpu.dynamic_rotate %350 by %c511_i32_82 dim 1 : vector<8x512xf32>, i32 -> vector<8x512xf32>
    %352 = arith.mulf %351, %15 : vector<8x512xf32>
    %353 = arith.addf %349, %352 : vector<8x512xf32>
    %354 = vector.extract_strided_slice %332 {offsets = [48, 0], sizes = [8, 512], strides = [1, 1]} : vector<72x512xf32> to vector<8x512xf32>
    %c497_i32_83 = arith.constant 497 : i32
    %355 = tpu.dynamic_rotate %354 by %c497_i32_83 dim 1 : vector<8x512xf32>, i32 -> vector<8x512xf32>
    %356 = arith.mulf %355, %18 : vector<8x512xf32>
    %357 = arith.addf %353, %356 : vector<8x512xf32>
    %358 = vector.extract_strided_slice %332 {offsets = [56, 0], sizes = [8, 512], strides = [1, 1]} : vector<72x512xf32> to vector<8x512xf32>
    %c496_i32_84 = arith.constant 496 : i32
    %359 = tpu.dynamic_rotate %358 by %c496_i32_84 dim 1 : vector<8x512xf32>, i32 -> vector<8x512xf32>
    %360 = arith.mulf %359, %21 : vector<8x512xf32>
    %361 = arith.addf %357, %360 : vector<8x512xf32>
    %362 = vector.extract_strided_slice %332 {offsets = [64, 0], sizes = [8, 512], strides = [1, 1]} : vector<72x512xf32> to vector<8x512xf32>
    %c495_i32_85 = arith.constant 495 : i32
    %363 = tpu.dynamic_rotate %362 by %c495_i32_85 dim 1 : vector<8x512xf32>, i32 -> vector<8x512xf32>
    %364 = arith.mulf %363, %24 : vector<8x512xf32>
    %365 = arith.addf %361, %364 : vector<8x512xf32>
    %366 = vector.broadcast %29 : vector<8x1xf32> to vector<8x512xf32>
    %367 = arith.addf %365, %366 : vector<8x512xf32>
    %cst_86 = arith.constant dense<0.000000e+00> : vector<512xf32>
    %368 = vector.multi_reduction <add>, %367, %cst_86 [0] : vector<8x512xf32> to vector<512xf32>
    %369 = vector.shape_cast %368 : vector<512xf32> to vector<1x512xf32>
    %370 = arith.mulf %367, %367 : vector<8x512xf32>
    %cst_87 = arith.constant dense<0.000000e+00> : vector<512xf32>
    %371 = vector.multi_reduction <add>, %370, %cst_87 [0] : vector<8x512xf32> to vector<512xf32>
    %372 = vector.shape_cast %371 : vector<512xf32> to vector<1x512xf32>
    %373 = vector.extract_strided_slice %369 {offsets = [0, 0], sizes = [1, 256], strides = [1, 1]} : vector<1x512xf32> to vector<1x256xf32>
    %374 = vector.shape_cast %373 : vector<1x256xf32> to vector<1x1x256xf32>
    %cst_88 = arith.constant dense<0.000000e+00> : vector<1xf32>
    %375 = vector.multi_reduction <add>, %374, %cst_88 [1, 2] : vector<1x1x256xf32> to vector<1xf32>
    %376 = vector.shape_cast %375 : vector<1xf32> to vector<1x1x1xf32>
    %377 = vector.extract %376[0, 0, 0] : f32 from vector<1x1x1xf32>
    %cst_89 = arith.constant 4.8828125E-4 : f32
    %378 = arith.mulf %377, %cst_89 : f32
    %379 = vector.extract_strided_slice %372 {offsets = [0, 0], sizes = [1, 256], strides = [1, 1]} : vector<1x512xf32> to vector<1x256xf32>
    %380 = vector.shape_cast %379 : vector<1x256xf32> to vector<1x1x256xf32>
    %cst_90 = arith.constant dense<0.000000e+00> : vector<1xf32>
    %381 = vector.multi_reduction <add>, %380, %cst_90 [1, 2] : vector<1x1x256xf32> to vector<1xf32>
    %382 = vector.shape_cast %381 : vector<1xf32> to vector<1x1x1xf32>
    %383 = vector.extract %382[0, 0, 0] : f32 from vector<1x1x1xf32>
    %cst_91 = arith.constant 4.8828125E-4 : f32
    %384 = arith.mulf %383, %cst_91 : f32
    %385 = arith.mulf %378, %378 : f32
    %386 = arith.subf %384, %385 : f32
    %cst_92 = arith.constant 9.99999974E-6 : f32
    %387 = arith.addf %386, %cst_92 : f32
    %388 = math.rsqrt %387 : f32
    %389 = vector.broadcast %378 : f32 to vector<1x256xf32>
    %390 = vector.broadcast %388 : f32 to vector<1x256xf32>
    %391 = vector.extract_strided_slice %369 {offsets = [0, 256], sizes = [1, 256], strides = [1, 1]} : vector<1x512xf32> to vector<1x256xf32>
    %392 = vector.shape_cast %391 : vector<1x256xf32> to vector<1x1x256xf32>
    %cst_93 = arith.constant dense<0.000000e+00> : vector<1xf32>
    %393 = vector.multi_reduction <add>, %392, %cst_93 [1, 2] : vector<1x1x256xf32> to vector<1xf32>
    %394 = vector.shape_cast %393 : vector<1xf32> to vector<1x1x1xf32>
    %395 = vector.extract %394[0, 0, 0] : f32 from vector<1x1x1xf32>
    %cst_94 = arith.constant 4.8828125E-4 : f32
    %396 = arith.mulf %395, %cst_94 : f32
    %397 = vector.extract_strided_slice %372 {offsets = [0, 256], sizes = [1, 256], strides = [1, 1]} : vector<1x512xf32> to vector<1x256xf32>
    %398 = vector.shape_cast %397 : vector<1x256xf32> to vector<1x1x256xf32>
    %cst_95 = arith.constant dense<0.000000e+00> : vector<1xf32>
    %399 = vector.multi_reduction <add>, %398, %cst_95 [1, 2] : vector<1x1x256xf32> to vector<1xf32>
    %400 = vector.shape_cast %399 : vector<1xf32> to vector<1x1x1xf32>
    %401 = vector.extract %400[0, 0, 0] : f32 from vector<1x1x1xf32>
    %cst_96 = arith.constant 4.8828125E-4 : f32
    %402 = arith.mulf %401, %cst_96 : f32
    %403 = arith.mulf %396, %396 : f32
    %404 = arith.subf %402, %403 : f32
    %cst_97 = arith.constant 9.99999974E-6 : f32
    %405 = arith.addf %404, %cst_97 : f32
    %406 = math.rsqrt %405 : f32
    %407 = vector.broadcast %396 : f32 to vector<1x256xf32>
    %408 = vector.broadcast %406 : f32 to vector<1x256xf32>
    %409 = tpu.concatenate %389, %407 in 1 : vector<1x256xf32>, vector<1x256xf32> -> vector<1x512xf32>
    %410 = tpu.concatenate %390, %408 in 1 : vector<1x256xf32>, vector<1x256xf32> -> vector<1x512xf32>
    %411 = vector.broadcast %409 : vector<1x512xf32> to vector<8x512xf32>
    %412 = arith.subf %367, %411 : vector<8x512xf32>
    %413 = vector.broadcast %410 : vector<1x512xf32> to vector<8x512xf32>
    %414 = arith.mulf %412, %413 : vector<8x512xf32>
    %415 = vector.broadcast %33 : vector<8x1xf32> to vector<8x512xf32>
    %416 = arith.mulf %414, %415 : vector<8x512xf32>
    %417 = vector.broadcast %37 : vector<8x1xf32> to vector<8x512xf32>
    %418 = arith.addf %416, %417 : vector<8x512xf32>
    %cst_98 = arith.constant 0.000000e+00 : f32
    %419 = vector.broadcast %cst_98 : f32 to vector<8x512xf32>
    %420 = arith.maximumf %418, %419 : vector<8x512xf32>
    %c0_99 = arith.constant 0 : index
    %c0_100 = arith.constant 0 : index
    %421 = vector.load %arg6[%c0_99, %c0_100] : memref<9x8xf32, #tpu.memory_space<vmem>>, vector<9x8xf32>
    %cst_101 = arith.constant dense<0.000000e+00> : vector<9x512xf32>
    %422 = tpu.matmul %421, %420, %cst_101 {dimension_numbers = #tpu.dot_dimension_numbers<[1], [0], [0], [1], [0, 0, 1, 1], [], []>} : vector<9x8xf32>, vector<8x512xf32>, vector<9x512xf32> -> vector<9x512xf32>
    %423 = vector.extract_strided_slice %422 {offsets = [4, 0], sizes = [1, 512], strides = [1, 1]} : vector<9x512xf32> to vector<1x512xf32>
    %424 = vector.extract_strided_slice %422 {offsets = [0, 0], sizes = [1, 512], strides = [1, 1]} : vector<9x512xf32> to vector<1x512xf32>
    %c17_i32_102 = arith.constant 17 : i32
    %425 = tpu.dynamic_rotate %424 by %c17_i32_102 dim 1 : vector<1x512xf32>, i32 -> vector<1x512xf32>
    %426 = vector.extract_strided_slice %0 {offsets = [0, 0], sizes = [1, 512], strides = [1, 1]} : vector<9x512xf32> to vector<1x512xf32>
    %427 = arith.mulf %425, %426 : vector<1x512xf32>
    %428 = arith.addf %423, %427 : vector<1x512xf32>
    %429 = vector.extract_strided_slice %422 {offsets = [1, 0], sizes = [1, 512], strides = [1, 1]} : vector<9x512xf32> to vector<1x512xf32>
    %c16_i32_103 = arith.constant 16 : i32
    %430 = tpu.dynamic_rotate %429 by %c16_i32_103 dim 1 : vector<1x512xf32>, i32 -> vector<1x512xf32>
    %431 = vector.extract_strided_slice %0 {offsets = [1, 0], sizes = [1, 512], strides = [1, 1]} : vector<9x512xf32> to vector<1x512xf32>
    %432 = arith.mulf %430, %431 : vector<1x512xf32>
    %433 = arith.addf %428, %432 : vector<1x512xf32>
    %434 = vector.extract_strided_slice %422 {offsets = [2, 0], sizes = [1, 512], strides = [1, 1]} : vector<9x512xf32> to vector<1x512xf32>
    %c15_i32_104 = arith.constant 15 : i32
    %435 = tpu.dynamic_rotate %434 by %c15_i32_104 dim 1 : vector<1x512xf32>, i32 -> vector<1x512xf32>
    %436 = vector.extract_strided_slice %0 {offsets = [2, 0], sizes = [1, 512], strides = [1, 1]} : vector<9x512xf32> to vector<1x512xf32>
    %437 = arith.mulf %435, %436 : vector<1x512xf32>
    %438 = arith.addf %433, %437 : vector<1x512xf32>
    %439 = vector.extract_strided_slice %422 {offsets = [3, 0], sizes = [1, 512], strides = [1, 1]} : vector<9x512xf32> to vector<1x512xf32>
    %c1_i32_105 = arith.constant 1 : i32
    %440 = tpu.dynamic_rotate %439 by %c1_i32_105 dim 1 : vector<1x512xf32>, i32 -> vector<1x512xf32>
    %441 = vector.extract_strided_slice %0 {offsets = [3, 0], sizes = [1, 512], strides = [1, 1]} : vector<9x512xf32> to vector<1x512xf32>
    %442 = arith.mulf %440, %441 : vector<1x512xf32>
    %443 = arith.addf %438, %442 : vector<1x512xf32>
    %444 = vector.extract_strided_slice %422 {offsets = [5, 0], sizes = [1, 512], strides = [1, 1]} : vector<9x512xf32> to vector<1x512xf32>
    %c511_i32_106 = arith.constant 511 : i32
    %445 = tpu.dynamic_rotate %444 by %c511_i32_106 dim 1 : vector<1x512xf32>, i32 -> vector<1x512xf32>
    %446 = vector.extract_strided_slice %0 {offsets = [5, 0], sizes = [1, 512], strides = [1, 1]} : vector<9x512xf32> to vector<1x512xf32>
    %447 = arith.mulf %445, %446 : vector<1x512xf32>
    %448 = arith.addf %443, %447 : vector<1x512xf32>
    %449 = vector.extract_strided_slice %422 {offsets = [6, 0], sizes = [1, 512], strides = [1, 1]} : vector<9x512xf32> to vector<1x512xf32>
    %c497_i32_107 = arith.constant 497 : i32
    %450 = tpu.dynamic_rotate %449 by %c497_i32_107 dim 1 : vector<1x512xf32>, i32 -> vector<1x512xf32>
    %451 = vector.extract_strided_slice %0 {offsets = [6, 0], sizes = [1, 512], strides = [1, 1]} : vector<9x512xf32> to vector<1x512xf32>
    %452 = arith.mulf %450, %451 : vector<1x512xf32>
    %453 = arith.addf %448, %452 : vector<1x512xf32>
    %454 = vector.extract_strided_slice %422 {offsets = [7, 0], sizes = [1, 512], strides = [1, 1]} : vector<9x512xf32> to vector<1x512xf32>
    %c496_i32_108 = arith.constant 496 : i32
    %455 = tpu.dynamic_rotate %454 by %c496_i32_108 dim 1 : vector<1x512xf32>, i32 -> vector<1x512xf32>
    %456 = vector.extract_strided_slice %0 {offsets = [7, 0], sizes = [1, 512], strides = [1, 1]} : vector<9x512xf32> to vector<1x512xf32>
    %457 = arith.mulf %455, %456 : vector<1x512xf32>
    %458 = arith.addf %453, %457 : vector<1x512xf32>
    %459 = vector.extract_strided_slice %422 {offsets = [8, 0], sizes = [1, 512], strides = [1, 1]} : vector<9x512xf32> to vector<1x512xf32>
    %c495_i32_109 = arith.constant 495 : i32
    %460 = tpu.dynamic_rotate %459 by %c495_i32_109 dim 1 : vector<1x512xf32>, i32 -> vector<1x512xf32>
    %461 = vector.extract_strided_slice %0 {offsets = [8, 0], sizes = [1, 512], strides = [1, 1]} : vector<9x512xf32> to vector<1x512xf32>
    %462 = arith.mulf %460, %461 : vector<1x512xf32>
    %463 = arith.addf %458, %462 : vector<1x512xf32>
    %464 = vector.broadcast %38 : vector<1x1xf32> to vector<1x512xf32>
    %465 = arith.addf %463, %464 : vector<1x512xf32>
    %466 = math.exp %465 : vector<1x512xf32>
    %c0_110 = arith.constant 0 : index
    %c0_111 = arith.constant 0 : index
    %c0_112 = arith.constant 0 : index
    %467 = vector.load %arg8[%c0_110, %c0_111, %c0_112] : memref<1x1x512xf32, #tpu.memory_space<vmem>>, vector<1x1x512xf32>
    %468 = vector.shape_cast %467 : vector<1x1x512xf32> to vector<1x512xf32>
    %469 = vector.shape_cast %466 : vector<1x512xf32> to vector<1x1x512xf32>
    tpu.vector_store %arg8[%c0_110, %c0_111, %c0_112], %469 {strides = array<i32>} : memref<1x1x512xf32, #tpu.memory_space<vmem>>, vector<1x1x512xf32>,
    return
  }
  func.func @transform_0(%arg0: i32) -> (i32, i32, i32) {
    %c0_i32 = arith.constant 0 : i32
    %c0_i32_0 = arith.constant 0 : i32
    %c0_i32_1 = arith.constant 0 : i32
    return %arg0, %c0_i32, %c0_i32_0 : i32, i32, i32
  }
  func.func @transform_1(%arg0: i32) -> (i32, i32, i32) {
    %c0_i32 = arith.constant 0 : i32
    %c0_i32_0 = arith.constant 0 : i32
    %c0_i32_1 = arith.constant 0 : i32
    return %arg0, %c0_i32, %c0_i32_0 : i32, i32, i32
  }
  func.func @transform_2(%arg0: i32) -> (i32, i32) {
    %c0_i32 = arith.constant 0 : i32
    %c0_i32_0 = arith.constant 0 : i32
    %c0_i32_1 = arith.constant 0 : i32
    return %c0_i32, %c0_i32_0 : i32, i32
  }
  func.func @transform_3(%arg0: i32) -> (i32, i32) {
    %c0_i32 = arith.constant 0 : i32
    %c0_i32_0 = arith.constant 0 : i32
    %c0_i32_1 = arith.constant 0 : i32
    return %c0_i32, %c0_i32_0 : i32, i32
  }
  func.func @transform_4(%arg0: i32) -> (i32, i32, i32) {
    %c0_i32 = arith.constant 0 : i32
    %c0_i32_0 = arith.constant 0 : i32
    %c0_i32_1 = arith.constant 0 : i32
    %c0_i32_2 = arith.constant 0 : i32
    return %c0_i32, %c0_i32_0, %c0_i32_1 : i32, i32, i32
  }
  func.func @transform_5(%arg0: i32) -> (i32, i32) {
    %c0_i32 = arith.constant 0 : i32
    %c0_i32_0 = arith.constant 0 : i32
    %c0_i32_1 = arith.constant 0 : i32
    return %c0_i32, %c0_i32_0 : i32, i32
  }
  func.func @transform_6(%arg0: i32) -> (i32, i32) {
    %c0_i32 = arith.constant 0 : i32
    %c0_i32_0 = arith.constant 0 : i32
    %c0_i32_1 = arith.constant 0 : i32
    return %c0_i32, %c0_i32_0 : i32, i32
  }
  func.func @transform_7(%arg0: i32) -> (i32, i32, i32) {
    %c0_i32 = arith.constant 0 : i32
    %c0_i32_0 = arith.constant 0 : i32
    %c0_i32_1 = arith.constant 0 : i32
    return %arg0, %c0_i32, %c0_i32_0 : i32, i32, i32
  }
}

</mosaic_0001>

<llo_original>
// kernel: tpu_custom_call.1
$region0: #{tpu_custom_call.1}
  #allocation0 [shape = 'u32[]', space=smem, size = 0x4, offset = 0x4, fixed_abs, tag = 'smem constant byte address 0x4 - core index']
  #allocation1 [shape = 'u32[144,128]{1,0:T(1,128)}', space=vmem, size = 0x12000, scoped, tag = 'internal scratch']
  %s0 = inlined_call_operand.vmem [shape: f32[2,32,512], index: 0, kind: input, shape index: {}]
  %s1 = inlined_call_operand.vmem [shape: f32[2,32,2], index: 1, kind: input, shape index: {}]
  %s2 = inlined_call_operand.vmem [shape: f32[9,512], index: 2, kind: input, shape index: {}]
  %s3 = inlined_call_operand.vmem [shape: f32[72,32], index: 3, kind: input, shape index: {}]
  %s4 = inlined_call_operand.vmem [shape: f32[3,72,8], index: 4, kind: input, shape index: {}]
  %s5 = inlined_call_operand.vmem [shape: f32[9,8], index: 5, kind: input, shape index: {}]
  %s6 = inlined_call_operand.vmem [shape: f32[8,13], index: 6, kind: input, shape index: {}]
  %s7 = inlined_call_operand.hbm [shape: f32[2,1,512], index: 7, kind: output, shape index: {}]
  %s8 = sld [smem:[#allocation0]]
  $region61: #{tpu_custom_call.1} parent=0
    _
  %s10 = ssub.s32 1, %s8
  %s11 = scalar_select 0, %s10, %s8
  $region1: #{tpu_custom_call.1} parent=0
    #allocation2 [shape = 'u8[4096]{0}', space=vmem, size = 0x1000, scoped, tag = 'output window, operand 0']
    #allocation3 [shape = 's32[2]{0}', space=sflag, size = 0x8, scoped, tag = 'scoped memory for tpu_custom_call.1']
    %12 = vsyncpa [#allocation3], 0
    %s13 = scalar_lea.sflag [#allocation3], 1
    %14 = vsyncpa %s13, 0
    loop: start=0, step=1, limit=4
    $region2: #{tpu_custom_call.1} parent=1 // loop_pre_header
      _
    $region3: #{tpu_custom_call.1} parent=1 // loop_header
      %s16 = sphi 0, %s20
      %p17 = scmp.ge.s32.totalorder %s16, 4
      %s26 = sphi 0, %s28
      %s29 = sphi 0, %s26
      %s30 = sphi 0, %s29
      %s46 = sphi 0, %s30
      %s52 = sphi 0, %s54
      %s55 = sphi 0, %s52
      %s56 = sphi 0, %s55
      %s72 = sphi 0, %s56
      %s76 = sphi 0, %s76
      %s78 = sphi 0, %s76
      %s79 = sphi 0, %s78
      %s93 = sphi 0, %s79
      %s97 = sphi 0, %s97
      %s99 = sphi 0, %s97
      %s100 = sphi 0, %s99
      %s114 = sphi 0, %s100
      %s118 = sphi 0, %s118
      %s120 = sphi 0, %s118
      %s121 = sphi 0, %s120
      %s135 = sphi 0, %s121
      %s139 = sphi 0, %s139
      %s141 = sphi 0, %s139
      %s142 = sphi 0, %s141
      %s156 = sphi 0, %s142
      %s160 = sphi 0, %s160
      %s162 = sphi 0, %s160
      %s163 = sphi 0, %s162
      %s177 = sphi 0, %s163
      %s183 = sphi 0, %s185
      %s186 = sphi 0, %s183
      %s187 = sphi 0, %s186
      %s203 = sphi 0, %s187
    $region4: #{tpu_custom_call.1} parent=1 // loop_header_branch
      %19 = sbr.rel (%p17) target = $region8
    $region5: #{tpu_custom_call.1} parent=1 // loop_body
      %s21 = ssub.s32 %s16, 1
      %s22 = ssub.s32 %s16, 2
      %s23 = sadd.s32 %s16, 1
      %s24 = ssub.s32 %s16, %s23
      %p25 = scmp.eq.s32.totalorder %s24, 0
      %s27 = sadd.s32 %s26, 1
      %s28 = scalar_select %p25, %s26, %s27
      %p31 = pneg %p25
      %p32 = scmp.eq.s32.totalorder %s16, 1
      %p33 = por %p31, %p32
      %p34 = scmp.ne.s32.totalorder %s26, %s29
      %p35 = scmp.eq.s32.totalorder %s16, 0
      %p36 = por %p34, %p35
      %p37 = scmp.ne.s32.totalorder %s26, %s29
      %p38 = scmp.eq.s32.totalorder %s21, 1
      %p39 = por %p37, %p38
      %p40 = scmp.ne.s32.totalorder %s29, %s30
      %p41 = scmp.eq.s32.totalorder %s21, 0
      %p42 = por %p40, %p41
      %p43 = scmp.ne.s32.totalorder %s29, %s30
      %p44 = scmp.eq.s32.totalorder %s22, 1
      %p45 = por %p43, %p44
      %p47 = scmp.ne.s32.totalorder %s30, %s46
      %p48 = scmp.eq.s32.totalorder %s22, 0
      %p49 = por %p47, %p48
      %s50 = ssub.s32 %s16, %s23
      %p51 = scmp.eq.s32.totalorder %s50, 0
      %s53 = sadd.s32 %s52, 1
      %s54 = scalar_select %p51, %s52, %s53
      %p57 = pneg %p51
      %p58 = scmp.eq.s32.totalorder %s16, 1
      %p59 = por %p57, %p58
      %p60 = scmp.ne.s32.totalorder %s52, %s55
      %p61 = scmp.eq.s32.totalorder %s16, 0
      %p62 = por %p60, %p61
      %p63 = scmp.ne.s32.totalorder %s52, %s55
      %p64 = scmp.eq.s32.totalorder %s21, 1
      %p65 = por %p63, %p64
      %p66 = scmp.ne.s32.totalorder %s55, %s56
      %p67 = scmp.eq.s32.totalorder %s21, 0
      %p68 = por %p66, %p67
      %p69 = scmp.ne.s32.totalorder %s55, %s56
      %p70 = scmp.eq.s32.totalorder %s22, 1
      %p71 = por %p69, %p70
      %p73 = scmp.ne.s32.totalorder %s56, %s72
      %p74 = scmp.eq.s32.totalorder %s22, 0
      %p75 = por %p73, %p74
      %s77 = sadd.s32 %s76, 1
      %p80 = scmp.eq.s32.totalorder %s16, 1
      %p81 = scmp.ne.s32.totalorder %s76, %s78
      %p82 = scmp.eq.s32.totalorder %s16, 0
      %p83 = por %p81, %p82
      %p84 = scmp.ne.s32.totalorder %s76, %s78
      %p85 = scmp.eq.s32.totalorder %s21, 1
      %p86 = por %p84, %p85
      %p87 = scmp.ne.s32.totalorder %s78, %s79
      %p88 = scmp.eq.s32.totalorder %s21, 0
      %p89 = por %p87, %p88
      %p90 = scmp.ne.s32.totalorder %s78, %s79
      %p91 = scmp.eq.s32.totalorder %s22, 1
      %p92 = por %p90, %p91
      %p94 = scmp.ne.s32.totalorder %s79, %s93
      %p95 = scmp.eq.s32.totalorder %s22, 0
      %p96 = por %p94, %p95
      %s98 = sadd.s32 %s97, 1
      %p101 = scmp.eq.s32.totalorder %s16, 1
      %p102 = scmp.ne.s32.totalorder %s97, %s99
      %p103 = scmp.eq.s32.totalorder %s16, 0
      %p104 = por %p102, %p103
      %p105 = scmp.ne.s32.totalorder %s97, %s99
      %p106 = scmp.eq.s32.totalorder %s21, 1
      %p107 = por %p105, %p106
      %p108 = scmp.ne.s32.totalorder %s99, %s100
      %p109 = scmp.eq.s32.totalorder %s21, 0
      %p110 = por %p108, %p109
      %p111 = scmp.ne.s32.totalorder %s99, %s100
      %p112 = scmp.eq.s32.totalorder %s22, 1
      %p113 = por %p111, %p112
      %p115 = scmp.ne.s32.totalorder %s100, %s114
      %p116 = scmp.eq.s32.totalorder %s22, 0
      %p117 = por %p115, %p116
      %s119 = sadd.s32 %s118, 1
      %p122 = scmp.eq.s32.totalorder %s16, 1
      %p123 = scmp.ne.s32.totalorder %s118, %s120
      %p124 = scmp.eq.s32.totalorder %s16, 0
      %p125 = por %p123, %p124
      %p126 = scmp.ne.s32.totalorder %s118, %s120
      %p127 = scmp.eq.s32.totalorder %s21, 1
      %p128 = por %p126, %p127
      %p129 = scmp.ne.s32.totalorder %s120, %s121
      %p130 = scmp.eq.s32.totalorder %s21, 0
      %p131 = por %p129, %p130
      %p132 = scmp.ne.s32.totalorder %s120, %s121
      %p133 = scmp.eq.s32.totalorder %s22, 1
      %p134 = por %p132, %p133
      %p136 = scmp.ne.s32.totalorder %s121, %s135
      %p137 = scmp.eq.s32.totalorder %s22, 0
      %p138 = por %p136, %p137
      %s140 = sadd.s32 %s139, 1
      %p143 = scmp.eq.s32.totalorder %s16, 1
      %p144 = scmp.ne.s32.totalorder %s139, %s141
      %p145 = scmp.eq.s32.totalorder %s16, 0
      %p146 = por %p144, %p145
      %p147 = scmp.ne.s32.totalorder %s139, %s141
      %p148 = scmp.eq.s32.totalorder %s21, 1
      %p149 = por %p147, %p148
      %p150 = scmp.ne.s32.totalorder %s141, %s142
      %p151 = scmp.eq.s32.totalorder %s21, 0
      %p152 = por %p150, %p151
      %p153 = scmp.ne.s32.totalorder %s141, %s142
      %p154 = scmp.eq.s32.totalorder %s22, 1
      %p155 = por %p153, %p154
      %p157 = scmp.ne.s32.totalorder %s142, %s156
      %p158 = scmp.eq.s32.totalorder %s22, 0
      %p159 = por %p157, %p158
      %s161 = sadd.s32 %s160, 1
      %p164 = scmp.eq.s32.totalorder %s16, 1
      %p165 = scmp.ne.s32.totalorder %s160, %s162
      %p166 = scmp.eq.s32.totalorder %s16, 0
      %p167 = por %p165, %p166
      %p168 = scmp.ne.s32.totalorder %s160, %s162
      %p169 = scmp.eq.s32.totalorder %s21, 1
      %p170 = por %p168, %p169
      %p171 = scmp.ne.s32.totalorder %s162, %s163
      %p172 = scmp.eq.s32.totalorder %s21, 0
      %p173 = por %p171, %p172
      %p174 = scmp.ne.s32.totalorder %s162, %s163
      %p175 = scmp.eq.s32.totalorder %s22, 1
      %p176 = por %p174, %p175
      %p178 = scmp.ne.s32.totalorder %s163, %s177
      %p179 = scmp.eq.s32.totalorder %s22, 0
      %p180 = por %p178, %p179
      %s181 = ssub.s32 %s16, %s23
      %p182 = scmp.eq.s32.totalorder %s181, 0
      %s184 = sadd.s32 %s183, 1
      %s185 = scalar_select %p182, %s183, %s184
      %p188 = pneg %p182
      %p189 = scmp.eq.s32.totalorder %s16, 1
      %p190 = por %p188, %p189
      %p191 = scmp.ne.s32.totalorder %s183, %s186
      %p192 = scmp.eq.s32.totalorder %s16, 0
      %p193 = por %p191, %p192
      %p194 = scmp.ne.s32.totalorder %s183, %s186
      %p195 = scmp.eq.s32.totalorder %s21, 1
      %p196 = por %p194, %p195
      %p197 = scmp.ne.s32.totalorder %s186, %s187
      %p198 = scmp.eq.s32.totalorder %s21, 0
      %p199 = por %p197, %p198
      %p200 = scmp.ne.s32.totalorder %s186, %s187
      %p201 = scmp.eq.s32.totalorder %s22, 1
      %p202 = por %p200, %p201
      %p204 = scmp.ne.s32.totalorder %s187, %s203
      %p205 = scmp.eq.s32.totalorder %s22, 0
      %p206 = por %p204, %p205
      %p207 = scmp.le.s32.totalorder 1, %s16
      %p208 = scmp.lt.s32.totalorder %s16, 3
      %p209 = pnand %p207, %p208
      %p210 = pneg %p209
      // Predicated region
      $region9: #{tpu_custom_call.1} parent=5 // pred_check
        _
      $region10: #{tpu_custom_call.1} parent=5 // pred_check_branch
        %212 = sbr.rel (%p209) target = $region12
      $region11: #{tpu_custom_call.1} parent=5 // pred_region
        %s213 = ssub.s32 %s16, 1
        // Predicated region
        $region13: #{tpu_custom_call.1} parent=11 // pred_check
          %p214 = pneg %p89
        $region14: #{tpu_custom_call.1} parent=11 // pred_check_branch
          %216 = sbr.rel (%p214) target = $region16
        $region15: #{tpu_custom_call.1} parent=11 // pred_region
          _
        $region16: #{tpu_custom_call.1} parent=11 // pred_fallthru
          _
        // Predicated region
        $region17: #{tpu_custom_call.1} parent=11 // pred_check
          %p217 = pneg %p110
        $region18: #{tpu_custom_call.1} parent=11 // pred_check_branch
          %219 = sbr.rel (%p217) target = $region20
        $region19: #{tpu_custom_call.1} parent=11 // pred_region
          _
        $region20: #{tpu_custom_call.1} parent=11 // pred_fallthru
          _
        // Predicated region
        $region21: #{tpu_custom_call.1} parent=11 // pred_check
          %p220 = pneg %p131
        $region22: #{tpu_custom_call.1} parent=11 // pred_check_branch
          %222 = sbr.rel (%p220) target = $region24
        $region23: #{tpu_custom_call.1} parent=11 // pred_region
          _
        $region24: #{tpu_custom_call.1} parent=11 // pred_fallthru
          _
        // Predicated region
        $region25: #{tpu_custom_call.1} parent=11 // pred_check
          %p223 = pneg %p152
        $region26: #{tpu_custom_call.1} parent=11 // pred_check_branch
          %225 = sbr.rel (%p223) target = $region28
        $region27: #{tpu_custom_call.1} parent=11 // pred_region
          _
        $region28: #{tpu_custom_call.1} parent=11 // pred_fallthru
          _
        // Predicated region
        $region29: #{tpu_custom_call.1} parent=11 // pred_check
          %p226 = pneg %p173
        $region30: #{tpu_custom_call.1} parent=11 // pred_check_branch
          %228 = sbr.rel (%p226) target = $region32
        $region31: #{tpu_custom_call.1} parent=11 // pred_region
          _
        $region32: #{tpu_custom_call.1} parent=11 // pred_fallthru
          _
      $region12: #{tpu_custom_call.1} parent=5 // pred_fallthru
        _
      %p229 = scmp.lt.s32.totalorder %s16, 2
      // Predicated region
      $region33: #{tpu_custom_call.1} parent=5 // pred_check
        %p230 = pneg %p229
      $region34: #{tpu_custom_call.1} parent=5 // pred_check_branch
        %232 = sbr.rel (%p230) target = $region36
      $region35: #{tpu_custom_call.1} parent=5 // pred_region
        // Predicated region
        $region37: #{tpu_custom_call.1} parent=35 // pred_check
          %p233 = pneg %p36
        $region38: #{tpu_custom_call.1} parent=35 // pred_check_branch
          %235 = sbr.rel (%p233) target = $region40
        $region39: #{tpu_custom_call.1} parent=35 // pred_region
          %p236 = scmp.lt.s32.totalorder %s16, 1
          %s237 = scalar_select %p236, %s16, 1
          %s238 = smul.addr %s237, 16
          %s239 = smul.addr %s238, 8
          %s240 = scalar_lea.vmem %s0, %s239
        $region40: #{tpu_custom_call.1} parent=35 // pred_fallthru
          _
        // Predicated region
        $region41: #{tpu_custom_call.1} parent=35 // pred_check
          %p241 = pneg %p62
        $region42: #{tpu_custom_call.1} parent=35 // pred_check_branch
          %243 = sbr.rel (%p241) target = $region44
        $region43: #{tpu_custom_call.1} parent=35 // pred_region
          %p244 = scmp.lt.s32.totalorder %s16, 1
          %s245 = scalar_select %p244, %s16, 1
          %s246 = smul.addr %s245, 4
          %s247 = smul.addr %s246, 8
          %s248 = scalar_lea.vmem %s1, %s247
        $region44: #{tpu_custom_call.1} parent=35 // pred_fallthru
          _
      $region36: #{tpu_custom_call.1} parent=5 // pred_fallthru
        _
      %p249 = scmp.le.s32.totalorder 1, %s16
      %p250 = scmp.lt.s32.totalorder %s16, 3
      %p251 = pnand %p249, %p250
      %p252 = pneg %p251
      // Predicated region
      $region45: #{tpu_custom_call.1} parent=5 // pred_check
        _
      $region46: #{tpu_custom_call.1} parent=5 // pred_check_branch
        %254 = sbr.rel (%p251) target = $region48
      $region47: #{tpu_custom_call.1} parent=5 // pred_region
        %s255 = ssub.s32 %s16, 1
        %p256 = scmp.lt.s32.totalorder %s21, 1
        %s257 = scalar_select %p256, %s21, 1
        %s258 = smul.addr %s257, 16
        %s259 = smul.addr %s258, 8
        %s260 = scalar_lea.vmem %s0, %s259
        %p261 = pneg %p42
        %p262 = pneg %p39
        %p263 = scmp.lt.s32.totalorder %s21, 1
        %s264 = scalar_select %p263, %s21, 1
        %s265 = smul.addr %s264, 4
        %s266 = smul.addr %s265, 8
        %s267 = scalar_lea.vmem %s1, %s266
        %p268 = pneg %p68
        %p269 = pneg %p65
        %p270 = pneg %p89
        %p271 = pneg %p86
        %p272 = pneg %p110
        %p273 = pneg %p107
        %p274 = pneg %p131
        %p275 = pneg %p128
        %p276 = pneg %p152
        %p277 = pneg %p149
        %p278 = pneg %p173
        %p279 = pneg %p170
        %p280 = pneg %p199
        %p281 = pneg %p196
        %s282 = sand.u32 %s186, 1
        %s283 = scalar_lea.sflag [#allocation3], %s282
        %s284 = sand.u32 %s186, 1
        %s285 = smul.addr %s284, 4
        %s286 = scalar_lea.vmem [#allocation2], %s285
        %p287 = scmp.lt.s32.totalorder %s21, 1
        %s288 = scalar_select %p287, %s21, 1
        %s289 = smul.addr %s288, 16
        %s290 = smul.addr %s289, 8
        %s291 = scalar_lea.vmem %s0, %s290
        %p292 = scmp.lt.s32.totalorder %s21, 1
        %s293 = scalar_select %p292, %s21, 1
        %s294 = smul.addr %s293, 4
        %s295 = smul.addr %s294, 8
        %s296 = scalar_lea.vmem %s1, %s295
        %v297 = vld [vmem:[%s2] sm:$0xff]
        %v298 = vld [vmem:[%s2 + $0x8] sm:$0xff]
        %v299 = vld [vmem:[%s2 + $0x10] sm:$0xff]
        %v300 = vld [vmem:[%s2 + $0x18] sm:$0xff]
        %v301 = vld [vmem:[%s2 + $0x20] sm:$0x1]
        %v302 = vld [vmem:[%s2 + $0x28] sm:$0x1]
        %v303 = vld [vmem:[%s2 + $0x30] sm:$0x1]
        %v304 = vld [vmem:[%s2 + $0x38] sm:$0x1]
        %v305 = vlaneseq
        %v306 = vshrl.u32 %v305, 7
        %v307 = vsub.s32 0, %v306
        %v308 = vrot.slane %v297, %v307
        %v309 = vlaneseq
        %v310 = vshrl.u32 %v309, 7
        %v311 = vsub.s32 0, %v310
        %v312 = vrot.slane %v298, %v311
        %v313 = vlaneseq
        %v314 = vshrl.u32 %v313, 7
        %v315 = vsub.s32 0, %v314
        %v316 = vrot.slane %v299, %v315
        %v317 = vlaneseq
        %v318 = vshrl.u32 %v317, 7
        %v319 = vsub.s32 0, %v318
        %v320 = vrot.slane %v300, %v319
        %v321 = vlaneseq
        %v322 = vshrl.u32 %v321, 7
        %v323 = vsub.s32 1, %v322
        %v324 = vrot.slane %v297, %v323
        %v325 = vlaneseq
        %v326 = vshrl.u32 %v325, 7
        %v327 = vsub.s32 1, %v326
        %v328 = vrot.slane %v298, %v327
        %v329 = vlaneseq
        %v330 = vshrl.u32 %v329, 7
        %v331 = vsub.s32 1, %v330
        %v332 = vrot.slane %v299, %v331
        %v333 = vlaneseq
        %v334 = vshrl.u32 %v333, 7
        %v335 = vsub.s32 1, %v334
        %v336 = vrot.slane %v300, %v335
        %v337 = vlaneseq
        %v338 = vshrl.u32 %v337, 7
        %v339 = vsub.s32 2, %v338
        %v340 = vrot.slane %v297, %v339
        %v341 = vlaneseq
        %v342 = vshrl.u32 %v341, 7
        %v343 = vsub.s32 2, %v342
        %v344 = vrot.slane %v298, %v343
        %v345 = vlaneseq
        %v346 = vshrl.u32 %v345, 7
        %v347 = vsub.s32 2, %v346
        %v348 = vrot.slane %v299, %v347
        %v349 = vlaneseq
        %v350 = vshrl.u32 %v349, 7
        %v351 = vsub.s32 2, %v350
        %v352 = vrot.slane %v300, %v351
        %v353 = vlaneseq
        %v354 = vshrl.u32 %v353, 7
        %v355 = vsub.s32 3, %v354
        %v356 = vrot.slane %v297, %v355
        %v357 = vlaneseq
        %v358 = vshrl.u32 %v357, 7
        %v359 = vsub.s32 3, %v358
        %v360 = vrot.slane %v298, %v359
        %v361 = vlaneseq
        %v362 = vshrl.u32 %v361, 7
        %v363 = vsub.s32 3, %v362
        %v364 = vrot.slane %v299, %v363
        %v365 = vlaneseq
        %v366 = vshrl.u32 %v365, 7
        %v367 = vsub.s32 3, %v366
        %v368 = vrot.slane %v300, %v367
        %v369 = vlaneseq
        %v370 = vshrl.u32 %v369, 7
        %v371 = vsub.s32 5, %v370
        %v372 = vrot.slane %v297, %v371
        %v373 = vlaneseq
        %v374 = vshrl.u32 %v373, 7
        %v375 = vsub.s32 5, %v374
        %v376 = vrot.slane %v298, %v375
        %v377 = vlaneseq
        %v378 = vshrl.u32 %v377, 7
        %v379 = vsub.s32 5, %v378
        %v380 = vrot.slane %v299, %v379
        %v381 = vlaneseq
        %v382 = vshrl.u32 %v381, 7
        %v383 = vsub.s32 5, %v382
        %v384 = vrot.slane %v300, %v383
        %v385 = vlaneseq
        %v386 = vshrl.u32 %v385, 7
        %v387 = vsub.s32 6, %v386
        %v388 = vrot.slane %v297, %v387
        %v389 = vlaneseq
        %v390 = vshrl.u32 %v389, 7
        %v391 = vsub.s32 6, %v390
        %v392 = vrot.slane %v298, %v391
        %v393 = vlaneseq
        %v394 = vshrl.u32 %v393, 7
        %v395 = vsub.s32 6, %v394
        %v396 = vrot.slane %v299, %v395
        %v397 = vlaneseq
        %v398 = vshrl.u32 %v397, 7
        %v399 = vsub.s32 6, %v398
        %v400 = vrot.slane %v300, %v399
        %v401 = vlaneseq
        %v402 = vshrl.u32 %v401, 7
        %v403 = vsub.s32 7, %v402
        %v404 = vrot.slane %v297, %v403
        %v405 = vlaneseq
        %v406 = vshrl.u32 %v405, 7
        %v407 = vsub.s32 7, %v406
        %v408 = vrot.slane %v298, %v407
        %v409 = vlaneseq
        %v410 = vshrl.u32 %v409, 7
        %v411 = vsub.s32 7, %v410
        %v412 = vrot.slane %v299, %v411
        %v413 = vlaneseq
        %v414 = vshrl.u32 %v413, 7
        %v415 = vsub.s32 7, %v414
        %v416 = vrot.slane %v300, %v415
        %v417 = vlaneseq
        %v418 = vshrl.u32 %v417, 7
        %v419 = vsub.s32 0, %v418
        %v420 = vrot.slane %v301, %v419
        %v421 = vlaneseq
        %v422 = vshrl.u32 %v421, 7
        %v423 = vsub.s32 0, %v422
        %v424 = vrot.slane %v302, %v423
        %v425 = vlaneseq
        %v426 = vshrl.u32 %v425, 7
        %v427 = vsub.s32 0, %v426
        %v428 = vrot.slane %v303, %v427
        %v429 = vlaneseq
        %v430 = vshrl.u32 %v429, 7
        %v431 = vsub.s32 0, %v430
        %v432 = vrot.slane %v304, %v431
        %v433 = vld [vmem:[%s6] sm:$0xff]
        %v434 = vld [vmem:[%s291] sm:$0xff]
        %v435 = vld [vmem:[%s291 + $0x8] sm:$0xff]
        %v436 = vld [vmem:[%s291 + $0x10] sm:$0xff]
        %v437 = vld [vmem:[%s291 + $0x18] sm:$0xff]
        %v438 = vld [vmem:[%s291 + $0x20] sm:$0xff]
        %v439 = vld [vmem:[%s291 + $0x28] sm:$0xff]
        %v440 = vld [vmem:[%s291 + $0x30] sm:$0xff]
        %v441 = vld [vmem:[%s291 + $0x38] sm:$0xff]
        %v442 = vld [vmem:[%s291 + $0x40] sm:$0xff]
        %v443 = vld [vmem:[%s291 + $0x48] sm:$0xff]
        %v444 = vld [vmem:[%s291 + $0x50] sm:$0xff]
        %v445 = vld [vmem:[%s291 + $0x58] sm:$0xff]
        %v446 = vld [vmem:[%s291 + $0x60] sm:$0xff]
        %v447 = vld [vmem:[%s291 + $0x68] sm:$0xff]
        %v448 = vld [vmem:[%s291 + $0x70] sm:$0xff]
        %v449 = vld [vmem:[%s291 + $0x78] sm:$0xff]
        %v450 = vld [vmem:[%s296] sm:$0xff]
        %v451 = vld [vmem:[%s296 + $0x8] sm:$0xff]
        %v452 = vld [vmem:[%s296 + $0x10] sm:$0xff]
        %v453 = vld [vmem:[%s296 + $0x18] sm:$0xff]
        %455 = vset.pattern.permute.xlu0 0
        %456 = vperm.xlu0 %455, %v450
        %v457 = vpop.permute.xlu0 %456
        %460 = vset.pattern.permute.xlu0 0
        %461 = vperm.xlu0 %460, %v451
        %v462 = vpop.permute.xlu0 %461
        %465 = vset.pattern.permute.xlu0 0
        %466 = vperm.xlu0 %465, %v452
        %v467 = vpop.permute.xlu0 %466
        %470 = vset.pattern.permute.xlu0 0
        %471 = vperm.xlu0 %470, %v453
        %v472 = vpop.permute.xlu0 %471
        %v474 = vmul.f32 %v434, %v457
        %v475 = vmul.f32 %v435, %v457
        %v476 = vmul.f32 %v438, %v462
        %v477 = vmul.f32 %v439, %v462
        %v478 = vmul.f32 %v442, %v467
        %v479 = vmul.f32 %v443, %v467
        %v480 = vmul.f32 %v446, %v472
        %v481 = vmul.f32 %v447, %v472
        %v482 = vadd.f32 %v474, %v476
        %v483 = vadd.f32 %v482, %v478
        %v484 = vadd.f32 %v483, %v480
        %v485 = vrot.slane %v484, 4
        %v486 = vadd.f32 %v484, %v485
        %v487 = vrot.slane %v486, 2
        %v488 = vadd.f32 %v486, %v487
        %v489 = vrot.slane %v488, 1
        %v490 = vadd.f32 %v488, %v489
        %v491 = vadd.f32 %v475, %v477
        %v492 = vadd.f32 %v491, %v479
        %v493 = vadd.f32 %v492, %v481
        %v494 = vrot.slane %v493, 4
        %v495 = vadd.f32 %v493, %v494
        %v496 = vrot.slane %v495, 2
        %v497 = vadd.f32 %v495, %v496
        %v498 = vrot.slane %v497, 1
        %v499 = vadd.f32 %v497, %v498
        %500 = vset.pattern.permute.xlu0 1
        %501 = vperm.xlu0 %500, %v450
        %v502 = vpop.permute.xlu0 %501
        %504 = vset.pattern.permute.xlu0 1
        %505 = vperm.xlu0 %504, %v451
        %v506 = vpop.permute.xlu0 %505
        %508 = vset.pattern.permute.xlu0 1
        %509 = vperm.xlu0 %508, %v452
        %v510 = vpop.permute.xlu0 %509
        %512 = vset.pattern.permute.xlu0 1
        %513 = vperm.xlu0 %512, %v453
        %v514 = vpop.permute.xlu0 %513
        %v516 = vmul.f32 %v436, %v502
        %v517 = vmul.f32 %v437, %v502
        %v518 = vmul.f32 %v440, %v506
        %v519 = vmul.f32 %v441, %v506
        %v520 = vmul.f32 %v444, %v510
        %v521 = vmul.f32 %v445, %v510
        %v522 = vmul.f32 %v448, %v514
        %v523 = vmul.f32 %v449, %v514
        %v524 = vadd.f32 %v516, %v518
        %v525 = vadd.f32 %v524, %v520
        %v526 = vadd.f32 %v525, %v522
        %v527 = vrot.slane %v526, 4
        %v528 = vadd.f32 %v526, %v527
        %v529 = vrot.slane %v528, 2
        %v530 = vadd.f32 %v528, %v529
        %v531 = vrot.slane %v530, 1
        %v532 = vadd.f32 %v530, %v531
        %v533 = vadd.f32 %v517, %v519
        %v534 = vadd.f32 %v533, %v521
        %v535 = vadd.f32 %v534, %v523
        %v536 = vrot.slane %v535, 4
        %v537 = vadd.f32 %v535, %v536
        %v538 = vrot.slane %v537, 2
        %v539 = vadd.f32 %v537, %v538
        %v540 = vrot.slane %v539, 1
        %v541 = vadd.f32 %v539, %v540
        %v542 = vlaneseq
        %v543 = vshrl.u32 %v542, 7
        %v544 = vsub.s32 0, %v543
        %v545 = vrot.slane %v490, %v544
        %v546 = vlaneseq
        %v547 = vshrl.u32 %v546, 7
        %v548 = vsub.s32 0, %v547
        %v549 = vrot.slane %v499, %v548
        %v550 = vlaneseq
        %v551 = vshrl.u32 %v550, 7
        %v552 = vsub.s32 0, %v551
        %v553 = vrot.slane %v532, %v552
        %v554 = vlaneseq
        %v555 = vshrl.u32 %v554, 7
        %v556 = vsub.s32 0, %v555
        %v557 = vrot.slane %v541, %v556
        %v558 = vmul.f32 %v434, %v545
        %v559 = vmul.f32 %v435, %v549
        %v560 = vmul.f32 %v436, %v553
        %v561 = vmul.f32 %v437, %v557
        %v562 = vmul.f32 %v438, %v545
        %v563 = vmul.f32 %v439, %v549
        %v564 = vmul.f32 %v440, %v553
        %v565 = vmul.f32 %v441, %v557
        %v566 = vmul.f32 %v442, %v545
        %v567 = vmul.f32 %v443, %v549
        %v568 = vmul.f32 %v444, %v553
        %v569 = vmul.f32 %v445, %v557
        %v570 = vmul.f32 %v446, %v545
        %v571 = vmul.f32 %v447, %v549
        %v572 = vmul.f32 %v448, %v553
        %v573 = vmul.f32 %v449, %v557
        %v574 = vld [vmem:[%s3] sm:$0xff]
        %v575 = vld [vmem:[%s3 + $0x8] sm:$0xff]
        %v576 = vld [vmem:[%s3 + $0x10] sm:$0xff]
        %v577 = vld [vmem:[%s3 + $0x18] sm:$0xff]
        %v578 = vld [vmem:[%s3 + $0x20] sm:$0xff]
        %v579 = vld [vmem:[%s3 + $0x28] sm:$0xff]
        %v580 = vld [vmem:[%s3 + $0x30] sm:$0xff]
        %v581 = vld [vmem:[%s3 + $0x38] sm:$0xff]
        %v582 = vld [vmem:[%s3 + $0x40] sm:$0xff]
        %vm583 = vcmask 261120
        %v585 = vsel %vm583, %v574, 0
        %v588 = vsel %vm583, %v575, 0
        %v591 = vsel %vm583, %v576, 0
        %v594 = vsel %vm583, %v577, 0
        %v597 = vsel %vm583, %v578, 0
        %v600 = vsel %vm583, %v579, 0
        %v603 = vsel %vm583, %v580, 0
        %v606 = vsel %vm583, %v581, 0
        %v609 = vsel %vm583, %v582, 0
        %611 = vmatprep.subr.mxu0 %v559
        %612 = vmatpush1.msra.mxu0 %v558
        %613 = vmatprep.subr.mxu0 %v563
        %614 = vmatpush1.msra.mxu0 %v562
        %615 = vmatprep.subr.mxu0 %v567
        %616 = vmatpush1.msra.mxu0 %v566
        %617 = vmatprep.subr.mxu0 %v571
        %618 = vmatpush1.msra.mxu0 %v570
        %619 = vmatprep.subr.mxu0 0.0
        %620 = vmatpush1.msra.mxu0 0.0
        %621 = vmatprep.subr.mxu0 0.0
        %622 = vmatpush1.msra.mxu0 0.0
        %623 = vmatprep.subr.mxu0 0.0
        %624 = vmatpush1.msra.mxu0 0.0
        %625 = vmatprep.subr.mxu0 0.0
        %626 = vmatpush1.msra.mxu0 0.0
        %627 = vmatprep.subr.mxu0 0.0
        %628 = vmatpush1.msra.mxu0 0.0
        %629 = vmatprep.subr.mxu0 0.0
        %630 = vmatpush1.msra.mxu0 0.0
        %631 = vmatprep.subr.mxu0 0.0
        %632 = vmatpush1.msra.mxu0 0.0
        %633 = vmatprep.subr.mxu0 0.0
        %634 = vmatpush1.msra.mxu0 0.0
        %635 = vmatprep.subr.mxu0 0.0
        %636 = vmatpush1.msra.mxu0 0.0
        %637 = vmatprep.subr.mxu0 0.0
        %638 = vmatpush1.msra.mxu0 0.0
        %639 = vmatprep.subr.mxu0 0.0
        %640 = vmatpush1.msra.mxu0 0.0
        %641 = vmatprep.subr.mxu0 0.0
        %642 = vmatpush1.msra.mxu0 0.0
        %643 = vmatprep.subr.mxu0 0.0
        %644 = vmatpush1.msra.mxu0 0.0
        %645 = vmatprep.subr.mxu0 0.0
        %646 = vmatpush1.msra.mxu0 0.0
        %647 = vmatprep.subr.mxu0 0.0
        %648 = vmatpush1.msra.mxu0 0.0
        %649 = vmatprep.subr.mxu0 0.0
        %650 = vmatpush1.msra.mxu0 0.0
        %651 = vmatprep.subr.mxu0 0.0
        %652 = vmatpush1.msra.mxu0 0.0
        %653 = vmatprep.subr.mxu0 0.0
        %654 = vmatpush1.msra.mxu0 0.0
        %655 = vmatprep.subr.mxu0 0.0
        %656 = vmatpush1.msra.mxu0 0.0
        %657 = vmatprep.subr.mxu0 0.0
        %658 = vmatpush1.msra.mxu0 0.0
        %659 = vmatprep.subr.mxu0 0.0
        %660 = vmatpush1.msra.mxu0 0.0
        %661 = vmatprep.subr.mxu0 0.0
        %662 = vmatpush1.msra.mxu0 0.0
        %663 = vmatprep.subr.mxu0 0.0
        %664 = vmatpush1.msra.mxu0 0.0
        %665 = vmatprep.subr.mxu0 0.0
        %666 = vmatpush1.msra.mxu0 0.0
        %667 = vmatprep.subr.mxu0 0.0
        %668 = vmatpush1.msra.mxu0 0.0
        %669 = vmatprep.subr.mxu0 0.0
        %670 = vmatpush1.msra.mxu0 0.0
        %671 = vmatprep.subr.mxu0 0.0
        %672 = vmatpush1.msra.mxu0 0.0
        %673 = vmatprep.subr.mxu0 0.0
        %674 = vmatpush1.msra.mxu0 0.0
        %675 = vmatprep.mubr.f32.mxu0 0.0
        %676 = vmatmul.mubr.f32.gmra.mrb[0].mxu0 %v585
        %v677 = vpop.f32.mrb[0].mxu0
        %v678 = vadd.f32 0.0, %v677
        %v679 = vpop.f32.mrb[0].mxu0
        %v680 = vadd.f32 0.0, %v679
        %681 = vmatprep.mubr.f32.mxu0 0.0
        %682 = vmatmul.mubr.f32.gmra.mrb[0].mxu0 %v588
        %v683 = vpop.f32.mrb[0].mxu0
        %v684 = vadd.f32 0.0, %v683
        %v685 = vpop.f32.mrb[0].mxu0
        %v686 = vadd.f32 0.0, %v685
        %687 = vmatprep.mubr.f32.mxu0 0.0
        %688 = vmatmul.mubr.f32.gmra.mrb[0].mxu0 %v591
        %v689 = vpop.f32.mrb[0].mxu0
        %v690 = vadd.f32 0.0, %v689
        %v691 = vpop.f32.mrb[0].mxu0
        %v692 = vadd.f32 0.0, %v691
        %693 = vmatprep.mubr.f32.mxu0 0.0
        %694 = vmatmul.mubr.f32.gmra.mrb[0].mxu0 %v594
        %v695 = vpop.f32.mrb[0].mxu0
        %v696 = vadd.f32 0.0, %v695
        %v697 = vpop.f32.mrb[0].mxu0
        %v698 = vadd.f32 0.0, %v697
        %699 = vmatprep.mubr.f32.mxu0 0.0
        %700 = vmatmul.mubr.f32.gmra.mrb[0].mxu0 %v597
        %v701 = vpop.f32.mrb[0].mxu0
        %v702 = vadd.f32 0.0, %v701
        %v703 = vpop.f32.mrb[0].mxu0
        %v704 = vadd.f32 0.0, %v703
        %705 = vmatprep.mubr.f32.mxu0 0.0
        %706 = vmatmul.mubr.f32.gmra.mrb[0].mxu0 %v600
        %v707 = vpop.f32.mrb[0].mxu0
        %v708 = vadd.f32 0.0, %v707
        %v709 = vpop.f32.mrb[0].mxu0
        %v710 = vadd.f32 0.0, %v709
        %711 = vmatprep.mubr.f32.mxu0 0.0
        %712 = vmatmul.mubr.f32.gmra.mrb[0].mxu0 %v603
        %v713 = vpop.f32.mrb[0].mxu0
        %v714 = vadd.f32 0.0, %v713
        %v715 = vpop.f32.mrb[0].mxu0
        %v716 = vadd.f32 0.0, %v715
        %717 = vmatprep.mubr.f32.mxu0 0.0
        %718 = vmatmul.mubr.f32.gmra.mrb[0].mxu0 %v606
        %v719 = vpop.f32.mrb[0].mxu0
        %v720 = vadd.f32 0.0, %v719
        %v721 = vpop.f32.mrb[0].mxu0
        %v722 = vadd.f32 0.0, %v721
        %723 = vmatprep.mubr.f32.mxu0 0.0
        %724 = vmatmul.mubr.f32.gmra.mrb[0].mxu0 %v609
        %v725 = vpop.f32.mrb[0].mxu0
        %v726 = vadd.f32 0.0, %v725
        %v727 = vpop.f32.mrb[0].mxu0
        %v728 = vadd.f32 0.0, %v727
        %729 = vdwg.mxu0
        %730 = vmatprep.subr.mxu0 %v561
        %731 = vmatpush1.msra.mxu0 %v560
        %732 = vmatprep.subr.mxu0 %v565
        %733 = vmatpush1.msra.mxu0 %v564
        %734 = vmatprep.subr.mxu0 %v569
        %735 = vmatpush1.msra.mxu0 %v568
        %736 = vmatprep.subr.mxu0 %v573
        %737 = vmatpush1.msra.mxu0 %v572
        %738 = vmatprep.subr.mxu0 0.0
        %739 = vmatpush1.msra.mxu0 0.0
        %740 = vmatprep.subr.mxu0 0.0
        %741 = vmatpush1.msra.mxu0 0.0
        %742 = vmatprep.subr.mxu0 0.0
        %743 = vmatpush1.msra.mxu0 0.0
        %744 = vmatprep.subr.mxu0 0.0
        %745 = vmatpush1.msra.mxu0 0.0
        %746 = vmatprep.subr.mxu0 0.0
        %747 = vmatpush1.msra.mxu0 0.0
        %748 = vmatprep.subr.mxu0 0.0
        %749 = vmatpush1.msra.mxu0 0.0
        %750 = vmatprep.subr.mxu0 0.0
        %751 = vmatpush1.msra.mxu0 0.0
        %752 = vmatprep.subr.mxu0 0.0
        %753 = vmatpush1.msra.mxu0 0.0
        %754 = vmatprep.subr.mxu0 0.0
        %755 = vmatpush1.msra.mxu0 0.0
        %756 = vmatprep.subr.mxu0 0.0
        %757 = vmatpush1.msra.mxu0 0.0
        %758 = vmatprep.subr.mxu0 0.0
        %759 = vmatpush1.msra.mxu0 0.0
        %760 = vmatprep.subr.mxu0 0.0
        %761 = vmatpush1.msra.mxu0 0.0
        %762 = vmatprep.subr.mxu0 0.0
        %763 = vmatpush1.msra.mxu0 0.0
        %764 = vmatprep.subr.mxu0 0.0
        %765 = vmatpush1.msra.mxu0 0.0
        %766 = vmatprep.subr.mxu0 0.0
        %767 = vmatpush1.msra.mxu0 0.0
        %768 = vmatprep.subr.mxu0 0.0
        %769 = vmatpush1.msra.mxu0 0.0
        %770 = vmatprep.subr.mxu0 0.0
        %771 = vmatpush1.msra.mxu0 0.0
        %772 = vmatprep.subr.mxu0 0.0
        %773 = vmatpush1.msra.mxu0 0.0
        %774 = vmatprep.subr.mxu0 0.0
        %775 = vmatpush1.msra.mxu0 0.0
        %776 = vmatprep.subr.mxu0 0.0
        %777 = vmatpush1.msra.mxu0 0.0
        %778 = vmatprep.subr.mxu0 0.0
        %779 = vmatpush1.msra.mxu0 0.0
        %780 = vmatprep.subr.mxu0 0.0
        %781 = vmatpush1.msra.mxu0 0.0
        %782 = vmatprep.subr.mxu0 0.0
        %783 = vmatpush1.msra.mxu0 0.0
        %784 = vmatprep.subr.mxu0 0.0
        %785 = vmatpush1.msra.mxu0 0.0
        %786 = vmatprep.subr.mxu0 0.0
        %787 = vmatpush1.msra.mxu0 0.0
        %788 = vmatprep.subr.mxu0 0.0
        %789 = vmatpush1.msra.mxu0 0.0
        %790 = vmatprep.subr.mxu0 0.0
        %791 = vmatpush1.msra.mxu0 0.0
        %792 = vmatprep.subr.mxu0 0.0
        %793 = vmatpush1.msra.mxu0 0.0
        %794 = vmatprep.mubr.f32.mxu0 0.0
        %795 = vmatmul.mubr.f32.gmra.mrb[0].mxu0 %v585
        %v796 = vpop.f32.mrb[0].mxu0
        %v797 = vadd.f32 0.0, %v796
        %v798 = vpop.f32.mrb[0].mxu0
        %v799 = vadd.f32 0.0, %v798
        %800 = vmatprep.mubr.f32.mxu0 0.0
        %801 = vmatmul.mubr.f32.gmra.mrb[0].mxu0 %v588
        %v802 = vpop.f32.mrb[0].mxu0
        %v803 = vadd.f32 0.0, %v802
        %v804 = vpop.f32.mrb[0].mxu0
        %v805 = vadd.f32 0.0, %v804
        %806 = vmatprep.mubr.f32.mxu0 0.0
        %807 = vmatmul.mubr.f32.gmra.mrb[0].mxu0 %v591
        %v808 = vpop.f32.mrb[0].mxu0
        %v809 = vadd.f32 0.0, %v808
        %v810 = vpop.f32.mrb[0].mxu0
        %v811 = vadd.f32 0.0, %v810
        %812 = vmatprep.mubr.f32.mxu0 0.0
        %813 = vmatmul.mubr.f32.gmra.mrb[0].mxu0 %v594
        %v814 = vpop.f32.mrb[0].mxu0
        %v815 = vadd.f32 0.0, %v814
        %v816 = vpop.f32.mrb[0].mxu0
        %v817 = vadd.f32 0.0, %v816
        %818 = vmatprep.mubr.f32.mxu0 0.0
        %819 = vmatmul.mubr.f32.gmra.mrb[0].mxu0 %v597
        %v820 = vpop.f32.mrb[0].mxu0
        %v821 = vadd.f32 0.0, %v820
        %v822 = vpop.f32.mrb[0].mxu0
        %v823 = vadd.f32 0.0, %v822
        %824 = vmatprep.mubr.f32.mxu0 0.0
        %825 = vmatmul.mubr.f32.gmra.mrb[0].mxu0 %v600
        %v826 = vpop.f32.mrb[0].mxu0
        %v827 = vadd.f32 0.0, %v826
        %v828 = vpop.f32.mrb[0].mxu0
        %v829 = vadd.f32 0.0, %v828
        %830 = vmatprep.mubr.f32.mxu0 0.0
        %831 = vmatmul.mubr.f32.gmra.mrb[0].mxu0 %v603
        %v832 = vpop.f32.mrb[0].mxu0
        %v833 = vadd.f32 0.0, %v832
        %v834 = vpop.f32.mrb[0].mxu0
        %v835 = vadd.f32 0.0, %v834
        %836 = vmatprep.mubr.f32.mxu0 0.0
        %837 = vmatmul.mubr.f32.gmra.mrb[0].mxu0 %v606
        %v838 = vpop.f32.mrb[0].mxu0
        %v839 = vadd.f32 0.0, %v838
        %v840 = vpop.f32.mrb[0].mxu0
        %v841 = vadd.f32 0.0, %v840
        %842 = vmatprep.mubr.f32.mxu0 0.0
        %843 = vmatmul.mubr.f32.gmra.mrb[0].mxu0 %v609
        %v844 = vpop.f32.mrb[0].mxu0
        %v845 = vadd.f32 0.0, %v844
        %v846 = vpop.f32.mrb[0].mxu0
        %v847 = vadd.f32 0.0, %v846
        %848 = vdwg.mxu0
        %849 = vrot.lane.b32.xlu0 %v678, 17
        %v850 = vpop.permute.xlu0 %849
        %851 = vrot.lane.b32.xlu0 %v680, 17
        %v852 = vpop.permute.xlu0 %851
        %853 = vrot.lane.b32.xlu0 %v797, 17
        %v854 = vpop.permute.xlu0 %853
        %855 = vrot.lane.b32.xlu0 %v799, 17
        %v856 = vpop.permute.xlu0 %855
        %v857 = vlaneseq
        %v858 = vand.u32 %v857, 127
        %vm859 = vcmp.lt.s32.totalorder %v858, 17
        %v860 = vsel %vm859, %v854, %v856
        %v861 = vsel %vm859, %v852, %v854
        %v862 = vsel %vm859, %v850, %v852
        %v863 = vsel %vm859, %v856, %v850
        %v864 = vmul.f32 %v863, %v308
        %v865 = vmul.f32 %v862, %v312
        %v866 = vmul.f32 %v861, %v316
        %v867 = vmul.f32 %v860, %v320
        %v868 = vadd.f32 %v702, %v864
        %v869 = vadd.f32 %v704, %v865
        %v870 = vadd.f32 %v821, %v866
        %v871 = vadd.f32 %v823, %v867
        %872 = vrot.lane.b32.xlu0 %v684, 16
        %v873 = vpop.permute.xlu0 %872
        %874 = vrot.lane.b32.xlu0 %v686, 16
        %v875 = vpop.permute.xlu0 %874
        %876 = vrot.lane.b32.xlu0 %v803, 16
        %v877 = vpop.permute.xlu0 %876
        %878 = vrot.lane.b32.xlu0 %v805, 16
        %v879 = vpop.permute.xlu0 %878
        %vm880 = vcmp.lt.s32.totalorder %v858, 16
        %v881 = vsel %vm880, %v877, %v879
        %v882 = vsel %vm880, %v875, %v877
        %v883 = vsel %vm880, %v873, %v875
        %v884 = vsel %vm880, %v879, %v873
        %v885 = vmul.f32 %v884, %v324
        %v886 = vmul.f32 %v883, %v328
        %v887 = vmul.f32 %v882, %v332
        %v888 = vmul.f32 %v881, %v336
        %v889 = vadd.f32 %v868, %v885
        %v890 = vadd.f32 %v869, %v886
        %v891 = vadd.f32 %v870, %v887
        %v892 = vadd.f32 %v871, %v888
        %893 = vrot.lane.b32.xlu0 %v690, 15
        %v894 = vpop.permute.xlu0 %893
        %895 = vrot.lane.b32.xlu0 %v692, 15
        %v896 = vpop.permute.xlu0 %895
        %897 = vrot.lane.b32.xlu0 %v809, 15
        %v898 = vpop.permute.xlu0 %897
        %899 = vrot.lane.b32.xlu0 %v811, 15
        %v900 = vpop.permute.xlu0 %899
        %vm901 = vcmp.lt.s32.totalorder %v858, 15
        %v902 = vsel %vm901, %v898, %v900
        %v903 = vsel %vm901, %v896, %v898
        %v904 = vsel %vm901, %v894, %v896
        %v905 = vsel %vm901, %v900, %v894
        %v906 = vmul.f32 %v905, %v340
        %v907 = vmul.f32 %v904, %v344
        %v908 = vmul.f32 %v903, %v348
        %v909 = vmul.f32 %v902, %v352
        %v910 = vadd.f32 %v889, %v906
        %v911 = vadd.f32 %v890, %v907
        %v912 = vadd.f32 %v891, %v908
        %v913 = vadd.f32 %v892, %v909
        %914 = vrot.lane.b32.xlu0 %v696, 1
        %v915 = vpop.permute.xlu0 %914
        %916 = vrot.lane.b32.xlu0 %v698, 1
        %v917 = vpop.permute.xlu0 %916
        %918 = vrot.lane.b32.xlu0 %v815, 1
        %v919 = vpop.permute.xlu0 %918
        %920 = vrot.lane.b32.xlu0 %v817, 1
        %v921 = vpop.permute.xlu0 %920
        %vm922 = vcmp.lt.s32.totalorder %v858, 1
        %v923 = vsel %vm922, %v919, %v921
        %v924 = vsel %vm922, %v917, %v919
        %v925 = vsel %vm922, %v915, %v917
        %v926 = vsel %vm922, %v921, %v915
        %v927 = vmul.f32 %v926, %v356
        %v928 = vmul.f32 %v925, %v360
        %v929 = vmul.f32 %v924, %v364
        %v930 = vmul.f32 %v923, %v368
        %v931 = vadd.f32 %v910, %v927
        %v932 = vadd.f32 %v911, %v928
        %v933 = vadd.f32 %v912, %v929
        %v934 = vadd.f32 %v913, %v930
        %935 = vrot.lane.b32.xlu0 %v708, 127
        %v936 = vpop.permute.xlu0 %935
        %937 = vrot.lane.b32.xlu0 %v710, 127
        %v938 = vpop.permute.xlu0 %937
        %939 = vrot.lane.b32.xlu0 %v827, 127
        %v940 = vpop.permute.xlu0 %939
        %941 = vrot.lane.b32.xlu0 %v829, 127
        %v942 = vpop.permute.xlu0 %941
        %vm943 = vcmp.lt.s32.totalorder %v858, 127
        %v944 = vsel %vm943, %v940, %v942
        %v945 = vsel %vm943, %v938, %v940
        %v946 = vsel %vm943, %v936, %v938
        %v947 = vsel %vm943, %v942, %v936
        %v948 = vmul.f32 %v946, %v372
        %v949 = vmul.f32 %v945, %v376
        %v950 = vmul.f32 %v944, %v380
        %v951 = vmul.f32 %v947, %v384
        %v952 = vadd.f32 %v931, %v948
        %v953 = vadd.f32 %v932, %v949
        %v954 = vadd.f32 %v933, %v950
        %v955 = vadd.f32 %v934, %v951
        %956 = vrot.lane.b32.xlu0 %v714, 113
        %v957 = vpop.permute.xlu0 %956
        %958 = vrot.lane.b32.xlu0 %v716, 113
        %v959 = vpop.permute.xlu0 %958
        %960 = vrot.lane.b32.xlu0 %v833, 113
        %v961 = vpop.permute.xlu0 %960
        %962 = vrot.lane.b32.xlu0 %v835, 113
        %v963 = vpop.permute.xlu0 %962
        %vm964 = vcmp.lt.s32.totalorder %v858, 113
        %v965 = vsel %vm964, %v961, %v963
        %v966 = vsel %vm964, %v959, %v961
        %v967 = vsel %vm964, %v957, %v959
        %v968 = vsel %vm964, %v963, %v957
        %v969 = vmul.f32 %v967, %v388
        %v970 = vmul.f32 %v966, %v392
        %v971 = vmul.f32 %v965, %v396
        %v972 = vmul.f32 %v968, %v400
        %v973 = vadd.f32 %v952, %v969
        %v974 = vadd.f32 %v953, %v970
        %v975 = vadd.f32 %v954, %v971
        %v976 = vadd.f32 %v955, %v972
        %977 = vrot.lane.b32.xlu0 %v720, 112
        %v978 = vpop.permute.xlu0 %977
        %979 = vrot.lane.b32.xlu0 %v722, 112
        %v980 = vpop.permute.xlu0 %979
        %981 = vrot.lane.b32.xlu0 %v839, 112
        %v982 = vpop.permute.xlu0 %981
        %983 = vrot.lane.b32.xlu0 %v841, 112
        %v984 = vpop.permute.xlu0 %983
        %vm985 = vcmp.lt.s32.totalorder %v858, 112
        %v986 = vsel %vm985, %v982, %v984
        %v987 = vsel %vm985, %v980, %v982
        %v988 = vsel %vm985, %v978, %v980
        %v989 = vsel %vm985, %v984, %v978
        %v990 = vmul.f32 %v988, %v404
        %v991 = vmul.f32 %v987, %v408
        %v992 = vmul.f32 %v986, %v412
        %v993 = vmul.f32 %v989, %v416
        %v994 = vadd.f32 %v973, %v990
        %v995 = vadd.f32 %v974, %v991
        %v996 = vadd.f32 %v975, %v992
        %v997 = vadd.f32 %v976, %v993
        %998 = vrot.lane.b32.xlu0 %v726, 111
        %v999 = vpop.permute.xlu0 %998
        %1000 = vrot.lane.b32.xlu0 %v728, 111
        %v1001 = vpop.permute.xlu0 %1000
        %1002 = vrot.lane.b32.xlu0 %v845, 111
        %v1003 = vpop.permute.xlu0 %1002
        %1004 = vrot.lane.b32.xlu0 %v847, 111
        %v1005 = vpop.permute.xlu0 %1004
        %vm1006 = vcmp.lt.s32.totalorder %v858, 111
        %v1007 = vsel %vm1006, %v1003, %v1005
        %v1008 = vsel %vm1006, %v1001, %v1003
        %v1009 = vsel %vm1006, %v999, %v1001
        %v1010 = vsel %vm1006, %v1005, %v999
        %v1011 = vmul.f32 %v1009, %v420
        %v1012 = vmul.f32 %v1008, %v424
        %v1013 = vmul.f32 %v1007, %v428
        %v1014 = vmul.f32 %v1010, %v432
        %v1015 = vadd.f32 %v994, %v1011
        %v1016 = vadd.f32 %v995, %v1012
        %v1017 = vadd.f32 %v996, %v1013
        %v1018 = vadd.f32 %v997, %v1014
        %1020 = vset.pattern.permute.xlu0 0
        %1021 = vperm.xlu0 %1020, %v433
        %v1022 = vpop.permute.xlu0 %1021
        %v1024 = vadd.f32 %v1015, %v1022
        %v1025 = vadd.f32 %v1016, %v1022
        %v1026 = vadd.f32 %v1017, %v1022
        %v1027 = vadd.f32 %v1018, %v1022
        %v1028 = vrot.slane %v1024, 4
        %v1029 = vadd.f32 %v1024, %v1028
        %v1030 = vrot.slane %v1029, 2
        %v1031 = vadd.f32 %v1029, %v1030
        %v1032 = vrot.slane %v1031, 1
        %v1033 = vadd.f32 %v1031, %v1032
        %v1034 = vrot.slane %v1025, 4
        %v1035 = vadd.f32 %v1025, %v1034
        %v1036 = vrot.slane %v1035, 2
        %v1037 = vadd.f32 %v1035, %v1036
        %v1038 = vrot.slane %v1037, 1
        %v1039 = vadd.f32 %v1037, %v1038
        %v1040 = vrot.slane %v1026, 4
        %v1041 = vadd.f32 %v1026, %v1040
        %v1042 = vrot.slane %v1041, 2
        %v1043 = vadd.f32 %v1041, %v1042
        %v1044 = vrot.slane %v1043, 1
        %v1045 = vadd.f32 %v1043, %v1044
        %v1046 = vrot.slane %v1027, 4
        %v1047 = vadd.f32 %v1027, %v1046
        %v1048 = vrot.slane %v1047, 2
        %v1049 = vadd.f32 %v1047, %v1048
        %v1050 = vrot.slane %v1049, 1
        %v1051 = vadd.f32 %v1049, %v1050
        %v1052 = vmul.f32 %v1024, %v1024
        %v1053 = vmul.f32 %v1025, %v1025
        %v1054 = vmul.f32 %v1026, %v1026
        %v1055 = vmul.f32 %v1027, %v1027
        %v1056 = vrot.slane %v1052, 4
        %v1057 = vadd.f32 %v1052, %v1056
        %v1058 = vrot.slane %v1057, 2
        %v1059 = vadd.f32 %v1057, %v1058
        %v1060 = vrot.slane %v1059, 1
        %v1061 = vadd.f32 %v1059, %v1060
        %v1062 = vrot.slane %v1053, 4
        %v1063 = vadd.f32 %v1053, %v1062
        %v1064 = vrot.slane %v1063, 2
        %v1065 = vadd.f32 %v1063, %v1064
        %v1066 = vrot.slane %v1065, 1
        %v1067 = vadd.f32 %v1065, %v1066
        %v1068 = vrot.slane %v1054, 4
        %v1069 = vadd.f32 %v1054, %v1068
        %v1070 = vrot.slane %v1069, 2
        %v1071 = vadd.f32 %v1069, %v1070
        %v1072 = vrot.slane %v1071, 1
        %v1073 = vadd.f32 %v1071, %v1072
        %v1074 = vrot.slane %v1055, 4
        %v1075 = vadd.f32 %v1055, %v1074
        %v1076 = vrot.slane %v1075, 2
        %v1077 = vadd.f32 %v1075, %v1076
        %v1078 = vrot.slane %v1077, 1
        %v1079 = vadd.f32 %v1077, %v1078
        %vm1080 = vcmask 1040384
        %v1081 = vsel %vm1080, %v1033, 0.0
        %v1082 = vsel %vm1080, %v1039, 0.0
        %v1083 = vadd.f32 %v1081, %v1082
        %1084 = vadd.xlane.f32.xlu0 %v1083
        %v1085 = vpop.xlane.xlu0 %1084
        %v1086 = vrot.slane %v1085, 4
        %v1087 = vadd.f32 %v1085, %v1086
        %v1088 = vrot.slane %v1087, 2
        %v1089 = vadd.f32 %v1087, %v1088
        %v1090 = vrot.slane %v1089, 1
        %v1091 = vadd.f32 %v1089, %v1090
        %s1092 = vtos %v1091
        %s1093 = smul.f32 %s1092, 0.00048828125
        %v1094 = vsel %vm1080, %v1061, 0.0
        %v1095 = vsel %vm1080, %v1067, 0.0
        %v1096 = vadd.f32 %v1094, %v1095
        %1097 = vadd.xlane.f32.xlu0 %v1096
        %v1098 = vpop.xlane.xlu0 %1097
        %v1099 = vrot.slane %v1098, 4
        %v1100 = vadd.f32 %v1098, %v1099
        %v1101 = vrot.slane %v1100, 2
        %v1102 = vadd.f32 %v1100, %v1101
        %v1103 = vrot.slane %v1102, 1
        %v1104 = vadd.f32 %v1102, %v1103
        %s1105 = vtos %v1104
        %s1106 = smul.f32 %s1105, 0.00048828125
        %s1107 = smul.f32 %s1093, %s1093
        %s1108 = ssub.f32 %s1106, %s1107
        %s1109 = sadd.f32 %s1108, 1e-05
        %v1110 = vstv %s1109
        %v1111 = vrsqrt.pop %v1110
        %s1112 = vtos %v1111
        %v1113 = vstv %s1093
        %v1114 = vstv %s1112
        %v1115 = vsel %vm1080, %v1045, 0.0
        %v1116 = vsel %vm1080, %v1051, 0.0
        %v1117 = vadd.f32 %v1115, %v1116
        %1118 = vadd.xlane.f32.xlu0 %v1117
        %v1119 = vpop.xlane.xlu0 %1118
        %v1120 = vrot.slane %v1119, 4
        %v1121 = vadd.f32 %v1119, %v1120
        %v1122 = vrot.slane %v1121, 2
        %v1123 = vadd.f32 %v1121, %v1122
        %v1124 = vrot.slane %v1123, 1
        %v1125 = vadd.f32 %v1123, %v1124
        %s1126 = vtos %v1125
        %s1127 = smul.f32 %s1126, 0.00048828125
        %v1128 = vsel %vm1080, %v1073, 0.0
        %v1129 = vsel %vm1080, %v1079, 0.0
        %v1130 = vadd.f32 %v1128, %v1129
        %1131 = vadd.xlane.f32.xlu0 %v1130
        %v1132 = vpop.xlane.xlu0 %1131
        %v1133 = vrot.slane %v1132, 4
        %v1134 = vadd.f32 %v1132, %v1133
        %v1135 = vrot.slane %v1134, 2
        %v1136 = vadd.f32 %v1134, %v1135
        %v1137 = vrot.slane %v1136, 1
        %v1138 = vadd.f32 %v1136, %v1137
        %s1139 = vtos %v1138
        %s1140 = smul.f32 %s1139, 0.00048828125
        %s1141 = smul.f32 %s1127, %s1127
        %s1142 = ssub.f32 %s1140, %s1141
        %s1143 = sadd.f32 %s1142, 1e-05
        %v1144 = vstv %s1143
        %v1145 = vrsqrt.pop %v1144
        %s1146 = vtos %v1145
        %v1147 = vstv %s1127
        %v1148 = vstv %s1146
        %v1149 = vlaneseq
        %v1150 = vshrl.u32 %v1149, 7
        %v1151 = vsub.s32 0, %v1150
        %v1152 = vlaneseq
        %v1153 = vshrl.u32 %v1152, 7
        %v1154 = vsub.s32 0, %v1153
        %v1155 = vsub.f32 %v1024, %v1113
        %v1156 = vsub.f32 %v1025, %v1113
        %v1157 = vsub.f32 %v1026, %v1147
        %v1158 = vsub.f32 %v1027, %v1147
        %v1159 = vlaneseq
        %v1160 = vshrl.u32 %v1159, 7
        %v1161 = vsub.s32 0, %v1160
        %v1162 = vlaneseq
        %v1163 = vshrl.u32 %v1162, 7
        %v1164 = vsub.s32 0, %v1163
        %v1165 = vmul.f32 %v1155, %v1114
        %v1166 = vmul.f32 %v1156, %v1114
        %v1167 = vmul.f32 %v1157, %v1148
        %v1168 = vmul.f32 %v1158, %v1148
        %1169 = vset.pattern.permute.xlu0 4
        %1170 = vperm.xlu0 %1169, %v433
        %v1171 = vpop.permute.xlu0 %1170
        %v1173 = vmul.f32 %v1165, %v1171
        %v1174 = vmul.f32 %v1166, %v1171
        %v1175 = vmul.f32 %v1167, %v1171
        %v1176 = vmul.f32 %v1168, %v1171
        %1177 = vset.pattern.permute.xlu0 8
        %1178 = vperm.xlu0 %1177, %v433
        %v1179 = vpop.permute.xlu0 %1178
        %v1181 = vadd.f32 %v1173, %v1179
        %v1182 = vadd.f32 %v1174, %v1179
        %v1183 = vadd.f32 %v1175, %v1179
        %v1184 = vadd.f32 %v1176, %v1179
        %v1185 = vmax.f32 %v1181, 0.0
        %v1186 = vmax.f32 %v1182, 0.0
        %v1187 = vmax.f32 %v1183, 0.0
        %v1188 = vmax.f32 %v1184, 0.0
        %v1189 = vld [vmem:[%s4] sm:$0xff]
        %v1190 = vld [vmem:[%s4 + $0x8] sm:$0xff]
        %v1191 = vld [vmem:[%s4 + $0x10] sm:$0xff]
        %v1192 = vld [vmem:[%s4 + $0x18] sm:$0xff]
        %v1193 = vld [vmem:[%s4 + $0x20] sm:$0xff]
        %v1194 = vld [vmem:[%s4 + $0x28] sm:$0xff]
        %v1195 = vld [vmem:[%s4 + $0x30] sm:$0xff]
        %v1196 = vld [vmem:[%s4 + $0x38] sm:$0xff]
        %v1197 = vld [vmem:[%s4 + $0x40] sm:$0xff]
        %vm1198 = vcmask 64512
        %v1200 = vsel %vm1198, %v1189, 0
        %v1203 = vsel %vm1198, %v1190, 0
        %v1206 = vsel %vm1198, %v1191, 0
        %v1209 = vsel %vm1198, %v1192, 0
        %v1212 = vsel %vm1198, %v1193, 0
        %v1215 = vsel %vm1198, %v1194, 0
        %v1218 = vsel %vm1198, %v1195, 0
        %v1221 = vsel %vm1198, %v1196, 0
        %v1224 = vsel %vm1198, %v1197, 0
        %1226 = vmatprep.subr.mxu0 %v1186
        %1227 = vmatpush1.msra.mxu0 %v1185
        %1228 = vmatprep.subr.mxu0 0.0
        %1229 = vmatpush1.msra.mxu0 0.0
        %1230 = vmatprep.subr.mxu0 0.0
        %1231 = vmatpush1.msra.mxu0 0.0
        %1232 = vmatprep.subr.mxu0 0.0
        %1233 = vmatpush1.msra.mxu0 0.0
        %1234 = vmatprep.subr.mxu0 0.0
        %1235 = vmatpush1.msra.mxu0 0.0
        %1236 = vmatprep.subr.mxu0 0.0
        %1237 = vmatpush1.msra.mxu0 0.0
        %1238 = vmatprep.subr.mxu0 0.0
        %1239 = vmatpush1.msra.mxu0 0.0
        %1240 = vmatprep.subr.mxu0 0.0
        %1241 = vmatpush1.msra.mxu0 0.0
        %1242 = vmatprep.subr.mxu0 0.0
        %1243 = vmatpush1.msra.mxu0 0.0
        %1244 = vmatprep.subr.mxu0 0.0
        %1245 = vmatpush1.msra.mxu0 0.0
        %1246 = vmatprep.subr.mxu0 0.0
        %1247 = vmatpush1.msra.mxu0 0.0
        %1248 = vmatprep.subr.mxu0 0.0
        %1249 = vmatpush1.msra.mxu0 0.0
        %1250 = vmatprep.subr.mxu0 0.0
        %1251 = vmatpush1.msra.mxu0 0.0
        %1252 = vmatprep.subr.mxu0 0.0
        %1253 = vmatpush1.msra.mxu0 0.0
        %1254 = vmatprep.subr.mxu0 0.0
        %1255 = vmatpush1.msra.mxu0 0.0
        %1256 = vmatprep.subr.mxu0 0.0
        %1257 = vmatpush1.msra.mxu0 0.0
        %1258 = vmatprep.subr.mxu0 0.0
        %1259 = vmatpush1.msra.mxu0 0.0
        %1260 = vmatprep.subr.mxu0 0.0
        %1261 = vmatpush1.msra.mxu0 0.0
        %1262 = vmatprep.subr.mxu0 0.0
        %1263 = vmatpush1.msra.mxu0 0.0
        %1264 = vmatprep.subr.mxu0 0.0
        %1265 = vmatpush1.msra.mxu0 0.0
        %1266 = vmatprep.subr.mxu0 0.0
        %1267 = vmatpush1.msra.mxu0 0.0
        %1268 = vmatprep.subr.mxu0 0.0
        %1269 = vmatpush1.msra.mxu0 0.0
        %1270 = vmatprep.subr.mxu0 0.0
        %1271 = vmatpush1.msra.mxu0 0.0
        %1272 = vmatprep.subr.mxu0 0.0
        %1273 = vmatpush1.msra.mxu0 0.0
        %1274 = vmatprep.subr.mxu0 0.0
        %1275 = vmatpush1.msra.mxu0 0.0
        %1276 = vmatprep.subr.mxu0 0.0
        %1277 = vmatpush1.msra.mxu0 0.0
        %1278 = vmatprep.subr.mxu0 0.0
        %1279 = vmatpush1.msra.mxu0 0.0
        %1280 = vmatprep.subr.mxu0 0.0
        %1281 = vmatpush1.msra.mxu0 0.0
        %1282 = vmatprep.subr.mxu0 0.0
        %1283 = vmatpush1.msra.mxu0 0.0
        %1284 = vmatprep.subr.mxu0 0.0
        %1285 = vmatpush1.msra.mxu0 0.0
        %1286 = vmatprep.subr.mxu0 0.0
        %1287 = vmatpush1.msra.mxu0 0.0
        %1288 = vmatprep.subr.mxu0 0.0
        %1289 = vmatpush1.msra.mxu0 0.0
        %1290 = vmatprep.mubr.f32.mxu0 0.0
        %1291 = vmatmul.mubr.f32.gmra.mrb[0].mxu0 %v1200
        %v1292 = vpop.f32.mrb[0].mxu0
        %v1293 = vadd.f32 0.0, %v1292
        %v1294 = vpop.f32.mrb[0].mxu0
        %v1295 = vadd.f32 0.0, %v1294
        %1296 = vmatprep.mubr.f32.mxu0 0.0
        %1297 = vmatmul.mubr.f32.gmra.mrb[0].mxu0 %v1203
        %v1298 = vpop.f32.mrb[0].mxu0
        %v1299 = vadd.f32 0.0, %v1298
        %v1300 = vpop.f32.mrb[0].mxu0
        %v1301 = vadd.f32 0.0, %v1300
        %1302 = vmatprep.mubr.f32.mxu0 0.0
        %1303 = vmatmul.mubr.f32.gmra.mrb[0].mxu0 %v1206
        %v1304 = vpop.f32.mrb[0].mxu0
        %v1305 = vadd.f32 0.0, %v1304
        %v1306 = vpop.f32.mrb[0].mxu0
        %v1307 = vadd.f32 0.0, %v1306
        %1308 = vmatprep.mubr.f32.mxu0 0.0
        %1309 = vmatmul.mubr.f32.gmra.mrb[0].mxu0 %v1209
        %v1310 = vpop.f32.mrb[0].mxu0
        %v1311 = vadd.f32 0.0, %v1310
        %v1312 = vpop.f32.mrb[0].mxu0
        %v1313 = vadd.f32 0.0, %v1312
        %1314 = vmatprep.mubr.f32.mxu0 0.0
        %1315 = vmatmul.mubr.f32.gmra.mrb[0].mxu0 %v1212
        %v1316 = vpop.f32.mrb[0].mxu0
        %v1317 = vadd.f32 0.0, %v1316
        %v1318 = vpop.f32.mrb[0].mxu0
        %v1319 = vadd.f32 0.0, %v1318
        %1320 = vmatprep.mubr.f32.mxu0 0.0
        %1321 = vmatmul.mubr.f32.gmra.mrb[0].mxu0 %v1215
        %v1322 = vpop.f32.mrb[0].mxu0
        %v1323 = vadd.f32 0.0, %v1322
        %v1324 = vpop.f32.mrb[0].mxu0
        %v1325 = vadd.f32 0.0, %v1324
        %1326 = vmatprep.mubr.f32.mxu0 0.0
        %1327 = vmatmul.mubr.f32.gmra.mrb[0].mxu0 %v1218
        %v1328 = vpop.f32.mrb[0].mxu0
        %v1329 = vadd.f32 0.0, %v1328
        %v1330 = vpop.f32.mrb[0].mxu0
        %v1331 = vadd.f32 0.0, %v1330
        %1332 = vmatprep.mubr.f32.mxu0 0.0
        %1333 = vmatmul.mubr.f32.gmra.mrb[0].mxu0 %v1221
        %v1334 = vpop.f32.mrb[0].mxu0
        %v1335 = vadd.f32 0.0, %v1334
        %v1336 = vpop.f32.mrb[0].mxu0
        %v1337 = vadd.f32 0.0, %v1336
        %1338 = vmatprep.mubr.f32.mxu0 0.0
        %1339 = vmatmul.mubr.f32.gmra.mrb[0].mxu0 %v1224
        %v1340 = vpop.f32.mrb[0].mxu0
        %v1341 = vadd.f32 0.0, %v1340
        %v1342 = vpop.f32.mrb[0].mxu0
        %v1343 = vadd.f32 0.0, %v1342
        %1344 = vdwg.mxu0
        %1345 = vmatprep.subr.mxu0 %v1188
        %1346 = vmatpush1.msra.mxu0 %v1187
        %1347 = vmatprep.subr.mxu0 0.0
        %1348 = vmatpush1.msra.mxu0 0.0
        %1349 = vmatprep.subr.mxu0 0.0
        %1350 = vmatpush1.msra.mxu0 0.0
        %1351 = vmatprep.subr.mxu0 0.0
        %1352 = vmatpush1.msra.mxu0 0.0
        %1353 = vmatprep.subr.mxu0 0.0
        %1354 = vmatpush1.msra.mxu0 0.0
        %1355 = vmatprep.subr.mxu0 0.0
        %1356 = vmatpush1.msra.mxu0 0.0
        %1357 = vmatprep.subr.mxu0 0.0
        %1358 = vmatpush1.msra.mxu0 0.0
        %1359 = vmatprep.subr.mxu0 0.0
        %1360 = vmatpush1.msra.mxu0 0.0
        %1361 = vmatprep.subr.mxu0 0.0
        %1362 = vmatpush1.msra.mxu0 0.0
        %1363 = vmatprep.subr.mxu0 0.0
        %1364 = vmatpush1.msra.mxu0 0.0
        %1365 = vmatprep.subr.mxu0 0.0
        %1366 = vmatpush1.msra.mxu0 0.0
        %1367 = vmatprep.subr.mxu0 0.0
        %1368 = vmatpush1.msra.mxu0 0.0
        %1369 = vmatprep.subr.mxu0 0.0
        %1370 = vmatpush1.msra.mxu0 0.0
        %1371 = vmatprep.subr.mxu0 0.0
        %1372 = vmatpush1.msra.mxu0 0.0
        %1373 = vmatprep.subr.mxu0 0.0
        %1374 = vmatpush1.msra.mxu0 0.0
        %1375 = vmatprep.subr.mxu0 0.0
        %1376 = vmatpush1.msra.mxu0 0.0
        %1377 = vmatprep.subr.mxu0 0.0
        %1378 = vmatpush1.msra.mxu0 0.0
        %1379 = vmatprep.subr.mxu0 0.0
        %1380 = vmatpush1.msra.mxu0 0.0
        %1381 = vmatprep.subr.mxu0 0.0
        %1382 = vmatpush1.msra.mxu0 0.0
        %1383 = vmatprep.subr.mxu0 0.0
        %1384 = vmatpush1.msra.mxu0 0.0
        %1385 = vmatprep.subr.mxu0 0.0
        %1386 = vmatpush1.msra.mxu0 0.0
        %1387 = vmatprep.subr.mxu0 0.0
        %1388 = vmatpush1.msra.mxu0 0.0
        %1389 = vmatprep.subr.mxu0 0.0
        %1390 = vmatpush1.msra.mxu0 0.0
        %1391 = vmatprep.subr.mxu0 0.0
        %1392 = vmatpush1.msra.mxu0 0.0
        %1393 = vmatprep.subr.mxu0 0.0
        %1394 = vmatpush1.msra.mxu0 0.0
        %1395 = vmatprep.subr.mxu0 0.0
        %1396 = vmatpush1.msra.mxu0 0.0
        %1397 = vmatprep.subr.mxu0 0.0
        %1398 = vmatpush1.msra.mxu0 0.0
        %1399 = vmatprep.subr.mxu0 0.0
        %1400 = vmatpush1.msra.mxu0 0.0
        %1401 = vmatprep.subr.mxu0 0.0
        %1402 = vmatpush1.msra.mxu0 0.0
        %1403 = vmatprep.subr.mxu0 0.0
        %1404 = vmatpush1.msra.mxu0 0.0
        %1405 = vmatprep.subr.mxu0 0.0
        %1406 = vmatpush1.msra.mxu0 0.0
        %1407 = vmatprep.subr.mxu0 0.0
        %1408 = vmatpush1.msra.mxu0 0.0
        %1409 = vmatprep.mubr.f32.mxu0 0.0
        %1410 = vmatmul.mubr.f32.gmra.mrb[0].mxu0 %v1200
        %v1411 = vpop.f32.mrb[0].mxu0
        %v1412 = vadd.f32 0.0, %v1411
        %v1413 = vpop.f32.mrb[0].mxu0
        %v1414 = vadd.f32 0.0, %v1413
        %1415 = vmatprep.mubr.f32.mxu0 0.0
        %1416 = vmatmul.mubr.f32.gmra.mrb[0].mxu0 %v1203
        %v1417 = vpop.f32.mrb[0].mxu0
        %v1418 = vadd.f32 0.0, %v1417
        %v1419 = vpop.f32.mrb[0].mxu0
        %v1420 = vadd.f32 0.0, %v1419
        %1421 = vmatprep.mubr.f32.mxu0 0.0
        %1422 = vmatmul.mubr.f32.gmra.mrb[0].mxu0 %v1206
        %v1423 = vpop.f32.mrb[0].mxu0
        %v1424 = vadd.f32 0.0, %v1423
        %v1425 = vpop.f32.mrb[0].mxu0
        %v1426 = vadd.f32 0.0, %v1425
        %1427 = vmatprep.mubr.f32.mxu0 0.0
        %1428 = vmatmul.mubr.f32.gmra.mrb[0].mxu0 %v1209
        %v1429 = vpop.f32.mrb[0].mxu0
        %v1430 = vadd.f32 0.0, %v1429
        %v1431 = vpop.f32.mrb[0].mxu0
        %v1432 = vadd.f32 0.0, %v1431
        %1433 = vmatprep.mubr.f32.mxu0 0.0
        %1434 = vmatmul.mubr.f32.gmra.mrb[0].mxu0 %v1212
        %v1435 = vpop.f32.mrb[0].mxu0
        %v1436 = vadd.f32 0.0, %v1435
        %v1437 = vpop.f32.mrb[0].mxu0
        %v1438 = vadd.f32 0.0, %v1437
        %1439 = vmatprep.mubr.f32.mxu0 0.0
        %1440 = vmatmul.mubr.f32.gmra.mrb[0].mxu0 %v1215
        %v1441 = vpop.f32.mrb[0].mxu0
        %v1442 = vadd.f32 0.0, %v1441
        %v1443 = vpop.f32.mrb[0].mxu0
        %v1444 = vadd.f32 0.0, %v1443
        %1445 = vmatprep.mubr.f32.mxu0 0.0
        %1446 = vmatmul.mubr.f32.gmra.mrb[0].mxu0 %v1218
        %v1447 = vpop.f32.mrb[0].mxu0
        %v1448 = vadd.f32 0.0, %v1447
        %v1449 = vpop.f32.mrb[0].mxu0
        %v1450 = vadd.f32 0.0, %v1449
        %1451 = vmatprep.mubr.f32.mxu0 0.0
        %1452 = vmatmul.mubr.f32.gmra.mrb[0].mxu0 %v1221
        %v1453 = vpop.f32.mrb[0].mxu0
        %v1454 = vadd.f32 0.0, %v1453
        %v1455 = vpop.f32.mrb[0].mxu0
        %v1456 = vadd.f32 0.0, %v1455
        %1457 = vmatprep.mubr.f32.mxu0 0.0
        %1458 = vmatmul.mubr.f32.gmra.mrb[0].mxu0 %v1224
        %v1459 = vpop.f32.mrb[0].mxu0
        %v1460 = vadd.f32 0.0, %v1459
        %v1461 = vpop.f32.mrb[0].mxu0
        %v1462 = vadd.f32 0.0, %v1461
        %1463 = vdwg.mxu0
        %1464 = vrot.lane.b32.xlu0 %v1293, 17
        %v1465 = vpop.permute.xlu0 %1464
        %1466 = vrot.lane.b32.xlu0 %v1295, 17
        %v1467 = vpop.permute.xlu0 %1466
        %1468 = vrot.lane.b32.xlu0 %v1412, 17
        %v1469 = vpop.permute.xlu0 %1468
        %1470 = vrot.lane.b32.xlu0 %v1414, 17
        %v1471 = vpop.permute.xlu0 %1470
        %v1472 = vsel %vm859, %v1469, %v1471
        %v1473 = vsel %vm859, %v1467, %v1469
        %v1474 = vsel %vm859, %v1465, %v1467
        %v1475 = vsel %vm859, %v1471, %v1465
        %v1476 = vmul.f32 %v1475, %v308
        %v1477 = vmul.f32 %v1474, %v312
        %v1478 = vmul.f32 %v1473, %v316
        %v1479 = vmul.f32 %v1472, %v320
        %v1480 = vadd.f32 %v1317, %v1476
        %v1481 = vadd.f32 %v1319, %v1477
        %v1482 = vadd.f32 %v1436, %v1478
        %v1483 = vadd.f32 %v1438, %v1479
        %1484 = vrot.lane.b32.xlu0 %v1299, 16
        %v1485 = vpop.permute.xlu0 %1484
        %1486 = vrot.lane.b32.xlu0 %v1301, 16
        %v1487 = vpop.permute.xlu0 %1486
        %1488 = vrot.lane.b32.xlu0 %v1418, 16
        %v1489 = vpop.permute.xlu0 %1488
        %1490 = vrot.lane.b32.xlu0 %v1420, 16
        %v1491 = vpop.permute.xlu0 %1490
        %v1492 = vsel %vm880, %v1489, %v1491
        %v1493 = vsel %vm880, %v1487, %v1489
        %v1494 = vsel %vm880, %v1485, %v1487
        %v1495 = vsel %vm880, %v1491, %v1485
        %v1496 = vmul.f32 %v1495, %v324
        %v1497 = vmul.f32 %v1494, %v328
        %v1498 = vmul.f32 %v1493, %v332
        %v1499 = vmul.f32 %v1492, %v336
        %v1500 = vadd.f32 %v1480, %v1496
        %v1501 = vadd.f32 %v1481, %v1497
        %v1502 = vadd.f32 %v1482, %v1498
        %v1503 = vadd.f32 %v1483, %v1499
        %1504 = vrot.lane.b32.xlu0 %v1305, 15
        %v1505 = vpop.permute.xlu0 %1504
        %1506 = vrot.lane.b32.xlu0 %v1307, 15
        %v1507 = vpop.permute.xlu0 %1506
        %1508 = vrot.lane.b32.xlu0 %v1424, 15
        %v1509 = vpop.permute.xlu0 %1508
        %1510 = vrot.lane.b32.xlu0 %v1426, 15
        %v1511 = vpop.permute.xlu0 %1510
        %v1512 = vsel %vm901, %v1509, %v1511
        %v1513 = vsel %vm901, %v1507, %v1509
        %v1514 = vsel %vm901, %v1505, %v1507
        %v1515 = vsel %vm901, %v1511, %v1505
        %v1516 = vmul.f32 %v1515, %v340
        %v1517 = vmul.f32 %v1514, %v344
        %v1518 = vmul.f32 %v1513, %v348
        %v1519 = vmul.f32 %v1512, %v352
        %v1520 = vadd.f32 %v1500, %v1516
        %v1521 = vadd.f32 %v1501, %v1517
        %v1522 = vadd.f32 %v1502, %v1518
        %v1523 = vadd.f32 %v1503, %v1519
        %1524 = vrot.lane.b32.xlu0 %v1311, 1
        %v1525 = vpop.permute.xlu0 %1524
        %1526 = vrot.lane.b32.xlu0 %v1313, 1
        %v1527 = vpop.permute.xlu0 %1526
        %1528 = vrot.lane.b32.xlu0 %v1430, 1
        %v1529 = vpop.permute.xlu0 %1528
        %1530 = vrot.lane.b32.xlu0 %v1432, 1
        %v1531 = vpop.permute.xlu0 %1530
        %v1532 = vsel %vm922, %v1529, %v1531
        %v1533 = vsel %vm922, %v1527, %v1529
        %v1534 = vsel %vm922, %v1525, %v1527
        %v1535 = vsel %vm922, %v1531, %v1525
        %v1536 = vmul.f32 %v1535, %v356
        %v1537 = vmul.f32 %v1534, %v360
        %v1538 = vmul.f32 %v1533, %v364
        %v1539 = vmul.f32 %v1532, %v368
        %v1540 = vadd.f32 %v1520, %v1536
        %v1541 = vadd.f32 %v1521, %v1537
        %v1542 = vadd.f32 %v1522, %v1538
        %v1543 = vadd.f32 %v1523, %v1539
        %1544 = vrot.lane.b32.xlu0 %v1323, 127
        %v1545 = vpop.permute.xlu0 %1544
        %1546 = vrot.lane.b32.xlu0 %v1325, 127
        %v1547 = vpop.permute.xlu0 %1546
        %1548 = vrot.lane.b32.xlu0 %v1442, 127
        %v1549 = vpop.permute.xlu0 %1548
        %1550 = vrot.lane.b32.xlu0 %v1444, 127
        %v1551 = vpop.permute.xlu0 %1550
        %v1552 = vsel %vm943, %v1549, %v1551
        %v1553 = vsel %vm943, %v1547, %v1549
        %v1554 = vsel %vm943, %v1545, %v1547
        %v1555 = vsel %vm943, %v1551, %v1545
        %v1556 = vmul.f32 %v1554, %v372
        %v1557 = vmul.f32 %v1553, %v376
        %v1558 = vmul.f32 %v1552, %v380
        %v1559 = vmul.f32 %v1555, %v384
        %v1560 = vadd.f32 %v1540, %v1556
        %v1561 = vadd.f32 %v1541, %v1557
        %v1562 = vadd.f32 %v1542, %v1558
        %v1563 = vadd.f32 %v1543, %v1559
        %1564 = vrot.lane.b32.xlu0 %v1329, 113
        %v1565 = vpop.permute.xlu0 %1564
        %1566 = vrot.lane.b32.xlu0 %v1331, 113
        %v1567 = vpop.permute.xlu0 %1566
        %1568 = vrot.lane.b32.xlu0 %v1448, 113
        %v1569 = vpop.permute.xlu0 %1568
        %1570 = vrot.lane.b32.xlu0 %v1450, 113
        %v1571 = vpop.permute.xlu0 %1570
        %v1572 = vsel %vm964, %v1569, %v1571
        %v1573 = vsel %vm964, %v1567, %v1569
        %v1574 = vsel %vm964, %v1565, %v1567
        %v1575 = vsel %vm964, %v1571, %v1565
        %v1576 = vmul.f32 %v1574, %v388
        %v1577 = vmul.f32 %v1573, %v392
        %v1578 = vmul.f32 %v1572, %v396
        %v1579 = vmul.f32 %v1575, %v400
        %v1580 = vadd.f32 %v1560, %v1576
        %v1581 = vadd.f32 %v1561, %v1577
        %v1582 = vadd.f32 %v1562, %v1578
        %v1583 = vadd.f32 %v1563, %v1579
        %1584 = vrot.lane.b32.xlu0 %v1335, 112
        %v1585 = vpop.permute.xlu0 %1584
        %1586 = vrot.lane.b32.xlu0 %v1337, 112
        %v1587 = vpop.permute.xlu0 %1586
        %1588 = vrot.lane.b32.xlu0 %v1454, 112
        %v1589 = vpop.permute.xlu0 %1588
        %1590 = vrot.lane.b32.xlu0 %v1456, 112
        %v1591 = vpop.permute.xlu0 %1590
        %v1592 = vsel %vm985, %v1589, %v1591
        %v1593 = vsel %vm985, %v1587, %v1589
        %v1594 = vsel %vm985, %v1585, %v1587
        %v1595 = vsel %vm985, %v1591, %v1585
        %v1596 = vmul.f32 %v1594, %v404
        %v1597 = vmul.f32 %v1593, %v408
        %v1598 = vmul.f32 %v1592, %v412
        %v1599 = vmul.f32 %v1595, %v416
        %v1600 = vadd.f32 %v1580, %v1596
        %v1601 = vadd.f32 %v1581, %v1597
        %v1602 = vadd.f32 %v1582, %v1598
        %v1603 = vadd.f32 %v1583, %v1599
        %1604 = vrot.lane.b32.xlu0 %v1341, 111
        %v1605 = vpop.permute.xlu0 %1604
        %1606 = vrot.lane.b32.xlu0 %v1343, 111
        %v1607 = vpop.permute.xlu0 %1606
        %1608 = vrot.lane.b32.xlu0 %v1460, 111
        %v1609 = vpop.permute.xlu0 %1608
        %1610 = vrot.lane.b32.xlu0 %v1462, 111
        %v1611 = vpop.permute.xlu0 %1610
        %v1612 = vsel %vm1006, %v1609, %v1611
        %v1613 = vsel %vm1006, %v1607, %v1609
        %v1614 = vsel %vm1006, %v1605, %v1607
        %v1615 = vsel %vm1006, %v1611, %v1605
        %v1616 = vmul.f32 %v1614, %v420
        %v1617 = vmul.f32 %v1613, %v424
        %v1618 = vmul.f32 %v1612, %v428
        %v1619 = vmul.f32 %v1615, %v432
        %v1620 = vadd.f32 %v1600, %v1616
        %v1621 = vadd.f32 %v1601, %v1617
        %v1622 = vadd.f32 %v1602, %v1618
        %v1623 = vadd.f32 %v1603, %v1619
        %1624 = vset.pattern.permute.xlu0 1
        %1625 = vperm.xlu0 %1624, %v433
        %v1626 = vpop.permute.xlu0 %1625
        %v1628 = vadd.f32 %v1620, %v1626
        %v1629 = vadd.f32 %v1621, %v1626
        %v1630 = vadd.f32 %v1622, %v1626
        %v1631 = vadd.f32 %v1623, %v1626
        %v1632 = vrot.slane %v1628, 4
        %v1633 = vadd.f32 %v1628, %v1632
        %v1634 = vrot.slane %v1633, 2
        %v1635 = vadd.f32 %v1633, %v1634
        %v1636 = vrot.slane %v1635, 1
        %v1637 = vadd.f32 %v1635, %v1636
        %v1638 = vrot.slane %v1629, 4
        %v1639 = vadd.f32 %v1629, %v1638
        %v1640 = vrot.slane %v1639, 2
        %v1641 = vadd.f32 %v1639, %v1640
        %v1642 = vrot.slane %v1641, 1
        %v1643 = vadd.f32 %v1641, %v1642
        %v1644 = vrot.slane %v1630, 4
        %v1645 = vadd.f32 %v1630, %v1644
        %v1646 = vrot.slane %v1645, 2
        %v1647 = vadd.f32 %v1645, %v1646
        %v1648 = vrot.slane %v1647, 1
        %v1649 = vadd.f32 %v1647, %v1648
        %v1650 = vrot.slane %v1631, 4
        %v1651 = vadd.f32 %v1631, %v1650
        %v1652 = vrot.slane %v1651, 2
        %v1653 = vadd.f32 %v1651, %v1652
        %v1654 = vrot.slane %v1653, 1
        %v1655 = vadd.f32 %v1653, %v1654
        %v1656 = vmul.f32 %v1628, %v1628
        %v1657 = vmul.f32 %v1629, %v1629
        %v1658 = vmul.f32 %v1630, %v1630
        %v1659 = vmul.f32 %v1631, %v1631
        %v1660 = vrot.slane %v1656, 4
        %v1661 = vadd.f32 %v1656, %v1660
        %v1662 = vrot.slane %v1661, 2
        %v1663 = vadd.f32 %v1661, %v1662
        %v1664 = vrot.slane %v1663, 1
        %v1665 = vadd.f32 %v1663, %v1664
        %v1666 = vrot.slane %v1657, 4
        %v1667 = vadd.f32 %v1657, %v1666
        %v1668 = vrot.slane %v1667, 2
        %v1669 = vadd.f32 %v1667, %v1668
        %v1670 = vrot.slane %v1669, 1
        %v1671 = vadd.f32 %v1669, %v1670
        %v1672 = vrot.slane %v1658, 4
        %v1673 = vadd.f32 %v1658, %v1672
        %v1674 = vrot.slane %v1673, 2
        %v1675 = vadd.f32 %v1673, %v1674
        %v1676 = vrot.slane %v1675, 1
        %v1677 = vadd.f32 %v1675, %v1676
        %v1678 = vrot.slane %v1659, 4
        %v1679 = vadd.f32 %v1659, %v1678
        %v1680 = vrot.slane %v1679, 2
        %v1681 = vadd.f32 %v1679, %v1680
        %v1682 = vrot.slane %v1681, 1
        %v1683 = vadd.f32 %v1681, %v1682
        %v1684 = vsel %vm1080, %v1637, 0.0
        %v1685 = vsel %vm1080, %v1643, 0.0
        %v1686 = vadd.f32 %v1684, %v1685
        %1687 = vadd.xlane.f32.xlu0 %v1686
        %v1688 = vpop.xlane.xlu0 %1687
        %v1689 = vrot.slane %v1688, 4
        %v1690 = vadd.f32 %v1688, %v1689
        %v1691 = vrot.slane %v1690, 2
        %v1692 = vadd.f32 %v1690, %v1691
        %v1693 = vrot.slane %v1692, 1
        %v1694 = vadd.f32 %v1692, %v1693
        %s1695 = vtos %v1694
        %s1696 = smul.f32 %s1695, 0.00048828125
        %v1697 = vsel %vm1080, %v1665, 0.0
        %v1698 = vsel %vm1080, %v1671, 0.0
        %v1699 = vadd.f32 %v1697, %v1698
        %1700 = vadd.xlane.f32.xlu0 %v1699
        %v1701 = vpop.xlane.xlu0 %1700
        %v1702 = vrot.slane %v1701, 4
        %v1703 = vadd.f32 %v1701, %v1702
        %v1704 = vrot.slane %v1703, 2
        %v1705 = vadd.f32 %v1703, %v1704
        %v1706 = vrot.slane %v1705, 1
        %v1707 = vadd.f32 %v1705, %v1706
        %s1708 = vtos %v1707
        %s1709 = smul.f32 %s1708, 0.00048828125
        %s1710 = smul.f32 %s1696, %s1696
        %s1711 = ssub.f32 %s1709, %s1710
        %s1712 = sadd.f32 %s1711, 1e-05
        %v1713 = vstv %s1712
        %v1714 = vrsqrt.pop %v1713
        %s1715 = vtos %v1714
        %v1716 = vstv %s1696
        %v1717 = vstv %s1715
        %v1718 = vsel %vm1080, %v1649, 0.0
        %v1719 = vsel %vm1080, %v1655, 0.0
        %v1720 = vadd.f32 %v1718, %v1719
        %1721 = vadd.xlane.f32.xlu0 %v1720
        %v1722 = vpop.xlane.xlu0 %1721
        %v1723 = vrot.slane %v1722, 4
        %v1724 = vadd.f32 %v1722, %v1723
        %v1725 = vrot.slane %v1724, 2
        %v1726 = vadd.f32 %v1724, %v1725
        %v1727 = vrot.slane %v1726, 1
        %v1728 = vadd.f32 %v1726, %v1727
        %s1729 = vtos %v1728
        %s1730 = smul.f32 %s1729, 0.00048828125
        %v1731 = vsel %vm1080, %v1677, 0.0
        %v1732 = vsel %vm1080, %v1683, 0.0
        %v1733 = vadd.f32 %v1731, %v1732
        %1734 = vadd.xlane.f32.xlu0 %v1733
        %v1735 = vpop.xlane.xlu0 %1734
        %v1736 = vrot.slane %v1735, 4
        %v1737 = vadd.f32 %v1735, %v1736
        %v1738 = vrot.slane %v1737, 2
        %v1739 = vadd.f32 %v1737, %v1738
        %v1740 = vrot.slane %v1739, 1
        %v1741 = vadd.f32 %v1739, %v1740
        %s1742 = vtos %v1741
        %s1743 = smul.f32 %s1742, 0.00048828125
        %s1744 = smul.f32 %s1730, %s1730
        %s1745 = ssub.f32 %s1743, %s1744
        %s1746 = sadd.f32 %s1745, 1e-05
        %v1747 = vstv %s1746
        %v1748 = vrsqrt.pop %v1747
        %s1749 = vtos %v1748
        %v1750 = vstv %s1730
        %v1751 = vstv %s1749
        %v1752 = vlaneseq
        %v1753 = vshrl.u32 %v1752, 7
        %v1754 = vsub.s32 0, %v1753
        %v1755 = vlaneseq
        %v1756 = vshrl.u32 %v1755, 7
        %v1757 = vsub.s32 0, %v1756
        %v1758 = vsub.f32 %v1628, %v1716
        %v1759 = vsub.f32 %v1629, %v1716
        %v1760 = vsub.f32 %v1630, %v1750
        %v1761 = vsub.f32 %v1631, %v1750
        %v1762 = vlaneseq
        %v1763 = vshrl.u32 %v1762, 7
        %v1764 = vsub.s32 0, %v1763
        %v1765 = vlaneseq
        %v1766 = vshrl.u32 %v1765, 7
        %v1767 = vsub.s32 0, %v1766
        %v1768 = vmul.f32 %v1758, %v1717
        %v1769 = vmul.f32 %v1759, %v1717
        %v1770 = vmul.f32 %v1760, %v1751
        %v1771 = vmul.f32 %v1761, %v1751
        %1772 = vset.pattern.permute.xlu0 5
        %1773 = vperm.xlu0 %1772, %v433
        %v1774 = vpop.permute.xlu0 %1773
        %v1776 = vmul.f32 %v1768, %v1774
        %v1777 = vmul.f32 %v1769, %v1774
        %v1778 = vmul.f32 %v1770, %v1774
        %v1779 = vmul.f32 %v1771, %v1774
        %1780 = vset.pattern.permute.xlu0 9
        %1781 = vperm.xlu0 %1780, %v433
        %v1782 = vpop.permute.xlu0 %1781
        %v1784 = vadd.f32 %v1776, %v1782
        %v1785 = vadd.f32 %v1777, %v1782
        %v1786 = vadd.f32 %v1778, %v1782
        %v1787 = vadd.f32 %v1779, %v1782
        %v1788 = vmax.f32 %v1784, 0.0
        %v1789 = vmax.f32 %v1785, 0.0
        %v1790 = vmax.f32 %v1786, 0.0
        %v1791 = vmax.f32 %v1787, 0.0
        %s1792 = scalar_lea.vmem %s4, 72
        %v1793 = vld [vmem:[%s1792] sm:$0xff]
        %v1794 = vld [vmem:[%s1792 + $0x8] sm:$0xff]
        %v1795 = vld [vmem:[%s1792 + $0x10] sm:$0xff]
        %v1796 = vld [vmem:[%s1792 + $0x18] sm:$0xff]
        %v1797 = vld [vmem:[%s1792 + $0x20] sm:$0xff]
        %v1798 = vld [vmem:[%s1792 + $0x28] sm:$0xff]
        %v1799 = vld [vmem:[%s1792 + $0x30] sm:$0xff]
        %v1800 = vld [vmem:[%s1792 + $0x38] sm:$0xff]
        %v1801 = vld [vmem:[%s1792 + $0x40] sm:$0xff]
        %v1803 = vsel %vm1198, %v1793, 0
        %v1806 = vsel %vm1198, %v1794, 0
        %v1809 = vsel %vm1198, %v1795, 0
        %v1812 = vsel %vm1198, %v1796, 0
        %v1815 = vsel %vm1198, %v1797, 0
        %v1818 = vsel %vm1198, %v1798, 0
        %v1821 = vsel %vm1198, %v1799, 0
        %v1824 = vsel %vm1198, %v1800, 0
        %v1827 = vsel %vm1198, %v1801, 0
        %1829 = vmatprep.subr.mxu0 %v1789
        %1830 = vmatpush1.msra.mxu0 %v1788
        %1831 = vmatprep.subr.mxu0 0.0
        %1832 = vmatpush1.msra.mxu0 0.0
        %1833 = vmatprep.subr.mxu0 0.0
        %1834 = vmatpush1.msra.mxu0 0.0
        %1835 = vmatprep.subr.mxu0 0.0
        %1836 = vmatpush1.msra.mxu0 0.0
        %1837 = vmatprep.subr.mxu0 0.0
        %1838 = vmatpush1.msra.mxu0 0.0
        %1839 = vmatprep.subr.mxu0 0.0
        %1840 = vmatpush1.msra.mxu0 0.0
        %1841 = vmatprep.subr.mxu0 0.0
        %1842 = vmatpush1.msra.mxu0 0.0
        %1843 = vmatprep.subr.mxu0 0.0
        %1844 = vmatpush1.msra.mxu0 0.0
        %1845 = vmatprep.subr.mxu0 0.0
        %1846 = vmatpush1.msra.mxu0 0.0
        %1847 = vmatprep.subr.mxu0 0.0
        %1848 = vmatpush1.msra.mxu0 0.0
        %1849 = vmatprep.subr.mxu0 0.0
        %1850 = vmatpush1.msra.mxu0 0.0
        %1851 = vmatprep.subr.mxu0 0.0
        %1852 = vmatpush1.msra.mxu0 0.0
        %1853 = vmatprep.subr.mxu0 0.0
        %1854 = vmatpush1.msra.mxu0 0.0
        %1855 = vmatprep.subr.mxu0 0.0
        %1856 = vmatpush1.msra.mxu0 0.0
        %1857 = vmatprep.subr.mxu0 0.0
        %1858 = vmatpush1.msra.mxu0 0.0
        %1859 = vmatprep.subr.mxu0 0.0
        %1860 = vmatpush1.msra.mxu0 0.0
        %1861 = vmatprep.subr.mxu0 0.0
        %1862 = vmatpush1.msra.mxu0 0.0
        %1863 = vmatprep.subr.mxu0 0.0
        %1864 = vmatpush1.msra.mxu0 0.0
        %1865 = vmatprep.subr.mxu0 0.0
        %1866 = vmatpush1.msra.mxu0 0.0
        %1867 = vmatprep.subr.mxu0 0.0
        %1868 = vmatpush1.msra.mxu0 0.0
        %1869 = vmatprep.subr.mxu0 0.0
        %1870 = vmatpush1.msra.mxu0 0.0
        %1871 = vmatprep.subr.mxu0 0.0
        %1872 = vmatpush1.msra.mxu0 0.0
        %1873 = vmatprep.subr.mxu0 0.0
        %1874 = vmatpush1.msra.mxu0 0.0
        %1875 = vmatprep.subr.mxu0 0.0
        %1876 = vmatpush1.msra.mxu0 0.0
        %1877 = vmatprep.subr.mxu0 0.0
        %1878 = vmatpush1.msra.mxu0 0.0
        %1879 = vmatprep.subr.mxu0 0.0
        %1880 = vmatpush1.msra.mxu0 0.0
        %1881 = vmatprep.subr.mxu0 0.0
        %1882 = vmatpush1.msra.mxu0 0.0
        %1883 = vmatprep.subr.mxu0 0.0
        %1884 = vmatpush1.msra.mxu0 0.0
        %1885 = vmatprep.subr.mxu0 0.0
        %1886 = vmatpush1.msra.mxu0 0.0
        %1887 = vmatprep.subr.mxu0 0.0
        %1888 = vmatpush1.msra.mxu0 0.0
        %1889 = vmatprep.subr.mxu0 0.0
        %1890 = vmatpush1.msra.mxu0 0.0
        %1891 = vmatprep.subr.mxu0 0.0
        %1892 = vmatpush1.msra.mxu0 0.0
        %1893 = vmatprep.mubr.f32.mxu0 0.0
        %1894 = vmatmul.mubr.f32.gmra.mrb[0].mxu0 %v1803
        %v1895 = vpop.f32.mrb[0].mxu0
        %v1896 = vadd.f32 0.0, %v1895
        %v1897 = vpop.f32.mrb[0].mxu0
        %v1898 = vadd.f32 0.0, %v1897
        %1899 = vmatprep.mubr.f32.mxu0 0.0
        %1900 = vmatmul.mubr.f32.gmra.mrb[0].mxu0 %v1806
        %v1901 = vpop.f32.mrb[0].mxu0
        %v1902 = vadd.f32 0.0, %v1901
        %v1903 = vpop.f32.mrb[0].mxu0
        %v1904 = vadd.f32 0.0, %v1903
        %1905 = vmatprep.mubr.f32.mxu0 0.0
        %1906 = vmatmul.mubr.f32.gmra.mrb[0].mxu0 %v1809
        %v1907 = vpop.f32.mrb[0].mxu0
        %v1908 = vadd.f32 0.0, %v1907
        %v1909 = vpop.f32.mrb[0].mxu0
        %v1910 = vadd.f32 0.0, %v1909
        %1911 = vmatprep.mubr.f32.mxu0 0.0
        %1912 = vmatmul.mubr.f32.gmra.mrb[0].mxu0 %v1812
        %v1913 = vpop.f32.mrb[0].mxu0
        %v1914 = vadd.f32 0.0, %v1913
        %v1915 = vpop.f32.mrb[0].mxu0
        %v1916 = vadd.f32 0.0, %v1915
        %1917 = vmatprep.mubr.f32.mxu0 0.0
        %1918 = vmatmul.mubr.f32.gmra.mrb[0].mxu0 %v1815
        %v1919 = vpop.f32.mrb[0].mxu0
        %v1920 = vadd.f32 0.0, %v1919
        %v1921 = vpop.f32.mrb[0].mxu0
        %v1922 = vadd.f32 0.0, %v1921
        %1923 = vmatprep.mubr.f32.mxu0 0.0
        %1924 = vmatmul.mubr.f32.gmra.mrb[0].mxu0 %v1818
        %v1925 = vpop.f32.mrb[0].mxu0
        %v1926 = vadd.f32 0.0, %v1925
        %v1927 = vpop.f32.mrb[0].mxu0
        %v1928 = vadd.f32 0.0, %v1927
        %1929 = vmatprep.mubr.f32.mxu0 0.0
        %1930 = vmatmul.mubr.f32.gmra.mrb[0].mxu0 %v1821
        %v1931 = vpop.f32.mrb[0].mxu0
        %v1932 = vadd.f32 0.0, %v1931
        %v1933 = vpop.f32.mrb[0].mxu0
        %v1934 = vadd.f32 0.0, %v1933
        %1935 = vmatprep.mubr.f32.mxu0 0.0
        %1936 = vmatmul.mubr.f32.gmra.mrb[0].mxu0 %v1824
        %v1937 = vpop.f32.mrb[0].mxu0
        %v1938 = vadd.f32 0.0, %v1937
        %v1939 = vpop.f32.mrb[0].mxu0
        %v1940 = vadd.f32 0.0, %v1939
        %1941 = vmatprep.mubr.f32.mxu0 0.0
        %1942 = vmatmul.mubr.f32.gmra.mrb[0].mxu0 %v1827
        %v1943 = vpop.f32.mrb[0].mxu0
        %v1944 = vadd.f32 0.0, %v1943
        %v1945 = vpop.f32.mrb[0].mxu0
        %v1946 = vadd.f32 0.0, %v1945
        %1947 = vdwg.mxu0
        %1948 = vmatprep.subr.mxu0 %v1791
        %1949 = vmatpush1.msra.mxu0 %v1790
        %1950 = vmatprep.subr.mxu0 0.0
        %1951 = vmatpush1.msra.mxu0 0.0
        %1952 = vmatprep.subr.mxu0 0.0
        %1953 = vmatpush1.msra.mxu0 0.0
        %1954 = vmatprep.subr.mxu0 0.0
        %1955 = vmatpush1.msra.mxu0 0.0
        %1956 = vmatprep.subr.mxu0 0.0
        %1957 = vmatpush1.msra.mxu0 0.0
        %1958 = vmatprep.subr.mxu0 0.0
        %1959 = vmatpush1.msra.mxu0 0.0
        %1960 = vmatprep.subr.mxu0 0.0
        %1961 = vmatpush1.msra.mxu0 0.0
        %1962 = vmatprep.subr.mxu0 0.0
        %1963 = vmatpush1.msra.mxu0 0.0
        %1964 = vmatprep.subr.mxu0 0.0
        %1965 = vmatpush1.msra.mxu0 0.0
        %1966 = vmatprep.subr.mxu0 0.0
        %1967 = vmatpush1.msra.mxu0 0.0
        %1968 = vmatprep.subr.mxu0 0.0
        %1969 = vmatpush1.msra.mxu0 0.0
        %1970 = vmatprep.subr.mxu0 0.0
        %1971 = vmatpush1.msra.mxu0 0.0
        %1972 = vmatprep.subr.mxu0 0.0
        %1973 = vmatpush1.msra.mxu0 0.0
        %1974 = vmatprep.subr.mxu0 0.0
        %1975 = vmatpush1.msra.mxu0 0.0
        %1976 = vmatprep.subr.mxu0 0.0
        %1977 = vmatpush1.msra.mxu0 0.0
        %1978 = vmatprep.subr.mxu0 0.0
        %1979 = vmatpush1.msra.mxu0 0.0
        %1980 = vmatprep.subr.mxu0 0.0
        %1981 = vmatpush1.msra.mxu0 0.0
        %1982 = vmatprep.subr.mxu0 0.0
        %1983 = vmatpush1.msra.mxu0 0.0
        %1984 = vmatprep.subr.mxu0 0.0
        %1985 = vmatpush1.msra.mxu0 0.0
        %1986 = vmatprep.subr.mxu0 0.0
        %1987 = vmatpush1.msra.mxu0 0.0
        %1988 = vmatprep.subr.mxu0 0.0
        %1989 = vmatpush1.msra.mxu0 0.0
        %1990 = vmatprep.subr.mxu0 0.0
        %1991 = vmatpush1.msra.mxu0 0.0
        %1992 = vmatprep.subr.mxu0 0.0
        %1993 = vmatpush1.msra.mxu0 0.0
        %1994 = vmatprep.subr.mxu0 0.0
        %1995 = vmatpush1.msra.mxu0 0.0
        %1996 = vmatprep.subr.mxu0 0.0
        %1997 = vmatpush1.msra.mxu0 0.0
        %1998 = vmatprep.subr.mxu0 0.0
        %1999 = vmatpush1.msra.mxu0 0.0
        %2000 = vmatprep.subr.mxu0 0.0
        %2001 = vmatpush1.msra.mxu0 0.0
        %2002 = vmatprep.subr.mxu0 0.0
        %2003 = vmatpush1.msra.mxu0 0.0
        %2004 = vmatprep.subr.mxu0 0.0
        %2005 = vmatpush1.msra.mxu0 0.0
        %2006 = vmatprep.subr.mxu0 0.0
        %2007 = vmatpush1.msra.mxu0 0.0
        %2008 = vmatprep.subr.mxu0 0.0
        %2009 = vmatpush1.msra.mxu0 0.0
        %2010 = vmatprep.subr.mxu0 0.0
        %2011 = vmatpush1.msra.mxu0 0.0
        %2012 = vmatprep.mubr.f32.mxu0 0.0
        %2013 = vmatmul.mubr.f32.gmra.mrb[0].mxu0 %v1803
        %v2014 = vpop.f32.mrb[0].mxu0
        %v2015 = vadd.f32 0.0, %v2014
        %v2016 = vpop.f32.mrb[0].mxu0
        %v2017 = vadd.f32 0.0, %v2016
        %2018 = vmatprep.mubr.f32.mxu0 0.0
        %2019 = vmatmul.mubr.f32.gmra.mrb[0].mxu0 %v1806
        %v2020 = vpop.f32.mrb[0].mxu0
        %v2021 = vadd.f32 0.0, %v2020
        %v2022 = vpop.f32.mrb[0].mxu0
        %v2023 = vadd.f32 0.0, %v2022
        %2024 = vmatprep.mubr.f32.mxu0 0.0
        %2025 = vmatmul.mubr.f32.gmra.mrb[0].mxu0 %v1809
        %v2026 = vpop.f32.mrb[0].mxu0
        %v2027 = vadd.f32 0.0, %v2026
        %v2028 = vpop.f32.mrb[0].mxu0
        %v2029 = vadd.f32 0.0, %v2028
        %2030 = vmatprep.mubr.f32.mxu0 0.0
        %2031 = vmatmul.mubr.f32.gmra.mrb[0].mxu0 %v1812
        %v2032 = vpop.f32.mrb[0].mxu0
        %v2033 = vadd.f32 0.0, %v2032
        %v2034 = vpop.f32.mrb[0].mxu0
        %v2035 = vadd.f32 0.0, %v2034
        %2036 = vmatprep.mubr.f32.mxu0 0.0
        %2037 = vmatmul.mubr.f32.gmra.mrb[0].mxu0 %v1815
        %v2038 = vpop.f32.mrb[0].mxu0
        %v2039 = vadd.f32 0.0, %v2038
        %v2040 = vpop.f32.mrb[0].mxu0
        %v2041 = vadd.f32 0.0, %v2040
        %2042 = vmatprep.mubr.f32.mxu0 0.0
        %2043 = vmatmul.mubr.f32.gmra.mrb[0].mxu0 %v1818
        %v2044 = vpop.f32.mrb[0].mxu0
        %v2045 = vadd.f32 0.0, %v2044
        %v2046 = vpop.f32.mrb[0].mxu0
        %v2047 = vadd.f32 0.0, %v2046
        %2048 = vmatprep.mubr.f32.mxu0 0.0
        %2049 = vmatmul.mubr.f32.gmra.mrb[0].mxu0 %v1821
        %v2050 = vpop.f32.mrb[0].mxu0
        %v2051 = vadd.f32 0.0, %v2050
        %v2052 = vpop.f32.mrb[0].mxu0
        %v2053 = vadd.f32 0.0, %v2052
        %2054 = vmatprep.mubr.f32.mxu0 0.0
        %2055 = vmatmul.mubr.f32.gmra.mrb[0].mxu0 %v1824
        %v2056 = vpop.f32.mrb[0].mxu0
        %v2057 = vadd.f32 0.0, %v2056
        %v2058 = vpop.f32.mrb[0].mxu0
        %v2059 = vadd.f32 0.0, %v2058
        %2060 = vmatprep.mubr.f32.mxu0 0.0
        %2061 = vmatmul.mubr.f32.gmra.mrb[0].mxu0 %v1827
        %v2062 = vpop.f32.mrb[0].mxu0
        %v2063 = vadd.f32 0.0, %v2062
        %v2064 = vpop.f32.mrb[0].mxu0
        %v2065 = vadd.f32 0.0, %v2064
        %2066 = vdwg.mxu0
        %2067 = vrot.lane.b32.xlu0 %v1896, 17
        %v2068 = vpop.permute.xlu0 %2067
        %2069 = vrot.lane.b32.xlu0 %v1898, 17
        %v2070 = vpop.permute.xlu0 %2069
        %2071 = vrot.lane.b32.xlu0 %v2015, 17
        %v2072 = vpop.permute.xlu0 %2071
        %2073 = vrot.lane.b32.xlu0 %v2017, 17
        %v2074 = vpop.permute.xlu0 %2073
        %v2075 = vsel %vm859, %v2072, %v2074
        %v2076 = vsel %vm859, %v2070, %v2072
        %v2077 = vsel %vm859, %v2068, %v2070
        %v2078 = vsel %vm859, %v2074, %v2068
        %v2079 = vmul.f32 %v2078, %v308
        %v2080 = vmul.f32 %v2077, %v312
        %v2081 = vmul.f32 %v2076, %v316
        %v2082 = vmul.f32 %v2075, %v320
        %v2083 = vadd.f32 %v1920, %v2079
        %v2084 = vadd.f32 %v1922, %v2080
        %v2085 = vadd.f32 %v2039, %v2081
        %v2086 = vadd.f32 %v2041, %v2082
        %2087 = vrot.lane.b32.xlu0 %v1902, 16
        %v2088 = vpop.permute.xlu0 %2087
        %2089 = vrot.lane.b32.xlu0 %v1904, 16
        %v2090 = vpop.permute.xlu0 %2089
        %2091 = vrot.lane.b32.xlu0 %v2021, 16
        %v2092 = vpop.permute.xlu0 %2091
        %2093 = vrot.lane.b32.xlu0 %v2023, 16
        %v2094 = vpop.permute.xlu0 %2093
        %v2095 = vsel %vm880, %v2092, %v2094
        %v2096 = vsel %vm880, %v2090, %v2092
        %v2097 = vsel %vm880, %v2088, %v2090
        %v2098 = vsel %vm880, %v2094, %v2088
        %v2099 = vmul.f32 %v2098, %v324
        %v2100 = vmul.f32 %v2097, %v328
        %v2101 = vmul.f32 %v2096, %v332
        %v2102 = vmul.f32 %v2095, %v336
        %v2103 = vadd.f32 %v2083, %v2099
        %v2104 = vadd.f32 %v2084, %v2100
        %v2105 = vadd.f32 %v2085, %v2101
        %v2106 = vadd.f32 %v2086, %v2102
        %2107 = vrot.lane.b32.xlu0 %v1908, 15
        %v2108 = vpop.permute.xlu0 %2107
        %2109 = vrot.lane.b32.xlu0 %v1910, 15
        %v2110 = vpop.permute.xlu0 %2109
        %2111 = vrot.lane.b32.xlu0 %v2027, 15
        %v2112 = vpop.permute.xlu0 %2111
        %2113 = vrot.lane.b32.xlu0 %v2029, 15
        %v2114 = vpop.permute.xlu0 %2113
        %v2115 = vsel %vm901, %v2112, %v2114
        %v2116 = vsel %vm901, %v2110, %v2112
        %v2117 = vsel %vm901, %v2108, %v2110
        %v2118 = vsel %vm901, %v2114, %v2108
        %v2119 = vmul.f32 %v2118, %v340
        %v2120 = vmul.f32 %v2117, %v344
        %v2121 = vmul.f32 %v2116, %v348
        %v2122 = vmul.f32 %v2115, %v352
        %v2123 = vadd.f32 %v2103, %v2119
        %v2124 = vadd.f32 %v2104, %v2120
        %v2125 = vadd.f32 %v2105, %v2121
        %v2126 = vadd.f32 %v2106, %v2122
        %2127 = vrot.lane.b32.xlu0 %v1914, 1
        %v2128 = vpop.permute.xlu0 %2127
        %2129 = vrot.lane.b32.xlu0 %v1916, 1
        %v2130 = vpop.permute.xlu0 %2129
        %2131 = vrot.lane.b32.xlu0 %v2033, 1
        %v2132 = vpop.permute.xlu0 %2131
        %2133 = vrot.lane.b32.xlu0 %v2035, 1
        %v2134 = vpop.permute.xlu0 %2133
        %v2135 = vsel %vm922, %v2132, %v2134
        %v2136 = vsel %vm922, %v2130, %v2132
        %v2137 = vsel %vm922, %v2128, %v2130
        %v2138 = vsel %vm922, %v2134, %v2128
        %v2139 = vmul.f32 %v2138, %v356
        %v2140 = vmul.f32 %v2137, %v360
        %v2141 = vmul.f32 %v2136, %v364
        %v2142 = vmul.f32 %v2135, %v368
        %v2143 = vadd.f32 %v2123, %v2139
        %v2144 = vadd.f32 %v2124, %v2140
        %v2145 = vadd.f32 %v2125, %v2141
        %v2146 = vadd.f32 %v2126, %v2142
        %2147 = vrot.lane.b32.xlu0 %v1926, 127
        %v2148 = vpop.permute.xlu0 %2147
        %2149 = vrot.lane.b32.xlu0 %v1928, 127
        %v2150 = vpop.permute.xlu0 %2149
        %2151 = vrot.lane.b32.xlu0 %v2045, 127
        %v2152 = vpop.permute.xlu0 %2151
        %2153 = vrot.lane.b32.xlu0 %v2047, 127
        %v2154 = vpop.permute.xlu0 %2153
        %v2155 = vsel %vm943, %v2152, %v2154
        %v2156 = vsel %vm943, %v2150, %v2152
        %v2157 = vsel %vm943, %v2148, %v2150
        %v2158 = vsel %vm943, %v2154, %v2148
        %v2159 = vmul.f32 %v2157, %v372
        %v2160 = vmul.f32 %v2156, %v376
        %v2161 = vmul.f32 %v2155, %v380
        %v2162 = vmul.f32 %v2158, %v384
        %v2163 = vadd.f32 %v2143, %v2159
        %v2164 = vadd.f32 %v2144, %v2160
        %v2165 = vadd.f32 %v2145, %v2161
        %v2166 = vadd.f32 %v2146, %v2162
        %2167 = vrot.lane.b32.xlu0 %v1932, 113
        %v2168 = vpop.permute.xlu0 %2167
        %2169 = vrot.lane.b32.xlu0 %v1934, 113
        %v2170 = vpop.permute.xlu0 %2169
        %2171 = vrot.lane.b32.xlu0 %v2051, 113
        %v2172 = vpop.permute.xlu0 %2171
        %2173 = vrot.lane.b32.xlu0 %v2053, 113
        %v2174 = vpop.permute.xlu0 %2173
        %v2175 = vsel %vm964, %v2172, %v2174
        %v2176 = vsel %vm964, %v2170, %v2172
        %v2177 = vsel %vm964, %v2168, %v2170
        %v2178 = vsel %vm964, %v2174, %v2168
        %v2179 = vmul.f32 %v2177, %v388
        %v2180 = vmul.f32 %v2176, %v392
        %v2181 = vmul.f32 %v2175, %v396
        %v2182 = vmul.f32 %v2178, %v400
        %v2183 = vadd.f32 %v2163, %v2179
        %v2184 = vadd.f32 %v2164, %v2180
        %v2185 = vadd.f32 %v2165, %v2181
        %v2186 = vadd.f32 %v2166, %v2182
        %2187 = vrot.lane.b32.xlu0 %v1938, 112
        %v2188 = vpop.permute.xlu0 %2187
        %2189 = vrot.lane.b32.xlu0 %v1940, 112
        %v2190 = vpop.permute.xlu0 %2189
        %2191 = vrot.lane.b32.xlu0 %v2057, 112
        %v2192 = vpop.permute.xlu0 %2191
        %2193 = vrot.lane.b32.xlu0 %v2059, 112
        %v2194 = vpop.permute.xlu0 %2193
        %v2195 = vsel %vm985, %v2192, %v2194
        %v2196 = vsel %vm985, %v2190, %v2192
        %v2197 = vsel %vm985, %v2188, %v2190
        %v2198 = vsel %vm985, %v2194, %v2188
        %v2199 = vmul.f32 %v2197, %v404
        %v2200 = vmul.f32 %v2196, %v408
        %v2201 = vmul.f32 %v2195, %v412
        %v2202 = vmul.f32 %v2198, %v416
        %v2203 = vadd.f32 %v2183, %v2199
        %v2204 = vadd.f32 %v2184, %v2200
        %v2205 = vadd.f32 %v2185, %v2201
        %v2206 = vadd.f32 %v2186, %v2202
        %2207 = vrot.lane.b32.xlu0 %v1944, 111
        %v2208 = vpop.permute.xlu0 %2207
        %2209 = vrot.lane.b32.xlu0 %v1946, 111
        %v2210 = vpop.permute.xlu0 %2209
        %2211 = vrot.lane.b32.xlu0 %v2063, 111
        %v2212 = vpop.permute.xlu0 %2211
        %2213 = vrot.lane.b32.xlu0 %v2065, 111
        %v2214 = vpop.permute.xlu0 %2213
        %v2215 = vsel %vm1006, %v2212, %v2214
        %v2216 = vsel %vm1006, %v2210, %v2212
        %v2217 = vsel %vm1006, %v2208, %v2210
        %v2218 = vsel %vm1006, %v2214, %v2208
        %v2219 = vmul.f32 %v2217, %v420
        %v2220 = vmul.f32 %v2216, %v424
        %v2221 = vmul.f32 %v2215, %v428
        %v2222 = vmul.f32 %v2218, %v432
        %v2223 = vadd.f32 %v2203, %v2219
        %v2224 = vadd.f32 %v2204, %v2220
        %v2225 = vadd.f32 %v2205, %v2221
        %v2226 = vadd.f32 %v2206, %v2222
        %2227 = vset.pattern.permute.xlu0 2
        %2228 = vperm.xlu0 %2227, %v433
        %v2229 = vpop.permute.xlu0 %2228
        %v2231 = vadd.f32 %v2223, %v2229
        %v2232 = vadd.f32 %v2224, %v2229
        %v2233 = vadd.f32 %v2225, %v2229
        %v2234 = vadd.f32 %v2226, %v2229
        %v2235 = vrot.slane %v2231, 4
        %v2236 = vadd.f32 %v2231, %v2235
        %v2237 = vrot.slane %v2236, 2
        %v2238 = vadd.f32 %v2236, %v2237
        %v2239 = vrot.slane %v2238, 1
        %v2240 = vadd.f32 %v2238, %v2239
        %v2241 = vrot.slane %v2232, 4
        %v2242 = vadd.f32 %v2232, %v2241
        %v2243 = vrot.slane %v2242, 2
        %v2244 = vadd.f32 %v2242, %v2243
        %v2245 = vrot.slane %v2244, 1
        %v2246 = vadd.f32 %v2244, %v2245
        %v2247 = vrot.slane %v2233, 4
        %v2248 = vadd.f32 %v2233, %v2247
        %v2249 = vrot.slane %v2248, 2
        %v2250 = vadd.f32 %v2248, %v2249
        %v2251 = vrot.slane %v2250, 1
        %v2252 = vadd.f32 %v2250, %v2251
        %v2253 = vrot.slane %v2234, 4
        %v2254 = vadd.f32 %v2234, %v2253
        %v2255 = vrot.slane %v2254, 2
        %v2256 = vadd.f32 %v2254, %v2255
        %v2257 = vrot.slane %v2256, 1
        %v2258 = vadd.f32 %v2256, %v2257
        %v2259 = vmul.f32 %v2231, %v2231
        %v2260 = vmul.f32 %v2232, %v2232
        %v2261 = vmul.f32 %v2233, %v2233
        %v2262 = vmul.f32 %v2234, %v2234
        %v2263 = vrot.slane %v2259, 4
        %v2264 = vadd.f32 %v2259, %v2263
        %v2265 = vrot.slane %v2264, 2
        %v2266 = vadd.f32 %v2264, %v2265
        %v2267 = vrot.slane %v2266, 1
        %v2268 = vadd.f32 %v2266, %v2267
        %v2269 = vrot.slane %v2260, 4
        %v2270 = vadd.f32 %v2260, %v2269
        %v2271 = vrot.slane %v2270, 2
        %v2272 = vadd.f32 %v2270, %v2271
        %v2273 = vrot.slane %v2272, 1
        %v2274 = vadd.f32 %v2272, %v2273
        %v2275 = vrot.slane %v2261, 4
        %v2276 = vadd.f32 %v2261, %v2275
        %v2277 = vrot.slane %v2276, 2
        %v2278 = vadd.f32 %v2276, %v2277
        %v2279 = vrot.slane %v2278, 1
        %v2280 = vadd.f32 %v2278, %v2279
        %v2281 = vrot.slane %v2262, 4
        %v2282 = vadd.f32 %v2262, %v2281
        %v2283 = vrot.slane %v2282, 2
        %v2284 = vadd.f32 %v2282, %v2283
        %v2285 = vrot.slane %v2284, 1
        %v2286 = vadd.f32 %v2284, %v2285
        %v2287 = vsel %vm1080, %v2240, 0.0
        %v2288 = vsel %vm1080, %v2246, 0.0
        %v2289 = vadd.f32 %v2287, %v2288
        %2290 = vadd.xlane.f32.xlu0 %v2289
        %v2291 = vpop.xlane.xlu0 %2290
        %v2292 = vrot.slane %v2291, 4
        %v2293 = vadd.f32 %v2291, %v2292
        %v2294 = vrot.slane %v2293, 2
        %v2295 = vadd.f32 %v2293, %v2294
        %v2296 = vrot.slane %v2295, 1
        %v2297 = vadd.f32 %v2295, %v2296
        %s2298 = vtos %v2297
        %s2299 = smul.f32 %s2298, 0.00048828125
        %v2300 = vsel %vm1080, %v2268, 0.0
        %v2301 = vsel %vm1080, %v2274, 0.0
        %v2302 = vadd.f32 %v2300, %v2301
        %2303 = vadd.xlane.f32.xlu0 %v2302
        %v2304 = vpop.xlane.xlu0 %2303
        %v2305 = vrot.slane %v2304, 4
        %v2306 = vadd.f32 %v2304, %v2305
        %v2307 = vrot.slane %v2306, 2
        %v2308 = vadd.f32 %v2306, %v2307
        %v2309 = vrot.slane %v2308, 1
        %v2310 = vadd.f32 %v2308, %v2309
        %s2311 = vtos %v2310
        %s2312 = smul.f32 %s2311, 0.00048828125
        %s2313 = smul.f32 %s2299, %s2299
        %s2314 = ssub.f32 %s2312, %s2313
        %s2315 = sadd.f32 %s2314, 1e-05
        %v2316 = vstv %s2315
        %v2317 = vrsqrt.pop %v2316
        %s2318 = vtos %v2317
        %v2319 = vstv %s2299
        %v2320 = vstv %s2318
        %v2321 = vsel %vm1080, %v2252, 0.0
        %v2322 = vsel %vm1080, %v2258, 0.0
        %v2323 = vadd.f32 %v2321, %v2322
        %2324 = vadd.xlane.f32.xlu0 %v2323
        %v2325 = vpop.xlane.xlu0 %2324
        %v2326 = vrot.slane %v2325, 4
        %v2327 = vadd.f32 %v2325, %v2326
        %v2328 = vrot.slane %v2327, 2
        %v2329 = vadd.f32 %v2327, %v2328
        %v2330 = vrot.slane %v2329, 1
        %v2331 = vadd.f32 %v2329, %v2330
        %s2332 = vtos %v2331
        %s2333 = smul.f32 %s2332, 0.00048828125
        %v2334 = vsel %vm1080, %v2280, 0.0
        %v2335 = vsel %vm1080, %v2286, 0.0
        %v2336 = vadd.f32 %v2334, %v2335
        %2337 = vadd.xlane.f32.xlu0 %v2336
        %v2338 = vpop.xlane.xlu0 %2337
        %v2339 = vrot.slane %v2338, 4
        %v2340 = vadd.f32 %v2338, %v2339
        %v2341 = vrot.slane %v2340, 2
        %v2342 = vadd.f32 %v2340, %v2341
        %v2343 = vrot.slane %v2342, 1
        %v2344 = vadd.f32 %v2342, %v2343
        %s2345 = vtos %v2344
        %s2346 = smul.f32 %s2345, 0.00048828125
        %s2347 = smul.f32 %s2333, %s2333
        %s2348 = ssub.f32 %s2346, %s2347
        %s2349 = sadd.f32 %s2348, 1e-05
        %v2350 = vstv %s2349
        %v2351 = vrsqrt.pop %v2350
        %s2352 = vtos %v2351
        %v2353 = vstv %s2333
        %v2354 = vstv %s2352
        %v2355 = vlaneseq
        %v2356 = vshrl.u32 %v2355, 7
        %v2357 = vsub.s32 0, %v2356
        %v2358 = vlaneseq
        %v2359 = vshrl.u32 %v2358, 7
        %v2360 = vsub.s32 0, %v2359
        %v2361 = vsub.f32 %v2231, %v2319
        %v2362 = vsub.f32 %v2232, %v2319
        %v2363 = vsub.f32 %v2233, %v2353
        %v2364 = vsub.f32 %v2234, %v2353
        %v2365 = vlaneseq
        %v2366 = vshrl.u32 %v2365, 7
        %v2367 = vsub.s32 0, %v2366
        %v2368 = vlaneseq
        %v2369 = vshrl.u32 %v2368, 7
        %v2370 = vsub.s32 0, %v2369
        %v2371 = vmul.f32 %v2361, %v2320
        %v2372 = vmul.f32 %v2362, %v2320
        %v2373 = vmul.f32 %v2363, %v2354
        %v2374 = vmul.f32 %v2364, %v2354
        %2375 = vset.pattern.permute.xlu0 6
        %2376 = vperm.xlu0 %2375, %v433
        %v2377 = vpop.permute.xlu0 %2376
        %v2379 = vmul.f32 %v2371, %v2377
        %v2380 = vmul.f32 %v2372, %v2377
        %v2381 = vmul.f32 %v2373, %v2377
        %v2382 = vmul.f32 %v2374, %v2377
        %2383 = vset.pattern.permute.xlu0 10
        %2384 = vperm.xlu0 %2383, %v433
        %v2385 = vpop.permute.xlu0 %2384
        %v2387 = vadd.f32 %v2379, %v2385
        %v2388 = vadd.f32 %v2380, %v2385
        %v2389 = vadd.f32 %v2381, %v2385
        %v2390 = vadd.f32 %v2382, %v2385
        %v2391 = vmax.f32 %v2387, 0.0
        %v2392 = vmax.f32 %v2388, 0.0
        %v2393 = vmax.f32 %v2389, 0.0
        %v2394 = vmax.f32 %v2390, 0.0
        %s2395 = scalar_lea.vmem %s4, 144
        %v2396 = vld [vmem:[%s2395] sm:$0xff]
        %v2397 = vld [vmem:[%s2395 + $0x8] sm:$0xff]
        %v2398 = vld [vmem:[%s2395 + $0x10] sm:$0xff]
        %v2399 = vld [vmem:[%s2395 + $0x18] sm:$0xff]
        %v2400 = vld [vmem:[%s2395 + $0x20] sm:$0xff]
        %v2401 = vld [vmem:[%s2395 + $0x28] sm:$0xff]
        %v2402 = vld [vmem:[%s2395 + $0x30] sm:$0xff]
        %v2403 = vld [vmem:[%s2395 + $0x38] sm:$0xff]
        %v2404 = vld [vmem:[%s2395 + $0x40] sm:$0xff]
        %v2406 = vsel %vm1198, %v2396, 0
        %v2409 = vsel %vm1198, %v2397, 0
        %v2412 = vsel %vm1198, %v2398, 0
        %v2415 = vsel %vm1198, %v2399, 0
        %v2418 = vsel %vm1198, %v2400, 0
        %v2421 = vsel %vm1198, %v2401, 0
        %v2424 = vsel %vm1198, %v2402, 0
        %v2427 = vsel %vm1198, %v2403, 0
        %v2430 = vsel %vm1198, %v2404, 0
        %2432 = vmatprep.subr.mxu0 %v2392
        %2433 = vmatpush1.msra.mxu0 %v2391
        %2434 = vmatprep.subr.mxu0 0.0
        %2435 = vmatpush1.msra.mxu0 0.0
        %2436 = vmatprep.subr.mxu0 0.0
        %2437 = vmatpush1.msra.mxu0 0.0
        %2438 = vmatprep.subr.mxu0 0.0
        %2439 = vmatpush1.msra.mxu0 0.0
        %2440 = vmatprep.subr.mxu0 0.0
        %2441 = vmatpush1.msra.mxu0 0.0
        %2442 = vmatprep.subr.mxu0 0.0
        %2443 = vmatpush1.msra.mxu0 0.0
        %2444 = vmatprep.subr.mxu0 0.0
        %2445 = vmatpush1.msra.mxu0 0.0
        %2446 = vmatprep.subr.mxu0 0.0
        %2447 = vmatpush1.msra.mxu0 0.0
        %2448 = vmatprep.subr.mxu0 0.0
        %2449 = vmatpush1.msra.mxu0 0.0
        %2450 = vmatprep.subr.mxu0 0.0
        %2451 = vmatpush1.msra.mxu0 0.0
        %2452 = vmatprep.subr.mxu0 0.0
        %2453 = vmatpush1.msra.mxu0 0.0
        %2454 = vmatprep.subr.mxu0 0.0
        %2455 = vmatpush1.msra.mxu0 0.0
        %2456 = vmatprep.subr.mxu0 0.0
        %2457 = vmatpush1.msra.mxu0 0.0
        %2458 = vmatprep.subr.mxu0 0.0
        %2459 = vmatpush1.msra.mxu0 0.0
        %2460 = vmatprep.subr.mxu0 0.0
        %2461 = vmatpush1.msra.mxu0 0.0
        %2462 = vmatprep.subr.mxu0 0.0
        %2463 = vmatpush1.msra.mxu0 0.0
        %2464 = vmatprep.subr.mxu0 0.0
        %2465 = vmatpush1.msra.mxu0 0.0
        %2466 = vmatprep.subr.mxu0 0.0
        %2467 = vmatpush1.msra.mxu0 0.0
        %2468 = vmatprep.subr.mxu0 0.0
        %2469 = vmatpush1.msra.mxu0 0.0
        %2470 = vmatprep.subr.mxu0 0.0
        %2471 = vmatpush1.msra.mxu0 0.0
        %2472 = vmatprep.subr.mxu0 0.0
        %2473 = vmatpush1.msra.mxu0 0.0
        %2474 = vmatprep.subr.mxu0 0.0
        %2475 = vmatpush1.msra.mxu0 0.0
        %2476 = vmatprep.subr.mxu0 0.0
        %2477 = vmatpush1.msra.mxu0 0.0
        %2478 = vmatprep.subr.mxu0 0.0
        %2479 = vmatpush1.msra.mxu0 0.0
        %2480 = vmatprep.subr.mxu0 0.0
        %2481 = vmatpush1.msra.mxu0 0.0
        %2482 = vmatprep.subr.mxu0 0.0
        %2483 = vmatpush1.msra.mxu0 0.0
        %2484 = vmatprep.subr.mxu0 0.0
        %2485 = vmatpush1.msra.mxu0 0.0
        %2486 = vmatprep.subr.mxu0 0.0
        %2487 = vmatpush1.msra.mxu0 0.0
        %2488 = vmatprep.subr.mxu0 0.0
        %2489 = vmatpush1.msra.mxu0 0.0
        %2490 = vmatprep.subr.mxu0 0.0
        %2491 = vmatpush1.msra.mxu0 0.0
        %2492 = vmatprep.subr.mxu0 0.0
        %2493 = vmatpush1.msra.mxu0 0.0
        %2494 = vmatprep.subr.mxu0 0.0
        %2495 = vmatpush1.msra.mxu0 0.0
        %2496 = vmatprep.mubr.f32.mxu0 0.0
        %2497 = vmatmul.mubr.f32.gmra.mrb[0].mxu0 %v2406
        %v2498 = vpop.f32.mrb[0].mxu0
        %v2499 = vadd.f32 0.0, %v2498
        %v2500 = vpop.f32.mrb[0].mxu0
        %v2501 = vadd.f32 0.0, %v2500
        %2502 = vmatprep.mubr.f32.mxu0 0.0
        %2503 = vmatmul.mubr.f32.gmra.mrb[0].mxu0 %v2409
        %v2504 = vpop.f32.mrb[0].mxu0
        %v2505 = vadd.f32 0.0, %v2504
        %v2506 = vpop.f32.mrb[0].mxu0
        %v2507 = vadd.f32 0.0, %v2506
        %2508 = vmatprep.mubr.f32.mxu0 0.0
        %2509 = vmatmul.mubr.f32.gmra.mrb[0].mxu0 %v2412
        %v2510 = vpop.f32.mrb[0].mxu0
        %v2511 = vadd.f32 0.0, %v2510
        %v2512 = vpop.f32.mrb[0].mxu0
        %v2513 = vadd.f32 0.0, %v2512
        %2514 = vmatprep.mubr.f32.mxu0 0.0
        %2515 = vmatmul.mubr.f32.gmra.mrb[0].mxu0 %v2415
        %v2516 = vpop.f32.mrb[0].mxu0
        %v2517 = vadd.f32 0.0, %v2516
        %v2518 = vpop.f32.mrb[0].mxu0
        %v2519 = vadd.f32 0.0, %v2518
        %2520 = vmatprep.mubr.f32.mxu0 0.0
        %2521 = vmatmul.mubr.f32.gmra.mrb[0].mxu0 %v2418
        %v2522 = vpop.f32.mrb[0].mxu0
        %v2523 = vadd.f32 0.0, %v2522
        %v2524 = vpop.f32.mrb[0].mxu0
        %v2525 = vadd.f32 0.0, %v2524
        %2526 = vmatprep.mubr.f32.mxu0 0.0
        %2527 = vmatmul.mubr.f32.gmra.mrb[0].mxu0 %v2421
        %v2528 = vpop.f32.mrb[0].mxu0
        %v2529 = vadd.f32 0.0, %v2528
        %v2530 = vpop.f32.mrb[0].mxu0
        %v2531 = vadd.f32 0.0, %v2530
        %2532 = vmatprep.mubr.f32.mxu0 0.0
        %2533 = vmatmul.mubr.f32.gmra.mrb[0].mxu0 %v2424
        %v2534 = vpop.f32.mrb[0].mxu0
        %v2535 = vadd.f32 0.0, %v2534
        %v2536 = vpop.f32.mrb[0].mxu0
        %v2537 = vadd.f32 0.0, %v2536
        %2538 = vmatprep.mubr.f32.mxu0 0.0
        %2539 = vmatmul.mubr.f32.gmra.mrb[0].mxu0 %v2427
        %v2540 = vpop.f32.mrb[0].mxu0
        %v2541 = vadd.f32 0.0, %v2540
        %v2542 = vpop.f32.mrb[0].mxu0
        %v2543 = vadd.f32 0.0, %v2542
        %2544 = vmatprep.mubr.f32.mxu0 0.0
        %2545 = vmatmul.mubr.f32.gmra.mrb[0].mxu0 %v2430
        %v2546 = vpop.f32.mrb[0].mxu0
        %v2547 = vadd.f32 0.0, %v2546
        %v2548 = vpop.f32.mrb[0].mxu0
        %v2549 = vadd.f32 0.0, %v2548
        %2550 = vdwg.mxu0
        %2551 = vmatprep.subr.mxu0 %v2394
        %2552 = vmatpush1.msra.mxu0 %v2393
        %2553 = vmatprep.subr.mxu0 0.0
        %2554 = vmatpush1.msra.mxu0 0.0
        %2555 = vmatprep.subr.mxu0 0.0
        %2556 = vmatpush1.msra.mxu0 0.0
        %2557 = vmatprep.subr.mxu0 0.0
        %2558 = vmatpush1.msra.mxu0 0.0
        %2559 = vmatprep.subr.mxu0 0.0
        %2560 = vmatpush1.msra.mxu0 0.0
        %2561 = vmatprep.subr.mxu0 0.0
        %2562 = vmatpush1.msra.mxu0 0.0
        %2563 = vmatprep.subr.mxu0 0.0
        %2564 = vmatpush1.msra.mxu0 0.0
        %2565 = vmatprep.subr.mxu0 0.0
        %2566 = vmatpush1.msra.mxu0 0.0
        %2567 = vmatprep.subr.mxu0 0.0
        %2568 = vmatpush1.msra.mxu0 0.0
        %2569 = vmatprep.subr.mxu0 0.0
        %2570 = vmatpush1.msra.mxu0 0.0
        %2571 = vmatprep.subr.mxu0 0.0
        %2572 = vmatpush1.msra.mxu0 0.0
        %2573 = vmatprep.subr.mxu0 0.0
        %2574 = vmatpush1.msra.mxu0 0.0
        %2575 = vmatprep.subr.mxu0 0.0
        %2576 = vmatpush1.msra.mxu0 0.0
        %2577 = vmatprep.subr.mxu0 0.0
        %2578 = vmatpush1.msra.mxu0 0.0
        %2579 = vmatprep.subr.mxu0 0.0
        %2580 = vmatpush1.msra.mxu0 0.0
        %2581 = vmatprep.subr.mxu0 0.0
        %2582 = vmatpush1.msra.mxu0 0.0
        %2583 = vmatprep.subr.mxu0 0.0
        %2584 = vmatpush1.msra.mxu0 0.0
        %2585 = vmatprep.subr.mxu0 0.0
        %2586 = vmatpush1.msra.mxu0 0.0
        %2587 = vmatprep.subr.mxu0 0.0
        %2588 = vmatpush1.msra.mxu0 0.0
        %2589 = vmatprep.subr.mxu0 0.0
        %2590 = vmatpush1.msra.mxu0 0.0
        %2591 = vmatprep.subr.mxu0 0.0
        %2592 = vmatpush1.msra.mxu0 0.0
        %2593 = vmatprep.subr.mxu0 0.0
        %2594 = vmatpush1.msra.mxu0 0.0
        %2595 = vmatprep.subr.mxu0 0.0
        %2596 = vmatpush1.msra.mxu0 0.0
        %2597 = vmatprep.subr.mxu0 0.0
        %2598 = vmatpush1.msra.mxu0 0.0
        %2599 = vmatprep.subr.mxu0 0.0
        %2600 = vmatpush1.msra.mxu0 0.0
        %2601 = vmatprep.subr.mxu0 0.0
        %2602 = vmatpush1.msra.mxu0 0.0
        %2603 = vmatprep.subr.mxu0 0.0
        %2604 = vmatpush1.msra.mxu0 0.0
        %2605 = vmatprep.subr.mxu0 0.0
        %2606 = vmatpush1.msra.mxu0 0.0
        %2607 = vmatprep.subr.mxu0 0.0
        %2608 = vmatpush1.msra.mxu0 0.0
        %2609 = vmatprep.subr.mxu0 0.0
        %2610 = vmatpush1.msra.mxu0 0.0
        %2611 = vmatprep.subr.mxu0 0.0
        %2612 = vmatpush1.msra.mxu0 0.0
        %2613 = vmatprep.subr.mxu0 0.0
        %2614 = vmatpush1.msra.mxu0 0.0
        %2615 = vmatprep.mubr.f32.mxu0 0.0
        %2616 = vmatmul.mubr.f32.gmra.mrb[0].mxu0 %v2406
        %v2617 = vpop.f32.mrb[0].mxu0
        %v2618 = vadd.f32 0.0, %v2617
        %v2619 = vpop.f32.mrb[0].mxu0
        %v2620 = vadd.f32 0.0, %v2619
        %2621 = vmatprep.mubr.f32.mxu0 0.0
        %2622 = vmatmul.mubr.f32.gmra.mrb[0].mxu0 %v2409
        %v2623 = vpop.f32.mrb[0].mxu0
        %v2624 = vadd.f32 0.0, %v2623
        %v2625 = vpop.f32.mrb[0].mxu0
        %v2626 = vadd.f32 0.0, %v2625
        %2627 = vmatprep.mubr.f32.mxu0 0.0
        %2628 = vmatmul.mubr.f32.gmra.mrb[0].mxu0 %v2412
        %v2629 = vpop.f32.mrb[0].mxu0
        %v2630 = vadd.f32 0.0, %v2629
        %v2631 = vpop.f32.mrb[0].mxu0
        %v2632 = vadd.f32 0.0, %v2631
        %2633 = vmatprep.mubr.f32.mxu0 0.0
        %2634 = vmatmul.mubr.f32.gmra.mrb[0].mxu0 %v2415
        %v2635 = vpop.f32.mrb[0].mxu0
        %v2636 = vadd.f32 0.0, %v2635
        %v2637 = vpop.f32.mrb[0].mxu0
        %v2638 = vadd.f32 0.0, %v2637
        %2639 = vmatprep.mubr.f32.mxu0 0.0
        %2640 = vmatmul.mubr.f32.gmra.mrb[0].mxu0 %v2418
        %v2641 = vpop.f32.mrb[0].mxu0
        %v2642 = vadd.f32 0.0, %v2641
        %v2643 = vpop.f32.mrb[0].mxu0
        %v2644 = vadd.f32 0.0, %v2643
        %2645 = vmatprep.mubr.f32.mxu0 0.0
        %2646 = vmatmul.mubr.f32.gmra.mrb[0].mxu0 %v2421
        %v2647 = vpop.f32.mrb[0].mxu0
        %v2648 = vadd.f32 0.0, %v2647
        %v2649 = vpop.f32.mrb[0].mxu0
        %v2650 = vadd.f32 0.0, %v2649
        %2651 = vmatprep.mubr.f32.mxu0 0.0
        %2652 = vmatmul.mubr.f32.gmra.mrb[0].mxu0 %v2424
        %v2653 = vpop.f32.mrb[0].mxu0
        %v2654 = vadd.f32 0.0, %v2653
        %v2655 = vpop.f32.mrb[0].mxu0
        %v2656 = vadd.f32 0.0, %v2655
        %2657 = vmatprep.mubr.f32.mxu0 0.0
        %2658 = vmatmul.mubr.f32.gmra.mrb[0].mxu0 %v2427
        %v2659 = vpop.f32.mrb[0].mxu0
        %v2660 = vadd.f32 0.0, %v2659
        %v2661 = vpop.f32.mrb[0].mxu0
        %v2662 = vadd.f32 0.0, %v2661
        %2663 = vmatprep.mubr.f32.mxu0 0.0
        %2664 = vmatmul.mubr.f32.gmra.mrb[0].mxu0 %v2430
        %v2665 = vpop.f32.mrb[0].mxu0
        %v2666 = vadd.f32 0.0, %v2665
        %v2667 = vpop.f32.mrb[0].mxu0
        %v2668 = vadd.f32 0.0, %v2667
        %2669 = vdwg.mxu0
        %2670 = vrot.lane.b32.xlu0 %v2499, 17
        %v2671 = vpop.permute.xlu0 %2670
        %2672 = vrot.lane.b32.xlu0 %v2501, 17
        %v2673 = vpop.permute.xlu0 %2672
        %2674 = vrot.lane.b32.xlu0 %v2618, 17
        %v2675 = vpop.permute.xlu0 %2674
        %2676 = vrot.lane.b32.xlu0 %v2620, 17
        %v2677 = vpop.permute.xlu0 %2676
        %v2678 = vsel %vm859, %v2675, %v2677
        %v2679 = vsel %vm859, %v2673, %v2675
        %v2680 = vsel %vm859, %v2671, %v2673
        %v2681 = vsel %vm859, %v2677, %v2671
        %v2682 = vmul.f32 %v2681, %v308
        %v2683 = vmul.f32 %v2680, %v312
        %v2684 = vmul.f32 %v2679, %v316
        %v2685 = vmul.f32 %v2678, %v320
        %v2686 = vadd.f32 %v2523, %v2682
        %v2687 = vadd.f32 %v2525, %v2683
        %v2688 = vadd.f32 %v2642, %v2684
        %v2689 = vadd.f32 %v2644, %v2685
        %2690 = vrot.lane.b32.xlu0 %v2505, 16
        %v2691 = vpop.permute.xlu0 %2690
        %2692 = vrot.lane.b32.xlu0 %v2507, 16
        %v2693 = vpop.permute.xlu0 %2692
        %2694 = vrot.lane.b32.xlu0 %v2624, 16
        %v2695 = vpop.permute.xlu0 %2694
        %2696 = vrot.lane.b32.xlu0 %v2626, 16
        %v2697 = vpop.permute.xlu0 %2696
        %v2698 = vsel %vm880, %v2695, %v2697
        %v2699 = vsel %vm880, %v2693, %v2695
        %v2700 = vsel %vm880, %v2691, %v2693
        %v2701 = vsel %vm880, %v2697, %v2691
        %v2702 = vmul.f32 %v2701, %v324
        %v2703 = vmul.f32 %v2700, %v328
        %v2704 = vmul.f32 %v2699, %v332
        %v2705 = vmul.f32 %v2698, %v336
        %v2706 = vadd.f32 %v2686, %v2702
        %v2707 = vadd.f32 %v2687, %v2703
        %v2708 = vadd.f32 %v2688, %v2704
        %v2709 = vadd.f32 %v2689, %v2705
        %2710 = vrot.lane.b32.xlu0 %v2511, 15
        %v2711 = vpop.permute.xlu0 %2710
        %2712 = vrot.lane.b32.xlu0 %v2513, 15
        %v2713 = vpop.permute.xlu0 %2712
        %2714 = vrot.lane.b32.xlu0 %v2630, 15
        %v2715 = vpop.permute.xlu0 %2714
        %2716 = vrot.lane.b32.xlu0 %v2632, 15
        %v2717 = vpop.permute.xlu0 %2716
        %v2718 = vsel %vm901, %v2715, %v2717
        %v2719 = vsel %vm901, %v2713, %v2715
        %v2720 = vsel %vm901, %v2711, %v2713
        %v2721 = vsel %vm901, %v2717, %v2711
        %v2722 = vmul.f32 %v2721, %v340
        %v2723 = vmul.f32 %v2720, %v344
        %v2724 = vmul.f32 %v2719, %v348
        %v2725 = vmul.f32 %v2718, %v352
        %v2726 = vadd.f32 %v2706, %v2722
        %v2727 = vadd.f32 %v2707, %v2723
        %v2728 = vadd.f32 %v2708, %v2724
        %v2729 = vadd.f32 %v2709, %v2725
        %2730 = vrot.lane.b32.xlu0 %v2517, 1
        %v2731 = vpop.permute.xlu0 %2730
        %2732 = vrot.lane.b32.xlu0 %v2519, 1
        %v2733 = vpop.permute.xlu0 %2732
        %2734 = vrot.lane.b32.xlu0 %v2636, 1
        %v2735 = vpop.permute.xlu0 %2734
        %2736 = vrot.lane.b32.xlu0 %v2638, 1
        %v2737 = vpop.permute.xlu0 %2736
        %v2738 = vsel %vm922, %v2735, %v2737
        %v2739 = vsel %vm922, %v2733, %v2735
        %v2740 = vsel %vm922, %v2731, %v2733
        %v2741 = vsel %vm922, %v2737, %v2731
        %v2742 = vmul.f32 %v2741, %v356
        %v2743 = vmul.f32 %v2740, %v360
        %v2744 = vmul.f32 %v2739, %v364
        %v2745 = vmul.f32 %v2738, %v368
        %v2746 = vadd.f32 %v2726, %v2742
        %v2747 = vadd.f32 %v2727, %v2743
        %v2748 = vadd.f32 %v2728, %v2744
        %v2749 = vadd.f32 %v2729, %v2745
        %2750 = vrot.lane.b32.xlu0 %v2529, 127
        %v2751 = vpop.permute.xlu0 %2750
        %2752 = vrot.lane.b32.xlu0 %v2531, 127
        %v2753 = vpop.permute.xlu0 %2752
        %2754 = vrot.lane.b32.xlu0 %v2648, 127
        %v2755 = vpop.permute.xlu0 %2754
        %2756 = vrot.lane.b32.xlu0 %v2650, 127
        %v2757 = vpop.permute.xlu0 %2756
        %v2758 = vsel %vm943, %v2755, %v2757
        %v2759 = vsel %vm943, %v2753, %v2755
        %v2760 = vsel %vm943, %v2751, %v2753
        %v2761 = vsel %vm943, %v2757, %v2751
        %v2762 = vmul.f32 %v2760, %v372
        %v2763 = vmul.f32 %v2759, %v376
        %v2764 = vmul.f32 %v2758, %v380
        %v2765 = vmul.f32 %v2761, %v384
        %v2766 = vadd.f32 %v2746, %v2762
        %v2767 = vadd.f32 %v2747, %v2763
        %v2768 = vadd.f32 %v2748, %v2764
        %v2769 = vadd.f32 %v2749, %v2765
        %2770 = vrot.lane.b32.xlu0 %v2535, 113
        %v2771 = vpop.permute.xlu0 %2770
        %2772 = vrot.lane.b32.xlu0 %v2537, 113
        %v2773 = vpop.permute.xlu0 %2772
        %2774 = vrot.lane.b32.xlu0 %v2654, 113
        %v2775 = vpop.permute.xlu0 %2774
        %2776 = vrot.lane.b32.xlu0 %v2656, 113
        %v2777 = vpop.permute.xlu0 %2776
        %v2778 = vsel %vm964, %v2775, %v2777
        %v2779 = vsel %vm964, %v2773, %v2775
        %v2780 = vsel %vm964, %v2771, %v2773
        %v2781 = vsel %vm964, %v2777, %v2771
        %v2782 = vmul.f32 %v2780, %v388
        %v2783 = vmul.f32 %v2779, %v392
        %v2784 = vmul.f32 %v2778, %v396
        %v2785 = vmul.f32 %v2781, %v400
        %v2786 = vadd.f32 %v2766, %v2782
        %v2787 = vadd.f32 %v2767, %v2783
        %v2788 = vadd.f32 %v2768, %v2784
        %v2789 = vadd.f32 %v2769, %v2785
        %2790 = vrot.lane.b32.xlu0 %v2541, 112
        %v2791 = vpop.permute.xlu0 %2790
        %2792 = vrot.lane.b32.xlu0 %v2543, 112
        %v2793 = vpop.permute.xlu0 %2792
        %2794 = vrot.lane.b32.xlu0 %v2660, 112
        %v2795 = vpop.permute.xlu0 %2794
        %2796 = vrot.lane.b32.xlu0 %v2662, 112
        %v2797 = vpop.permute.xlu0 %2796
        %v2798 = vsel %vm985, %v2795, %v2797
        %v2799 = vsel %vm985, %v2793, %v2795
        %v2800 = vsel %vm985, %v2791, %v2793
        %v2801 = vsel %vm985, %v2797, %v2791
        %v2802 = vmul.f32 %v2800, %v404
        %v2803 = vmul.f32 %v2799, %v408
        %v2804 = vmul.f32 %v2798, %v412
        %v2805 = vmul.f32 %v2801, %v416
        %v2806 = vadd.f32 %v2786, %v2802
        %v2807 = vadd.f32 %v2787, %v2803
        %v2808 = vadd.f32 %v2788, %v2804
        %v2809 = vadd.f32 %v2789, %v2805
        %2810 = vrot.lane.b32.xlu0 %v2547, 111
        %v2811 = vpop.permute.xlu0 %2810
        %2812 = vrot.lane.b32.xlu0 %v2549, 111
        %v2813 = vpop.permute.xlu0 %2812
        %2814 = vrot.lane.b32.xlu0 %v2666, 111
        %v2815 = vpop.permute.xlu0 %2814
        %2816 = vrot.lane.b32.xlu0 %v2668, 111
        %v2817 = vpop.permute.xlu0 %2816
        %v2818 = vsel %vm1006, %v2815, %v2817
        %v2819 = vsel %vm1006, %v2813, %v2815
        %v2820 = vsel %vm1006, %v2811, %v2813
        %v2821 = vsel %vm1006, %v2817, %v2811
        %v2822 = vmul.f32 %v2820, %v420
        %v2823 = vmul.f32 %v2819, %v424
        %v2824 = vmul.f32 %v2818, %v428
        %v2825 = vmul.f32 %v2821, %v432
        %v2826 = vadd.f32 %v2806, %v2822
        %v2827 = vadd.f32 %v2807, %v2823
        %v2828 = vadd.f32 %v2808, %v2824
        %v2829 = vadd.f32 %v2809, %v2825
        %2830 = vset.pattern.permute.xlu0 3
        %2831 = vperm.xlu0 %2830, %v433
        %v2832 = vpop.permute.xlu0 %2831
        %v2834 = vadd.f32 %v2826, %v2832
        %v2835 = vadd.f32 %v2827, %v2832
        %v2836 = vadd.f32 %v2828, %v2832
        %v2837 = vadd.f32 %v2829, %v2832
        %v2838 = vrot.slane %v2834, 4
        %v2839 = vadd.f32 %v2834, %v2838
        %v2840 = vrot.slane %v2839, 2
        %v2841 = vadd.f32 %v2839, %v2840
        %v2842 = vrot.slane %v2841, 1
        %v2843 = vadd.f32 %v2841, %v2842
        %v2844 = vrot.slane %v2835, 4
        %v2845 = vadd.f32 %v2835, %v2844
        %v2846 = vrot.slane %v2845, 2
        %v2847 = vadd.f32 %v2845, %v2846
        %v2848 = vrot.slane %v2847, 1
        %v2849 = vadd.f32 %v2847, %v2848
        %v2850 = vrot.slane %v2836, 4
        %v2851 = vadd.f32 %v2836, %v2850
        %v2852 = vrot.slane %v2851, 2
        %v2853 = vadd.f32 %v2851, %v2852
        %v2854 = vrot.slane %v2853, 1
        %v2855 = vadd.f32 %v2853, %v2854
        %v2856 = vrot.slane %v2837, 4
        %v2857 = vadd.f32 %v2837, %v2856
        %v2858 = vrot.slane %v2857, 2
        %v2859 = vadd.f32 %v2857, %v2858
        %v2860 = vrot.slane %v2859, 1
        %v2861 = vadd.f32 %v2859, %v2860
        %v2862 = vmul.f32 %v2834, %v2834
        %v2863 = vmul.f32 %v2835, %v2835
        %v2864 = vmul.f32 %v2836, %v2836
        %v2865 = vmul.f32 %v2837, %v2837
        %v2866 = vrot.slane %v2862, 4
        %v2867 = vadd.f32 %v2862, %v2866
        %v2868 = vrot.slane %v2867, 2
        %v2869 = vadd.f32 %v2867, %v2868
        %v2870 = vrot.slane %v2869, 1
        %v2871 = vadd.f32 %v2869, %v2870
        %v2872 = vrot.slane %v2863, 4
        %v2873 = vadd.f32 %v2863, %v2872
        %v2874 = vrot.slane %v2873, 2
        %v2875 = vadd.f32 %v2873, %v2874
        %v2876 = vrot.slane %v2875, 1
        %v2877 = vadd.f32 %v2875, %v2876
        %v2878 = vrot.slane %v2864, 4
        %v2879 = vadd.f32 %v2864, %v2878
        %v2880 = vrot.slane %v2879, 2
        %v2881 = vadd.f32 %v2879, %v2880
        %v2882 = vrot.slane %v2881, 1
        %v2883 = vadd.f32 %v2881, %v2882
        %v2884 = vrot.slane %v2865, 4
        %v2885 = vadd.f32 %v2865, %v2884
        %v2886 = vrot.slane %v2885, 2
        %v2887 = vadd.f32 %v2885, %v2886
        %v2888 = vrot.slane %v2887, 1
        %v2889 = vadd.f32 %v2887, %v2888
        %v2890 = vsel %vm1080, %v2843, 0.0
        %v2891 = vsel %vm1080, %v2849, 0.0
        %v2892 = vadd.f32 %v2890, %v2891
        %2893 = vadd.xlane.f32.xlu0 %v2892
        %v2894 = vpop.xlane.xlu0 %2893
        %v2895 = vrot.slane %v2894, 4
        %v2896 = vadd.f32 %v2894, %v2895
        %v2897 = vrot.slane %v2896, 2
        %v2898 = vadd.f32 %v2896, %v2897
        %v2899 = vrot.slane %v2898, 1
        %v2900 = vadd.f32 %v2898, %v2899
        %s2901 = vtos %v2900
        %s2902 = smul.f32 %s2901, 0.00048828125
        %v2903 = vsel %vm1080, %v2871, 0.0
        %v2904 = vsel %vm1080, %v2877, 0.0
        %v2905 = vadd.f32 %v2903, %v2904
        %2906 = vadd.xlane.f32.xlu0 %v2905
        %v2907 = vpop.xlane.xlu0 %2906
        %v2908 = vrot.slane %v2907, 4
        %v2909 = vadd.f32 %v2907, %v2908
        %v2910 = vrot.slane %v2909, 2
        %v2911 = vadd.f32 %v2909, %v2910
        %v2912 = vrot.slane %v2911, 1
        %v2913 = vadd.f32 %v2911, %v2912
        %s2914 = vtos %v2913
        %s2915 = smul.f32 %s2914, 0.00048828125
        %s2916 = smul.f32 %s2902, %s2902
        %s2917 = ssub.f32 %s2915, %s2916
        %s2918 = sadd.f32 %s2917, 1e-05
        %v2919 = vstv %s2918
        %v2920 = vrsqrt.pop %v2919
        %s2921 = vtos %v2920
        %v2922 = vstv %s2902
        %v2923 = vstv %s2921
        %v2924 = vsel %vm1080, %v2855, 0.0
        %v2925 = vsel %vm1080, %v2861, 0.0
        %v2926 = vadd.f32 %v2924, %v2925
        %2927 = vadd.xlane.f32.xlu0 %v2926
        %v2928 = vpop.xlane.xlu0 %2927
        %v2929 = vrot.slane %v2928, 4
        %v2930 = vadd.f32 %v2928, %v2929
        %v2931 = vrot.slane %v2930, 2
        %v2932 = vadd.f32 %v2930, %v2931
        %v2933 = vrot.slane %v2932, 1
        %v2934 = vadd.f32 %v2932, %v2933
        %s2935 = vtos %v2934
        %s2936 = smul.f32 %s2935, 0.00048828125
        %v2937 = vsel %vm1080, %v2883, 0.0
        %v2938 = vsel %vm1080, %v2889, 0.0
        %v2939 = vadd.f32 %v2937, %v2938
        %2940 = vadd.xlane.f32.xlu0 %v2939
        %v2941 = vpop.xlane.xlu0 %2940
        %v2942 = vrot.slane %v2941, 4
        %v2943 = vadd.f32 %v2941, %v2942
        %v2944 = vrot.slane %v2943, 2
        %v2945 = vadd.f32 %v2943, %v2944
        %v2946 = vrot.slane %v2945, 1
        %v2947 = vadd.f32 %v2945, %v2946
        %s2948 = vtos %v2947
        %s2949 = smul.f32 %s2948, 0.00048828125
        %s2950 = smul.f32 %s2936, %s2936
        %s2951 = ssub.f32 %s2949, %s2950
        %s2952 = sadd.f32 %s2951, 1e-05
        %v2953 = vstv %s2952
        %v2954 = vrsqrt.pop %v2953
        %s2955 = vtos %v2954
        %v2956 = vstv %s2936
        %v2957 = vstv %s2955
        %v2958 = vlaneseq
        %v2959 = vshrl.u32 %v2958, 7
        %v2960 = vsub.s32 0, %v2959
        %v2961 = vlaneseq
        %v2962 = vshrl.u32 %v2961, 7
        %v2963 = vsub.s32 0, %v2962
        %v2964 = vsub.f32 %v2834, %v2922
        %v2965 = vsub.f32 %v2835, %v2922
        %v2966 = vsub.f32 %v2836, %v2956
        %v2967 = vsub.f32 %v2837, %v2956
        %v2968 = vlaneseq
        %v2969 = vshrl.u32 %v2968, 7
        %v2970 = vsub.s32 0, %v2969
        %v2971 = vlaneseq
        %v2972 = vshrl.u32 %v2971, 7
        %v2973 = vsub.s32 0, %v2972
        %v2974 = vmul.f32 %v2964, %v2923
        %v2975 = vmul.f32 %v2965, %v2923
        %v2976 = vmul.f32 %v2966, %v2957
        %v2977 = vmul.f32 %v2967, %v2957
        %2978 = vset.pattern.permute.xlu0 7
        %2979 = vperm.xlu0 %2978, %v433
        %v2980 = vpop.permute.xlu0 %2979
        %v2982 = vmul.f32 %v2974, %v2980
        %v2983 = vmul.f32 %v2975, %v2980
        %v2984 = vmul.f32 %v2976, %v2980
        %v2985 = vmul.f32 %v2977, %v2980
        %2986 = vset.pattern.permute.xlu0 11
        %2987 = vperm.xlu0 %2986, %v433
        %v2988 = vpop.permute.xlu0 %2987
        %v2990 = vadd.f32 %v2982, %v2988
        %v2991 = vadd.f32 %v2983, %v2988
        %v2992 = vadd.f32 %v2984, %v2988
        %v2993 = vadd.f32 %v2985, %v2988
        %v2994 = vmax.f32 %v2990, 0.0
        %v2995 = vmax.f32 %v2991, 0.0
        %v2996 = vmax.f32 %v2992, 0.0
        %v2997 = vmax.f32 %v2993, 0.0
        %v2998 = vld [vmem:[%s5] sm:$0xff]
        %v2999 = vld [vmem:[%s5 + $0x8] sm:$0x1]
        %v3001 = vsel %vm1198, %v2998, 0
        %v3004 = vsel %vm1198, %v2999, 0
        %3006 = vmatprep.subr.mxu0 %v2995
        %3007 = vmatpush1.msra.mxu0 %v2994
        %3008 = vmatprep.subr.mxu0 0.0
        %3009 = vmatpush1.msra.mxu0 0.0
        %3010 = vmatprep.subr.mxu0 0.0
        %3011 = vmatpush1.msra.mxu0 0.0
        %3012 = vmatprep.subr.mxu0 0.0
        %3013 = vmatpush1.msra.mxu0 0.0
        %3014 = vmatprep.subr.mxu0 0.0
        %3015 = vmatpush1.msra.mxu0 0.0
        %3016 = vmatprep.subr.mxu0 0.0
        %3017 = vmatpush1.msra.mxu0 0.0
        %3018 = vmatprep.subr.mxu0 0.0
        %3019 = vmatpush1.msra.mxu0 0.0
        %3020 = vmatprep.subr.mxu0 0.0
        %3021 = vmatpush1.msra.mxu0 0.0
        %3022 = vmatprep.subr.mxu0 0.0
        %3023 = vmatpush1.msra.mxu0 0.0
        %3024 = vmatprep.subr.mxu0 0.0
        %3025 = vmatpush1.msra.mxu0 0.0
        %3026 = vmatprep.subr.mxu0 0.0
        %3027 = vmatpush1.msra.mxu0 0.0
        %3028 = vmatprep.subr.mxu0 0.0
        %3029 = vmatpush1.msra.mxu0 0.0
        %3030 = vmatprep.subr.mxu0 0.0
        %3031 = vmatpush1.msra.mxu0 0.0
        %3032 = vmatprep.subr.mxu0 0.0
        %3033 = vmatpush1.msra.mxu0 0.0
        %3034 = vmatprep.subr.mxu0 0.0
        %3035 = vmatpush1.msra.mxu0 0.0
        %3036 = vmatprep.subr.mxu0 0.0
        %3037 = vmatpush1.msra.mxu0 0.0
        %3038 = vmatprep.subr.mxu0 0.0
        %3039 = vmatpush1.msra.mxu0 0.0
        %3040 = vmatprep.subr.mxu0 0.0
        %3041 = vmatpush1.msra.mxu0 0.0
        %3042 = vmatprep.subr.mxu0 0.0
        %3043 = vmatpush1.msra.mxu0 0.0
        %3044 = vmatprep.subr.mxu0 0.0
        %3045 = vmatpush1.msra.mxu0 0.0
        %3046 = vmatprep.subr.mxu0 0.0
        %3047 = vmatpush1.msra.mxu0 0.0
        %3048 = vmatprep.subr.mxu0 0.0
        %3049 = vmatpush1.msra.mxu0 0.0
        %3050 = vmatprep.subr.mxu0 0.0
        %3051 = vmatpush1.msra.mxu0 0.0
        %3052 = vmatprep.subr.mxu0 0.0
        %3053 = vmatpush1.msra.mxu0 0.0
        %3054 = vmatprep.subr.mxu0 0.0
        %3055 = vmatpush1.msra.mxu0 0.0
        %3056 = vmatprep.subr.mxu0 0.0
        %3057 = vmatpush1.msra.mxu0 0.0
        %3058 = vmatprep.subr.mxu0 0.0
        %3059 = vmatpush1.msra.mxu0 0.0
        %3060 = vmatprep.subr.mxu0 0.0
        %3061 = vmatpush1.msra.mxu0 0.0
        %3062 = vmatprep.subr.mxu0 0.0
        %3063 = vmatpush1.msra.mxu0 0.0
        %3064 = vmatprep.subr.mxu0 0.0
        %3065 = vmatpush1.msra.mxu0 0.0
        %3066 = vmatprep.subr.mxu0 0.0
        %3067 = vmatpush1.msra.mxu0 0.0
        %3068 = vmatprep.subr.mxu0 0.0
        %3069 = vmatpush1.msra.mxu0 0.0
        %3070 = vmatprep.mubr.f32.mxu0 0.0
        %3071 = vmatmul.mubr.f32.gmra.mrb[0].mxu0 %v3001
        %v3072 = vpop.f32.mrb[0].mxu0
        %v3073 = vadd.f32 0.0, %v3072
        %v3074 = vpop.f32.mrb[0].mxu0
        %v3075 = vadd.f32 0.0, %v3074
        %3076 = vmatprep.mubr.f32.mxu0 0.0
        %3077 = vmatmul.mubr.f32.gmra.mrb[0].mxu0 %v3004
        %v3078 = vpop.f32.mrb[0].mxu0
        %v3079 = vadd.f32 0.0, %v3078
        %v3080 = vpop.f32.mrb[0].mxu0
        %v3081 = vadd.f32 0.0, %v3080
        %3082 = vdwg.mxu0
        %3083 = vmatprep.subr.mxu0 %v2997
        %3084 = vmatpush1.msra.mxu0 %v2996
        %3085 = vmatprep.subr.mxu0 0.0
        %3086 = vmatpush1.msra.mxu0 0.0
        %3087 = vmatprep.subr.mxu0 0.0
        %3088 = vmatpush1.msra.mxu0 0.0
        %3089 = vmatprep.subr.mxu0 0.0
        %3090 = vmatpush1.msra.mxu0 0.0
        %3091 = vmatprep.subr.mxu0 0.0
        %3092 = vmatpush1.msra.mxu0 0.0
        %3093 = vmatprep.subr.mxu0 0.0
        %3094 = vmatpush1.msra.mxu0 0.0
        %3095 = vmatprep.subr.mxu0 0.0
        %3096 = vmatpush1.msra.mxu0 0.0
        %3097 = vmatprep.subr.mxu0 0.0
        %3098 = vmatpush1.msra.mxu0 0.0
        %3099 = vmatprep.subr.mxu0 0.0
        %3100 = vmatpush1.msra.mxu0 0.0
        %3101 = vmatprep.subr.mxu0 0.0
        %3102 = vmatpush1.msra.mxu0 0.0
        %3103 = vmatprep.subr.mxu0 0.0
        %3104 = vmatpush1.msra.mxu0 0.0
        %3105 = vmatprep.subr.mxu0 0.0
        %3106 = vmatpush1.msra.mxu0 0.0
        %3107 = vmatprep.subr.mxu0 0.0
        %3108 = vmatpush1.msra.mxu0 0.0
        %3109 = vmatprep.subr.mxu0 0.0
        %3110 = vmatpush1.msra.mxu0 0.0
        %3111 = vmatprep.subr.mxu0 0.0
        %3112 = vmatpush1.msra.mxu0 0.0
        %3113 = vmatprep.subr.mxu0 0.0
        %3114 = vmatpush1.msra.mxu0 0.0
        %3115 = vmatprep.subr.mxu0 0.0
        %3116 = vmatpush1.msra.mxu0 0.0
        %3117 = vmatprep.subr.mxu0 0.0
        %3118 = vmatpush1.msra.mxu0 0.0
        %3119 = vmatprep.subr.mxu0 0.0
        %3120 = vmatpush1.msra.mxu0 0.0
        %3121 = vmatprep.subr.mxu0 0.0
        %3122 = vmatpush1.msra.mxu0 0.0
        %3123 = vmatprep.subr.mxu0 0.0
        %3124 = vmatpush1.msra.mxu0 0.0
        %3125 = vmatprep.subr.mxu0 0.0
        %3126 = vmatpush1.msra.mxu0 0.0
        %3127 = vmatprep.subr.mxu0 0.0
        %3128 = vmatpush1.msra.mxu0 0.0
        %3129 = vmatprep.subr.mxu0 0.0
        %3130 = vmatpush1.msra.mxu0 0.0
        %3131 = vmatprep.subr.mxu0 0.0
        %3132 = vmatpush1.msra.mxu0 0.0
        %3133 = vmatprep.subr.mxu0 0.0
        %3134 = vmatpush1.msra.mxu0 0.0
        %3135 = vmatprep.subr.mxu0 0.0
        %3136 = vmatpush1.msra.mxu0 0.0
        %3137 = vmatprep.subr.mxu0 0.0
        %3138 = vmatpush1.msra.mxu0 0.0
        %3139 = vmatprep.subr.mxu0 0.0
        %3140 = vmatpush1.msra.mxu0 0.0
        %3141 = vmatprep.subr.mxu0 0.0
        %3142 = vmatpush1.msra.mxu0 0.0
        %3143 = vmatprep.subr.mxu0 0.0
        %3144 = vmatpush1.msra.mxu0 0.0
        %3145 = vmatprep.subr.mxu0 0.0
        %3146 = vmatpush1.msra.mxu0 0.0
        %3147 = vmatprep.mubr.f32.mxu0 0.0
        %3148 = vmatmul.mubr.f32.gmra.mrb[0].mxu0 %v3001
        %v3149 = vpop.f32.mrb[0].mxu0
        %v3150 = vadd.f32 0.0, %v3149
        %v3151 = vpop.f32.mrb[0].mxu0
        %v3152 = vadd.f32 0.0, %v3151
        %3153 = vmatprep.mubr.f32.mxu0 0.0
        %3154 = vmatmul.mubr.f32.gmra.mrb[0].mxu0 %v3004
        %v3155 = vpop.f32.mrb[0].mxu0
        %v3156 = vadd.f32 0.0, %v3155
        %v3157 = vpop.f32.mrb[0].mxu0
        %v3158 = vadd.f32 0.0, %v3157
        %3159 = vdwg.mxu0
        %3160 = vrot.lane.b32.xlu0 %v3073, 17
        %v3161 = vpop.permute.xlu0 %3160
        %3162 = vrot.lane.b32.xlu0 %v3075, 17
        %v3163 = vpop.permute.xlu0 %3162
        %3164 = vrot.lane.b32.xlu0 %v3150, 17
        %v3165 = vpop.permute.xlu0 %3164
        %3166 = vrot.lane.b32.xlu0 %v3152, 17
        %v3167 = vpop.permute.xlu0 %3166
        %v3168 = vsel %vm859, %v3165, %v3167
        %v3169 = vsel %vm859, %v3163, %v3165
        %v3170 = vsel %vm859, %v3161, %v3163
        %v3171 = vsel %vm859, %v3167, %v3161
        %v3172 = vmul.f32 %v3171, %v297
        %v3173 = vmul.f32 %v3170, %v298
        %v3174 = vmul.f32 %v3169, %v299
        %v3175 = vmul.f32 %v3168, %v300
        %v3180 = vrot.slane %v3172, 4
        %v3181 = vrot.slane %v3173, 4
        %v3182 = vrot.slane %v3174, 4
        %v3183 = vrot.slane %v3175, 4
        %v3188 = vadd.f32 %v3073, %v3180
        %v3189 = vadd.f32 %v3075, %v3181
        %v3190 = vadd.f32 %v3150, %v3182
        %v3191 = vadd.f32 %v3152, %v3183
        %v3196 = vrot.slane %v3073, 1
        %v3197 = vrot.slane %v3075, 1
        %v3198 = vrot.slane %v3150, 1
        %v3199 = vrot.slane %v3152, 1
        %3204 = vrot.lane.b32.xlu0 %v3196, 16
        %v3205 = vpop.permute.xlu0 %3204
        %3206 = vrot.lane.b32.xlu0 %v3197, 16
        %v3207 = vpop.permute.xlu0 %3206
        %3208 = vrot.lane.b32.xlu0 %v3198, 16
        %v3209 = vpop.permute.xlu0 %3208
        %3210 = vrot.lane.b32.xlu0 %v3199, 16
        %v3211 = vpop.permute.xlu0 %3210
        %v3212 = vsel %vm880, %v3209, %v3211
        %v3213 = vsel %vm880, %v3207, %v3209
        %v3214 = vsel %vm880, %v3205, %v3207
        %v3215 = vsel %vm880, %v3211, %v3205
        %v3220 = vrot.slane %v297, 1
        %v3221 = vrot.slane %v298, 1
        %v3222 = vrot.slane %v299, 1
        %v3223 = vrot.slane %v300, 1
        %v3228 = vmul.f32 %v3215, %v3220
        %v3229 = vmul.f32 %v3214, %v3221
        %v3230 = vmul.f32 %v3213, %v3222
        %v3231 = vmul.f32 %v3212, %v3223
        %v3236 = vrot.slane %v3228, 4
        %v3237 = vrot.slane %v3229, 4
        %v3238 = vrot.slane %v3230, 4
        %v3239 = vrot.slane %v3231, 4
        %v3244 = vadd.f32 %v3188, %v3236
        %v3245 = vadd.f32 %v3189, %v3237
        %v3246 = vadd.f32 %v3190, %v3238
        %v3247 = vadd.f32 %v3191, %v3239
        %v3248 = vrot.slane %v3073, 2
        %v3249 = vrot.slane %v3075, 2
        %v3250 = vrot.slane %v3150, 2
        %v3251 = vrot.slane %v3152, 2
        %3256 = vrot.lane.b32.xlu0 %v3248, 15
        %v3257 = vpop.permute.xlu0 %3256
        %3258 = vrot.lane.b32.xlu0 %v3249, 15
        %v3259 = vpop.permute.xlu0 %3258
        %3260 = vrot.lane.b32.xlu0 %v3250, 15
        %v3261 = vpop.permute.xlu0 %3260
        %3262 = vrot.lane.b32.xlu0 %v3251, 15
        %v3263 = vpop.permute.xlu0 %3262
        %v3264 = vsel %vm901, %v3261, %v3263
        %v3265 = vsel %vm901, %v3259, %v3261
        %v3266 = vsel %vm901, %v3257, %v3259
        %v3267 = vsel %vm901, %v3263, %v3257
        %v3268 = vrot.slane %v297, 2
        %v3269 = vrot.slane %v298, 2
        %v3270 = vrot.slane %v299, 2
        %v3271 = vrot.slane %v300, 2
        %v3276 = vmul.f32 %v3267, %v3268
        %v3277 = vmul.f32 %v3266, %v3269
        %v3278 = vmul.f32 %v3265, %v3270
        %v3279 = vmul.f32 %v3264, %v3271
        %v3284 = vrot.slane %v3276, 4
        %v3285 = vrot.slane %v3277, 4
        %v3286 = vrot.slane %v3278, 4
        %v3287 = vrot.slane %v3279, 4
        %v3292 = vadd.f32 %v3244, %v3284
        %v3293 = vadd.f32 %v3245, %v3285
        %v3294 = vadd.f32 %v3246, %v3286
        %v3295 = vadd.f32 %v3247, %v3287
        %v3296 = vrot.slane %v3073, 3
        %v3297 = vrot.slane %v3075, 3
        %v3298 = vrot.slane %v3150, 3
        %v3299 = vrot.slane %v3152, 3
        %3304 = vrot.lane.b32.xlu0 %v3296, 1
        %v3305 = vpop.permute.xlu0 %3304
        %3306 = vrot.lane.b32.xlu0 %v3297, 1
        %v3307 = vpop.permute.xlu0 %3306
        %3308 = vrot.lane.b32.xlu0 %v3298, 1
        %v3309 = vpop.permute.xlu0 %3308
        %3310 = vrot.lane.b32.xlu0 %v3299, 1
        %v3311 = vpop.permute.xlu0 %3310
        %v3312 = vsel %vm922, %v3309, %v3311
        %v3313 = vsel %vm922, %v3307, %v3309
        %v3314 = vsel %vm922, %v3305, %v3307
        %v3315 = vsel %vm922, %v3311, %v3305
        %v3316 = vrot.slane %v297, 3
        %v3317 = vrot.slane %v298, 3
        %v3318 = vrot.slane %v299, 3
        %v3319 = vrot.slane %v300, 3
        %v3324 = vmul.f32 %v3315, %v3316
        %v3325 = vmul.f32 %v3314, %v3317
        %v3326 = vmul.f32 %v3313, %v3318
        %v3327 = vmul.f32 %v3312, %v3319
        %v3332 = vrot.slane %v3324, 4
        %v3333 = vrot.slane %v3325, 4
        %v3334 = vrot.slane %v3326, 4
        %v3335 = vrot.slane %v3327, 4
        %v3340 = vadd.f32 %v3292, %v3332
        %v3341 = vadd.f32 %v3293, %v3333
        %v3342 = vadd.f32 %v3294, %v3334
        %v3343 = vadd.f32 %v3295, %v3335
        %v3344 = vrot.slane %v3073, 5
        %v3345 = vrot.slane %v3075, 5
        %v3346 = vrot.slane %v3150, 5
        %v3347 = vrot.slane %v3152, 5
        %3352 = vrot.lane.b32.xlu0 %v3344, 127
        %v3353 = vpop.permute.xlu0 %3352
        %3354 = vrot.lane.b32.xlu0 %v3345, 127
        %v3355 = vpop.permute.xlu0 %3354
        %3356 = vrot.lane.b32.xlu0 %v3346, 127
        %v3357 = vpop.permute.xlu0 %3356
        %3358 = vrot.lane.b32.xlu0 %v3347, 127
        %v3359 = vpop.permute.xlu0 %3358
        %v3360 = vsel %vm943, %v3357, %v3359
        %v3361 = vsel %vm943, %v3355, %v3357
        %v3362 = vsel %vm943, %v3353, %v3355
        %v3363 = vsel %vm943, %v3359, %v3353
        %v3364 = vrot.slane %v297, 5
        %v3365 = vrot.slane %v298, 5
        %v3366 = vrot.slane %v299, 5
        %v3367 = vrot.slane %v300, 5
        %v3372 = vmul.f32 %v3362, %v3364
        %v3373 = vmul.f32 %v3361, %v3365
        %v3374 = vmul.f32 %v3360, %v3366
        %v3375 = vmul.f32 %v3363, %v3367
        %v3380 = vrot.slane %v3372, 4
        %v3381 = vrot.slane %v3373, 4
        %v3382 = vrot.slane %v3374, 4
        %v3383 = vrot.slane %v3375, 4
        %v3388 = vadd.f32 %v3340, %v3380
        %v3389 = vadd.f32 %v3341, %v3381
        %v3390 = vadd.f32 %v3342, %v3382
        %v3391 = vadd.f32 %v3343, %v3383
        %v3392 = vrot.slane %v3073, 6
        %v3393 = vrot.slane %v3075, 6
        %v3394 = vrot.slane %v3150, 6
        %v3395 = vrot.slane %v3152, 6
        %3400 = vrot.lane.b32.xlu0 %v3392, 113
        %v3401 = vpop.permute.xlu0 %3400
        %3402 = vrot.lane.b32.xlu0 %v3393, 113
        %v3403 = vpop.permute.xlu0 %3402
        %3404 = vrot.lane.b32.xlu0 %v3394, 113
        %v3405 = vpop.permute.xlu0 %3404
        %3406 = vrot.lane.b32.xlu0 %v3395, 113
        %v3407 = vpop.permute.xlu0 %3406
        %v3408 = vsel %vm964, %v3405, %v3407
        %v3409 = vsel %vm964, %v3403, %v3405
        %v3410 = vsel %vm964, %v3401, %v3403
        %v3411 = vsel %vm964, %v3407, %v3401
        %v3412 = vrot.slane %v297, 6
        %v3413 = vrot.slane %v298, 6
        %v3414 = vrot.slane %v299, 6
        %v3415 = vrot.slane %v300, 6
        %v3420 = vmul.f32 %v3410, %v3412
        %v3421 = vmul.f32 %v3409, %v3413
        %v3422 = vmul.f32 %v3408, %v3414
        %v3423 = vmul.f32 %v3411, %v3415
        %v3428 = vrot.slane %v3420, 4
        %v3429 = vrot.slane %v3421, 4
        %v3430 = vrot.slane %v3422, 4
        %v3431 = vrot.slane %v3423, 4
        %v3436 = vadd.f32 %v3388, %v3428
        %v3437 = vadd.f32 %v3389, %v3429
        %v3438 = vadd.f32 %v3390, %v3430
        %v3439 = vadd.f32 %v3391, %v3431
        %v3440 = vrot.slane %v3073, 7
        %v3441 = vrot.slane %v3075, 7
        %v3442 = vrot.slane %v3150, 7
        %v3443 = vrot.slane %v3152, 7
        %3448 = vrot.lane.b32.xlu0 %v3440, 112
        %v3449 = vpop.permute.xlu0 %3448
        %3450 = vrot.lane.b32.xlu0 %v3441, 112
        %v3451 = vpop.permute.xlu0 %3450
        %3452 = vrot.lane.b32.xlu0 %v3442, 112
        %v3453 = vpop.permute.xlu0 %3452
        %3454 = vrot.lane.b32.xlu0 %v3443, 112
        %v3455 = vpop.permute.xlu0 %3454
        %v3456 = vsel %vm985, %v3453, %v3455
        %v3457 = vsel %vm985, %v3451, %v3453
        %v3458 = vsel %vm985, %v3449, %v3451
        %v3459 = vsel %vm985, %v3455, %v3449
        %v3460 = vrot.slane %v297, 7
        %v3461 = vrot.slane %v298, 7
        %v3462 = vrot.slane %v299, 7
        %v3463 = vrot.slane %v300, 7
        %v3468 = vmul.f32 %v3458, %v3460
        %v3469 = vmul.f32 %v3457, %v3461
        %v3470 = vmul.f32 %v3456, %v3462
        %v3471 = vmul.f32 %v3459, %v3463
        %v3476 = vrot.slane %v3468, 4
        %v3477 = vrot.slane %v3469, 4
        %v3478 = vrot.slane %v3470, 4
        %v3479 = vrot.slane %v3471, 4
        %v3484 = vadd.f32 %v3436, %v3476
        %v3485 = vadd.f32 %v3437, %v3477
        %v3486 = vadd.f32 %v3438, %v3478
        %v3487 = vadd.f32 %v3439, %v3479
        %3488 = vrot.lane.b32.xlu0 %v3079, 111
        %v3489 = vpop.permute.xlu0 %3488
        %3490 = vrot.lane.b32.xlu0 %v3081, 111
        %v3491 = vpop.permute.xlu0 %3490
        %3492 = vrot.lane.b32.xlu0 %v3156, 111
        %v3493 = vpop.permute.xlu0 %3492
        %3494 = vrot.lane.b32.xlu0 %v3158, 111
        %v3495 = vpop.permute.xlu0 %3494
        %v3496 = vsel %vm1006, %v3493, %v3495
        %v3497 = vsel %vm1006, %v3491, %v3493
        %v3498 = vsel %vm1006, %v3489, %v3491
        %v3499 = vsel %vm1006, %v3495, %v3489
        %v3500 = vmul.f32 %v3498, %v301
        %v3501 = vmul.f32 %v3497, %v302
        %v3502 = vmul.f32 %v3496, %v303
        %v3503 = vmul.f32 %v3499, %v304
        %v3508 = vrot.slane %v3500, 4
        %v3509 = vrot.slane %v3501, 4
        %v3510 = vrot.slane %v3502, 4
        %v3511 = vrot.slane %v3503, 4
        %v3516 = vadd.f32 %v3484, %v3508
        %v3517 = vadd.f32 %v3485, %v3509
        %v3518 = vadd.f32 %v3486, %v3510
        %v3519 = vadd.f32 %v3487, %v3511
        %3520 = vset.pattern.permute.xlu0 12
        %3521 = vperm.xlu0 %3520, %v433
        %v3522 = vpop.permute.xlu0 %3521
        %v3523 = vrot.slane %v3522, 4
        %v3525 = vadd.f32 %v3516, %v3523
        %v3526 = vadd.f32 %v3517, %v3523
        %v3527 = vadd.f32 %v3518, %v3523
        %v3528 = vadd.f32 %v3519, %v3523
        %v3529 = vmul.f32 %v3525, 1.442695
        %v3530 = vpow.pop %v3529
        %v3531 = vmul.f32 %v3526, 1.442695
        %v3532 = vpow.pop %v3531
        %v3533 = vmul.f32 %v3527, 1.442695
        %v3534 = vpow.pop %v3533
        %v3535 = vmul.f32 %v3528, 1.442695
        %v3536 = vpow.pop %v3535
        %v3541 = vcombine.high %v3530, %v3532
        %v3542 = vcombine.high %v3534, %v3536
        %v3544 = vunpack.c.l.s4 1966171168
        %v3545 = vunpack.c.0.s8 %v3544
        %v3546 = vlaneseq
        %v3547 = vshrl.u32 %v3546, 7
        %v3548 = vsub.s32 %v3545, %v3547
        %v3549 = vrot.slane %v3541, %v3548
        %v3551 = vunpack.c.l.s4 1966171168
        %v3552 = vunpack.c.0.s8 %v3551
        %v3553 = vlaneseq
        %v3554 = vshrl.u32 %v3553, 7
        %v3555 = vsub.s32 %v3552, %v3554
        %v3556 = vrot.slane %v3542, %v3555
        %v3557 = vcombine.low %v3549, %v3556
        %v3559 = vunpack.c.l.s4 1966171168
        %v3560 = vunpack.c.0.s8 %v3559
        %v3561 = vlaneseq
        %v3562 = vshrl.u32 %v3561, 7
        %v3563 = vsub.s32 %v3560, %v3562
        %v3564 = vrot.slane %v3557, %v3563
        %v3566 = vlaneseq
        %vm3567 = vcmp.ge.s32.totalorder %v3566, 0
        %vm3568 = vcmp.lt.s32.totalorder %v3566, 512
        %vm3569 = vmand %vm3567, %vm3568
        %3570 = vst.msk [vmem:[%s286] sm:$0xf] %vm3569, %v3564
        %s3571 = sand.u32 %s186, 1
        %s3572 = scalar_lea.sflag [#allocation3], %s3571
        %s3573 = sand.u32 %s186, 1
        %s3574 = smul.addr %s3573, 4
        %s3575 = scalar_lea.vmem [#allocation2], %s3574
        // Predicated region
        $region49: #{tpu_custom_call.1} parent=47 // pred_check
          %p3576 = pneg %p196
        $region50: #{tpu_custom_call.1} parent=47 // pred_check_branch
          %3578 = sbr.rel (%p3576) target = $region52
        $region51: #{tpu_custom_call.1} parent=47 // pred_region
          %s3580 = ssub.s32 64, 64
          %3581 = vsyncadd %s3572, %s3580
          %s3582 = smul.addr %s21, 4
          %s3583 = smul.addr %s3582, 16
          %s3584 = scalar_lea.hbm %s7, %s3583
          %s3586 = sshll.u32 %s3575, 4
          %s3587 = int_to_ptr.vmem [resolvable:$true] %s3586
          %3589 = dma.vmem_to_hbm [thread:$0]  %s3587, 64, %s3584, %s3572
        $region52: #{tpu_custom_call.1} parent=47 // pred_fallthru
          _
      $region48: #{tpu_custom_call.1} parent=5 // pred_fallthru
        _
      %p3590 = scmp.le.s32.totalorder 2, %s16
      // Predicated region
      $region53: #{tpu_custom_call.1} parent=5 // pred_check
        %p3591 = pneg %p3590
      $region54: #{tpu_custom_call.1} parent=5 // pred_check_branch
        %3593 = sbr.rel (%p3591) target = $region56
      $region55: #{tpu_custom_call.1} parent=5 // pred_region
        %s3594 = ssub.s32 %s16, 2
        // Predicated region
        $region57: #{tpu_custom_call.1} parent=55 // pred_check
          %p3595 = pneg %p202
        $region58: #{tpu_custom_call.1} parent=55 // pred_check_branch
          %3597 = sbr.rel (%p3595) target = $region60
        $region59: #{tpu_custom_call.1} parent=55 // pred_region
          %s3598 = sand.u32 %s187, 1
          %s3599 = scalar_lea.sflag [#allocation3], %s3598
          %s3600 = sand.u32 %s187, 1
          %s3601 = smul.addr %s3600, 4
          %s3602 = scalar_lea.vmem [#allocation2], %s3601
          %3603 = dma.done %s3599, 64
        $region60: #{tpu_custom_call.1} parent=55 // pred_fallthru
          _
      $region56: #{tpu_custom_call.1} parent=5 // pred_fallthru
        _
    $region6: #{tpu_custom_call.1} parent=1 // loop_footer
      %s20 = sadd.s32 1, %s16
    $region7: #{tpu_custom_call.1} parent=1 // loop_footer_branch
      %15 = sbr.rel target = $region3
    $region8: #{tpu_custom_call.1} parent=1 // loop_exit
      _
    %3604 = vsyncpa [#allocation3], 1
    %s3605 = scalar_lea.sflag [#allocation3], 1
    %3606 = vsyncpa %s3605, 1

</llo_original>
